<compile_context>
chip_gen: v7x
topology: tpu7x:2x2x1
jax: 0.10.0
libtpu: 0.0.40
codegen_flags: <defaults>
</compile_context>

<pallas_src>
import functools

import jax
import jax.numpy as jnp
from jax.experimental import pallas as pl
from jax.experimental.pallas import tpu as pltpu


# -----------------------------------------------------------------------------
# Pallas kernel: one grid step == one (R_tile, h*w) slab of rows
#   row r  <->  (slab s = r // cg, channel c = r % cg)
# -----------------------------------------------------------------------------
def ema_kernel(gx_ref, pool_ref, exp_ref, w1b_ref, w3b_ref, mask_ref, slab_ref,
               prm_ref, o_ref, *, h, w):
    hw = h * w

    gx = gx_ref[...].astype(jnp.float32)                # (R, hw), lane-dense

    prm = prm_ref[...].astype(jnp.float32)              # (R, 4)
    b1c, b3c = prm[:, 0:1], prm[:, 1:2]
    gnwc, gnbc = prm[:, 2:3], prm[:, 3:4]

    # --- directional pooling (mean over W | mean over H) as one matmul -------
    # pool_ref: (hw, h+w) constant [P_h | P_w]
    cat = jnp.dot(gx, pool_ref[...], preferred_element_type=jnp.float32)  # (R, h+w)

    # --- conv1x1 over channels, fused across slabs (block-diag weight) -------
    hwf = jnp.dot(w1b_ref[...], cat, preferred_element_type=jnp.float32) + b1c
    sig = jax.nn.sigmoid(hwf)                            # (R, h+w)

    # --- expand sig_h (per row of H) / sig_w (per column of W) back to hw ----
    expm = exp_ref[...]                                  # (h+w, hw) constant 0/1
    eh = jnp.dot(sig[:, :h], expm[:h, :], preferred_element_type=jnp.float32)
    ew = jnp.dot(sig[:, h:], expm[h:, :], preferred_element_type=jnp.float32)
    pre = gx * eh * ew                                   # (R, hw)

    # --- GroupNorm(cg, cg) == per-row (per-channel) norm over h*w ------------
    mean = jnp.mean(pre, axis=1, keepdims=True)
    ctr = pre - mean
    var = jnp.mean(ctr * ctr, axis=1, keepdims=True)
    x1 = ctr * jax.lax.rsqrt(var + 1e-5) * gnwc + gnbc   # (R, hw)

    # --- conv3x3 (SAME, pad 1): 9 lane rolls + border masks + block-diag mix -
    masks = mask_ref[...]                                # (9, hw)
    x2 = jnp.zeros_like(gx) + b3c
    for k in range(9):
        dy, dx = k // 3 - 1, k % 3 - 1
        d = dy * w + dx
        if d == 0:
            shifted = gx
        else:
            shifted = pltpu.roll(gx, shift=(-d) % hw, axis=1)
        shifted = shifted * masks[k:k + 1, :]
        x2 = x2 + jnp.dot(w3b_ref[k], shifted, preferred_element_type=jnp.float32)

    # --- cross attention: per-slab softmax over channels, then gating --------
    slab = slab_ref[...]                                 # (R, R) block-diag ones
    s1 = jnp.mean(x1, axis=1, keepdims=True)             # (R, 1)
    s2 = jnp.mean(x2, axis=1, keepdims=True)
    # softmax is shift-invariant; subtracting the block-global max keeps exp safe
    e1 = jnp.exp(s1 - jnp.max(s1))
    e2 = jnp.exp(s2 - jnp.max(s2))
    den = jnp.dot(slab, jnp.concatenate([e1, e2], axis=1),
                  preferred_element_type=jnp.float32)    # (R, 2) per-slab sums
    a1 = e1 / den[:, 0:1]
    a2 = e2 / den[:, 1:2]
    # per-slab weighted channel sum, broadcast back to every row of the slab
    wts = jnp.dot(slab, a1 * x2 + a2 * x1, preferred_element_type=jnp.float32)

    o_ref[...] = (gx * jax.nn.sigmoid(wts)).astype(o_ref.dtype)


# -----------------------------------------------------------------------------
# Wrapper
# -----------------------------------------------------------------------------
@functools.partial(jax.jit, static_argnames=("groups",))
def ema_forward(x, w1, b1, w3, b3, gnw, gnb, *, groups):
    b, c, h, w = x.shape
    cg = c // groups
    B = b * groups
    hw = h * w
    R_total = B * cg
    f32 = jnp.float32

    # >=2 grid blocks when possible (v7x dual TC); each block = whole slabs.
    if B % 2 == 0 and ((B // 2) * cg) % 8 == 0:
        num_blocks = 2
    else:
        num_blocks = 1
    B_tile = B // num_blocks
    R_tile = B_tile * cg

    gx = x.reshape(R_total, hw).astype(f32)              # rows = (slab, channel)

    idx = jnp.arange(hw)
    ii = idx // w                                        # spatial row index
    jj = idx % w                                         # spatial col index

    # pooling matrices: mean over W -> (hw, h), mean over H -> (hw, w)
    P_h = (ii[:, None] == jnp.arange(h)[None, :]).astype(f32) / w
    P_w = (jj[:, None] == jnp.arange(w)[None, :]).astype(f32) / h
    P_pool = jnp.concatenate([P_h, P_w], axis=1)         # (hw, h+w)

    # expansion matrices: broadcast per-H / per-W values back to the hw lanes
    E_h = (jnp.arange(h)[:, None] == ii[None, :]).astype(f32)   # (h, hw)
    E_w = (jnp.arange(w)[:, None] == jj[None, :]).astype(f32)   # (w, hw)
    E = jnp.concatenate([E_h, E_w], axis=0)              # (h+w, hw)

    # block-diagonal (per-slab) channel-mix weights
    eye_bt = jnp.eye(B_tile, dtype=f32)
    W1_big = jnp.kron(eye_bt, w1.astype(f32))            # (R_tile, R_tile)
    W3_big = jnp.stack(
        [jnp.kron(eye_bt, w3[:, :, ky, kx].astype(f32))
         for ky in range(3) for kx in range(3)], axis=0)  # (9, R_tile, R_tile)

    # zero-padding masks for the 9 conv taps (roll is circular -> mask borders)
    mask_list = []
    for ky in range(3):
        for kx in range(3):
            dy, dx = ky - 1, kx - 1
            valid = ((ii + dy >= 0) & (ii + dy < h) &
                     (jj + dx >= 0) & (jj + dx < w))
            mask_list.append(valid.astype(f32))
    masks = jnp.stack(mask_list, axis=0)                 # (9, hw)

    # per-slab membership mask (block-diag ones) for group sums / broadcasts
    slabmask = jnp.kron(eye_bt, jnp.ones((cg, cg), f32))  # (R_tile, R_tile)

    # packed per-row parameters: [conv1x1 bias, conv3x3 bias, gn weight, gn bias]
    tile_p = lambda v: jnp.tile(v.astype(f32).reshape(-1), B)
    params = jnp.stack([tile_p(b1), tile_p(b3), tile_p(gnw), tile_p(gnb)],
                       axis=1)                           # (R_total, 4)

    kernel = functools.partial(ema_kernel, h=h, w=w)

    out = pl.pallas_call(
        kernel,
        out_shape=jax.ShapeDtypeStruct((R_total, hw), x.dtype),
        grid=(num_blocks,),
        in_specs=[
            pl.BlockSpec((R_tile, hw), lambda i: (i, 0)),           # gx rows
            pl.BlockSpec((hw, h + w), lambda i: (0, 0)),            # pooling mat
            pl.BlockSpec((h + w, hw), lambda i: (0, 0)),            # expansion mat
            pl.BlockSpec((R_tile, R_tile), lambda i: (0, 0)),       # conv1x1 blkdiag
            pl.BlockSpec((9, R_tile, R_tile), lambda i: (0, 0, 0)), # conv3x3 blkdiag
            pl.BlockSpec((9, hw), lambda i: (0, 0)),                # shift masks
            pl.BlockSpec((R_tile, R_tile), lambda i: (0, 0)),       # slab mask
            pl.BlockSpec((R_tile, 4), lambda i: (i, 0)),            # packed params
        ],
        out_specs=pl.BlockSpec((R_tile, hw), lambda i: (i, 0)),
        compiler_params=pltpu.CompilerParams(
            dimension_semantics=("parallel",)),
    )(gx, P_pool, E, W1_big, W3_big, masks, slabmask, params)

    return out.astype(x.dtype).reshape(b, c, h, w)


# -----------------------------------------------------------------------------
# Pure-JAX reference (mirrors the PyTorch forward) for validation
# -----------------------------------------------------------------------------
def ema_ref(x, w1, b1, w3, b3, gnw, gnb, groups):
    b, c, h, w = x.shape
    cg = c // groups
    B = b * groups
    gx = x.reshape(B, cg, h, w)
    x_h = gx.mean(axis=3, keepdims=True)                       # (B,cg,h,1)
    x_w = gx.mean(axis=2, keepdims=True)                       # (B,cg,1,w)
    cat = jnp.concatenate([x_h, jnp.transpose(x_w, (0, 1, 3, 2))], axis=2)
    hwf = jnp.einsum('oi,bipq->bopq', w1, cat) + b1.reshape(1, cg, 1, 1)
    xh, xw = hwf[:, :, :h, :], hwf[:, :, h:, :]
    pre = gx * jax.nn.sigmoid(xh) * jax.nn.sigmoid(jnp.transpose(xw, (0, 1, 3, 2)))
    mean = pre.mean(axis=(2, 3), keepdims=True)
    var = ((pre - mean) ** 2).mean(axis=(2, 3), keepdims=True)
    x1 = (pre - mean) / jnp.sqrt(var + 1e-5)
    x1 = x1 * gnw.reshape(1, cg, 1, 1) + gnb.reshape(1, cg, 1, 1)
    x2 = jax.lax.conv_general_dilated(
        gx, w3, (1, 1), 'SAME',
        dimension_numbers=('NCHW', 'OIHW', 'NCHW')) + b3.reshape(1, cg, 1, 1)
    a1 = jax.nn.softmax(x1.mean(axis=(2, 3)), axis=-1)          # (B,cg)
    a2 = jax.nn.softmax(x2.mean(axis=(2, 3)), axis=-1)
    x1f = x1.reshape(B, cg, h * w)
    x2f = x2.reshape(B, cg, h * w)
    wts = jnp.einsum('bc,bcp->bp', a1, x2f) + jnp.einsum('bc,bcp->bp', a2, x1f)
    out = gx * jax.nn.sigmoid(wts.reshape(B, 1, h, w))
    return out.reshape(b, c, h, w)


if __name__ == "__main__":
    # EMA(channels=64, factor=16): cg = 64 // 16 = 4
    batch, channels, H, W = 2, 64, 16, 16
    groups = 16
    cg = channels // groups

    key = jax.random.PRNGKey(0)
    kx, k1, k2, k3, k4, k5, k6 = jax.random.split(key, 7)
    x = jax.random.normal(kx, (batch, channels, H, W), jnp.float32)
    w1 = jax.random.normal(k1, (cg, cg), jnp.float32) * 0.2        # conv1x1 weight
    b1 = jax.random.normal(k2, (cg,), jnp.float32) * 0.1           # conv1x1 bias
    w3 = jax.random.normal(k3, (cg, cg, 3, 3), jnp.float32) * 0.1  # conv3x3 weight
    b3 = jax.random.normal(k4, (cg,), jnp.float32) * 0.1           # conv3x3 bias
    gnw = 1.0 + 0.1 * jax.random.normal(k5, (cg,), jnp.float32)    # GN weight
    gnb = 0.1 * jax.random.normal(k6, (cg,), jnp.float32)          # GN bias

    out = ema_forward(x, w1, b1, w3, b3, gnw, gnb, groups=groups)
    out = jax.block_until_ready(out)

    ref = ema_ref(x, w1, b1, w3, b3, gnw, gnb, groups)
    assert out.shape == (batch, channels, H, W)
    max_err = float(jnp.max(jnp.abs(out - ref)))
    assert max_err < 5e-3, f"mismatch vs reference: {max_err}"

    print("KERNEL_OK")
</pallas_src>

<mosaic_0001>
module attributes {stable_mosaic.version = 11 : i64} {
  func.func @ema_kernel(%arg0: i32, %arg1: memref<64x256xf32, #tpu.memory_space<vmem>>, %arg2: memref<256x32xf32, #tpu.memory_space<vmem>>, %arg3: memref<32x256xf32, #tpu.memory_space<vmem>>, %arg4: memref<64x64xf32, #tpu.memory_space<vmem>>, %arg5: memref<9x64x64xf32, #tpu.memory_space<vmem>>, %arg6: memref<9x256xf32, #tpu.memory_space<vmem>>, %arg7: memref<64x64xf32, #tpu.memory_space<vmem>>, %arg8: memref<64x4xf32, #tpu.memory_space<vmem>>, %arg9: memref<64x256xf32, #tpu.memory_space<vmem>>) attributes {dimension_semantics = [#tpu.dimension_semantics<parallel>], iteration_bounds = array<i64: 2>, scalar_prefetch = 0 : i64, scratch_operands = 0 : i64, tpu.core_type = #tpu.core_type<tc>, window_params = [{transform_indices = @transform_0, window_bounds = array<i64: 64, 256>}, {pipeline_mode = #tpu.pipeline_mode<synchronous>, transform_indices = @transform_1, window_bounds = array<i64: 256, 32>}, {pipeline_mode = #tpu.pipeline_mode<synchronous>, transform_indices = @transform_2, window_bounds = array<i64: 32, 256>}, {pipeline_mode = #tpu.pipeline_mode<synchronous>, transform_indices = @transform_3, window_bounds = array<i64: 64, 64>}, {pipeline_mode = #tpu.pipeline_mode<synchronous>, transform_indices = @transform_4, window_bounds = array<i64: 9, 64, 64>}, {pipeline_mode = #tpu.pipeline_mode<synchronous>, transform_indices = @transform_5, window_bounds = array<i64: 9, 256>}, {pipeline_mode = #tpu.pipeline_mode<synchronous>, transform_indices = @transform_6, window_bounds = array<i64: 64, 64>}, {transform_indices = @transform_7, window_bounds = array<i64: 64, 4>}, {transform_indices = @transform_8, window_bounds = array<i64: 64, 256>}]} {
    %c0 = arith.constant 0 : index
    %c0_0 = arith.constant 0 : index
    %0 = vector.load %arg1[%c0, %c0_0] : memref<64x256xf32, #tpu.memory_space<vmem>>, vector<64x256xf32>
    %c0_1 = arith.constant 0 : index
    %c0_2 = arith.constant 0 : index
    %1 = vector.load %arg8[%c0_1, %c0_2] : memref<64x4xf32, #tpu.memory_space<vmem>>, vector<64x4xf32>
    %2 = vector.extract_strided_slice %1 {offsets = [0, 0], sizes = [64, 1], strides = [1, 1]} : vector<64x4xf32> to vector<64x1xf32>
    %3 = vector.extract_strided_slice %1 {offsets = [0, 1], sizes = [64, 1], strides = [1, 1]} : vector<64x4xf32> to vector<64x1xf32>
    %4 = vector.extract_strided_slice %1 {offsets = [0, 2], sizes = [64, 1], strides = [1, 1]} : vector<64x4xf32> to vector<64x1xf32>
    %5 = vector.extract_strided_slice %1 {offsets = [0, 3], sizes = [64, 1], strides = [1, 1]} : vector<64x4xf32> to vector<64x1xf32>
    %c0_3 = arith.constant 0 : index
    %c0_4 = arith.constant 0 : index
    %6 = vector.load %arg2[%c0_3, %c0_4] : memref<256x32xf32, #tpu.memory_space<vmem>>, vector<256x32xf32>
    %cst = arith.constant dense<0.000000e+00> : vector<64x32xf32>
    %7 = tpu.matmul %0, %6, %cst {dimension_numbers = #tpu.dot_dimension_numbers<[1], [0], [0], [1], [0, 0, 1, 1], [], []>} : vector<64x256xf32>, vector<256x32xf32>, vector<64x32xf32> -> vector<64x32xf32>
    %c0_5 = arith.constant 0 : index
    %c0_6 = arith.constant 0 : index
    %8 = vector.load %arg4[%c0_5, %c0_6] : memref<64x64xf32, #tpu.memory_space<vmem>>, vector<64x64xf32>
    %cst_7 = arith.constant dense<0.000000e+00> : vector<64x32xf32>
    %9 = tpu.matmul %8, %7, %cst_7 {dimension_numbers = #tpu.dot_dimension_numbers<[1], [0], [0], [1], [0, 0, 1, 1], [], []>} : vector<64x64xf32>, vector<64x32xf32>, vector<64x32xf32> -> vector<64x32xf32>
    %10 = vector.broadcast %2 : vector<64x1xf32> to vector<64x32xf32>
    %11 = arith.addf %9, %10 : vector<64x32xf32>
    %12 = arith.negf %11 : vector<64x32xf32>
    %13 = math.exp %12 : vector<64x32xf32>
    %cst_8 = arith.constant 1.000000e+00 : f32
    %14 = vector.broadcast %cst_8 : f32 to vector<64x32xf32>
    %15 = arith.addf %14, %13 : vector<64x32xf32>
    %16 = arith.divf %14, %15 : vector<64x32xf32>
    %c0_9 = arith.constant 0 : index
    %c0_10 = arith.constant 0 : index
    %17 = vector.load %arg3[%c0_9, %c0_10] : memref<32x256xf32, #tpu.memory_space<vmem>>, vector<32x256xf32>
    %18 = vector.extract_strided_slice %16 {offsets = [0, 0], sizes = [64, 16], strides = [1, 1]} : vector<64x32xf32> to vector<64x16xf32>
    %19 = vector.extract_strided_slice %17 {offsets = [0, 0], sizes = [16, 256], strides = [1, 1]} : vector<32x256xf32> to vector<16x256xf32>
    %cst_11 = arith.constant dense<0.000000e+00> : vector<64x256xf32>
    %20 = tpu.matmul %18, %19, %cst_11 {dimension_numbers = #tpu.dot_dimension_numbers<[1], [0], [0], [1], [0, 0, 1, 1], [], []>} : vector<64x16xf32>, vector<16x256xf32>, vector<64x256xf32> -> vector<64x256xf32>
    %21 = vector.extract_strided_slice %16 {offsets = [0, 16], sizes = [64, 16], strides = [1, 1]} : vector<64x32xf32> to vector<64x16xf32>
    %22 = vector.extract_strided_slice %17 {offsets = [16, 0], sizes = [16, 256], strides = [1, 1]} : vector<32x256xf32> to vector<16x256xf32>
    %cst_12 = arith.constant dense<0.000000e+00> : vector<64x256xf32>
    %23 = tpu.matmul %21, %22, %cst_12 {dimension_numbers = #tpu.dot_dimension_numbers<[1], [0], [0], [1], [0, 0, 1, 1], [], []>} : vector<64x16xf32>, vector<16x256xf32>, vector<64x256xf32> -> vector<64x256xf32>
    %24 = arith.mulf %0, %20 : vector<64x256xf32>
    %25 = arith.mulf %24, %23 : vector<64x256xf32>
    %cst_13 = arith.constant dense<0.000000e+00> : vector<64xf32>
    %26 = vector.multi_reduction <add>, %25, %cst_13 [1] : vector<64x256xf32> to vector<64xf32>
    %27 = vector.shape_cast %26 : vector<64xf32> to vector<64x1xf32>
    %cst_14 = arith.constant 2.560000e+02 : f32
    %28 = vector.broadcast %cst_14 : f32 to vector<64x1xf32>
    %29 = arith.divf %27, %28 : vector<64x1xf32>
    %30 = vector.broadcast %29 : vector<64x1xf32> to vector<64x256xf32>
    %31 = arith.subf %25, %30 : vector<64x256xf32>
    %32 = arith.mulf %31, %31 : vector<64x256xf32>
    %cst_15 = arith.constant dense<0.000000e+00> : vector<64xf32>
    %33 = vector.multi_reduction <add>, %32, %cst_15 [1] : vector<64x256xf32> to vector<64xf32>
    %34 = vector.shape_cast %33 : vector<64xf32> to vector<64x1xf32>
    %cst_16 = arith.constant 2.560000e+02 : f32
    %35 = vector.broadcast %cst_16 : f32 to vector<64x1xf32>
    %36 = arith.divf %34, %35 : vector<64x1xf32>
    %cst_17 = arith.constant 9.99999974E-6 : f32
    %37 = vector.broadcast %cst_17 : f32 to vector<64x1xf32>
    %38 = arith.addf %36, %37 : vector<64x1xf32>
    %39 = math.rsqrt %38 : vector<64x1xf32>
    %40 = vector.broadcast %39 : vector<64x1xf32> to vector<64x256xf32>
    %41 = arith.mulf %31, %40 : vector<64x256xf32>
    %42 = vector.broadcast %4 : vector<64x1xf32> to vector<64x256xf32>
    %43 = arith.mulf %41, %42 : vector<64x256xf32>
    %44 = vector.broadcast %5 : vector<64x1xf32> to vector<64x256xf32>
    %45 = arith.addf %43, %44 : vector<64x256xf32>
    %c0_18 = arith.constant 0 : index
    %c0_19 = arith.constant 0 : index
    %46 = vector.load %arg6[%c0_18, %c0_19] : memref<9x256xf32, #tpu.memory_space<vmem>>, vector<9x256xf32>
    %cst_20 = arith.constant 0.000000e+00 : f32
    %47 = vector.broadcast %cst_20 : f32 to vector<64x256xf32>
    %48 = vector.broadcast %3 : vector<64x1xf32> to vector<64x256xf32>
    %49 = arith.addf %47, %48 : vector<64x256xf32>
    %c17_i32 = arith.constant 17 : i32
    %50 = tpu.dynamic_rotate %0 by %c17_i32 dim 1 : vector<64x256xf32>, i32 -> vector<64x256xf32>
    %51 = vector.extract_strided_slice %46 {offsets = [0, 0], sizes = [1, 256], strides = [1, 1]} : vector<9x256xf32> to vector<1x256xf32>
    %52 = vector.broadcast %51 : vector<1x256xf32> to vector<64x256xf32>
    %53 = arith.mulf %50, %52 : vector<64x256xf32>
    %c0_21 = arith.constant 0 : index
    %c0_22 = arith.constant 0 : index
    %c0_23 = arith.constant 0 : index
    %54 = vector.load %arg5[%c0_21, %c0_22, %c0_23] : memref<9x64x64xf32, #tpu.memory_space<vmem>>, vector<1x64x64xf32>
    %55 = vector.shape_cast %54 : vector<1x64x64xf32> to vector<64x64xf32>
    %cst_24 = arith.constant dense<0.000000e+00> : vector<64x256xf32>
    %56 = tpu.matmul %55, %53, %cst_24 {dimension_numbers = #tpu.dot_dimension_numbers<[1], [0], [0], [1], [0, 0, 1, 1], [], []>} : vector<64x64xf32>, vector<64x256xf32>, vector<64x256xf32> -> vector<64x256xf32>
    %57 = arith.addf %49, %56 : vector<64x256xf32>
    %c16_i32 = arith.constant 16 : i32
    %58 = tpu.dynamic_rotate %0 by %c16_i32 dim 1 : vector<64x256xf32>, i32 -> vector<64x256xf32>
    %59 = vector.extract_strided_slice %46 {offsets = [1, 0], sizes = [1, 256], strides = [1, 1]} : vector<9x256xf32> to vector<1x256xf32>
    %60 = vector.broadcast %59 : vector<1x256xf32> to vector<64x256xf32>
    %61 = arith.mulf %58, %60 : vector<64x256xf32>
    %c1 = arith.constant 1 : index
    %c0_25 = arith.constant 0 : index
    %c0_26 = arith.constant 0 : index
    %62 = vector.load %arg5[%c1, %c0_25, %c0_26] : memref<9x64x64xf32, #tpu.memory_space<vmem>>, vector<1x64x64xf32>
    %63 = vector.shape_cast %62 : vector<1x64x64xf32> to vector<64x64xf32>
    %cst_27 = arith.constant dense<0.000000e+00> : vector<64x256xf32>
    %64 = tpu.matmul %63, %61, %cst_27 {dimension_numbers = #tpu.dot_dimension_numbers<[1], [0], [0], [1], [0, 0, 1, 1], [], []>} : vector<64x64xf32>, vector<64x256xf32>, vector<64x256xf32> -> vector<64x256xf32>
    %65 = arith.addf %57, %64 : vector<64x256xf32>
    %c15_i32 = arith.constant 15 : i32
    %66 = tpu.dynamic_rotate %0 by %c15_i32 dim 1 : vector<64x256xf32>, i32 -> vector<64x256xf32>
    %67 = vector.extract_strided_slice %46 {offsets = [2, 0], sizes = [1, 256], strides = [1, 1]} : vector<9x256xf32> to vector<1x256xf32>
    %68 = vector.broadcast %67 : vector<1x256xf32> to vector<64x256xf32>
    %69 = arith.mulf %66, %68 : vector<64x256xf32>
    %c2 = arith.constant 2 : index
    %c0_28 = arith.constant 0 : index
    %c0_29 = arith.constant 0 : index
    %70 = vector.load %arg5[%c2, %c0_28, %c0_29] : memref<9x64x64xf32, #tpu.memory_space<vmem>>, vector<1x64x64xf32>
    %71 = vector.shape_cast %70 : vector<1x64x64xf32> to vector<64x64xf32>
    %cst_30 = arith.constant dense<0.000000e+00> : vector<64x256xf32>
    %72 = tpu.matmul %71, %69, %cst_30 {dimension_numbers = #tpu.dot_dimension_numbers<[1], [0], [0], [1], [0, 0, 1, 1], [], []>} : vector<64x64xf32>, vector<64x256xf32>, vector<64x256xf32> -> vector<64x256xf32>
    %73 = arith.addf %65, %72 : vector<64x256xf32>
    %c1_i32 = arith.constant 1 : i32
    %74 = tpu.dynamic_rotate %0 by %c1_i32 dim 1 : vector<64x256xf32>, i32 -> vector<64x256xf32>
    %75 = vector.extract_strided_slice %46 {offsets = [3, 0], sizes = [1, 256], strides = [1, 1]} : vector<9x256xf32> to vector<1x256xf32>
    %76 = vector.broadcast %75 : vector<1x256xf32> to vector<64x256xf32>
    %77 = arith.mulf %74, %76 : vector<64x256xf32>
    %c3 = arith.constant 3 : index
    %c0_31 = arith.constant 0 : index
    %c0_32 = arith.constant 0 : index
    %78 = vector.load %arg5[%c3, %c0_31, %c0_32] : memref<9x64x64xf32, #tpu.memory_space<vmem>>, vector<1x64x64xf32>
    %79 = vector.shape_cast %78 : vector<1x64x64xf32> to vector<64x64xf32>
    %cst_33 = arith.constant dense<0.000000e+00> : vector<64x256xf32>
    %80 = tpu.matmul %79, %77, %cst_33 {dimension_numbers = #tpu.dot_dimension_numbers<[1], [0], [0], [1], [0, 0, 1, 1], [], []>} : vector<64x64xf32>, vector<64x256xf32>, vector<64x256xf32> -> vector<64x256xf32>
    %81 = arith.addf %73, %80 : vector<64x256xf32>
    %82 = vector.extract_strided_slice %46 {offsets = [4, 0], sizes = [1, 256], strides = [1, 1]} : vector<9x256xf32> to vector<1x256xf32>
    %83 = vector.broadcast %82 : vector<1x256xf32> to vector<64x256xf32>
    %84 = arith.mulf %0, %83 : vector<64x256xf32>
    %c4 = arith.constant 4 : index
    %c0_34 = arith.constant 0 : index
    %c0_35 = arith.constant 0 : index
    %85 = vector.load %arg5[%c4, %c0_34, %c0_35] : memref<9x64x64xf32, #tpu.memory_space<vmem>>, vector<1x64x64xf32>
    %86 = vector.shape_cast %85 : vector<1x64x64xf32> to vector<64x64xf32>
    %cst_36 = arith.constant dense<0.000000e+00> : vector<64x256xf32>
    %87 = tpu.matmul %86, %84, %cst_36 {dimension_numbers = #tpu.dot_dimension_numbers<[1], [0], [0], [1], [0, 0, 1, 1], [], []>} : vector<64x64xf32>, vector<64x256xf32>, vector<64x256xf32> -> vector<64x256xf32>
    %88 = arith.addf %81, %87 : vector<64x256xf32>
    %c255_i32 = arith.constant 255 : i32
    %89 = tpu.dynamic_rotate %0 by %c255_i32 dim 1 : vector<64x256xf32>, i32 -> vector<64x256xf32>
    %90 = vector.extract_strided_slice %46 {offsets = [5, 0], sizes = [1, 256], strides = [1, 1]} : vector<9x256xf32> to vector<1x256xf32>
    %91 = vector.broadcast %90 : vector<1x256xf32> to vector<64x256xf32>
    %92 = arith.mulf %89, %91 : vector<64x256xf32>
    %c5 = arith.constant 5 : index
    %c0_37 = arith.constant 0 : index
    %c0_38 = arith.constant 0 : index
    %93 = vector.load %arg5[%c5, %c0_37, %c0_38] : memref<9x64x64xf32, #tpu.memory_space<vmem>>, vector<1x64x64xf32>
    %94 = vector.shape_cast %93 : vector<1x64x64xf32> to vector<64x64xf32>
    %cst_39 = arith.constant dense<0.000000e+00> : vector<64x256xf32>
    %95 = tpu.matmul %94, %92, %cst_39 {dimension_numbers = #tpu.dot_dimension_numbers<[1], [0], [0], [1], [0, 0, 1, 1], [], []>} : vector<64x64xf32>, vector<64x256xf32>, vector<64x256xf32> -> vector<64x256xf32>
    %96 = arith.addf %88, %95 : vector<64x256xf32>
    %c241_i32 = arith.constant 241 : i32
    %97 = tpu.dynamic_rotate %0 by %c241_i32 dim 1 : vector<64x256xf32>, i32 -> vector<64x256xf32>
    %98 = vector.extract_strided_slice %46 {offsets = [6, 0], sizes = [1, 256], strides = [1, 1]} : vector<9x256xf32> to vector<1x256xf32>
    %99 = vector.broadcast %98 : vector<1x256xf32> to vector<64x256xf32>
    %100 = arith.mulf %97, %99 : vector<64x256xf32>
    %c6 = arith.constant 6 : index
    %c0_40 = arith.constant 0 : index
    %c0_41 = arith.constant 0 : index
    %101 = vector.load %arg5[%c6, %c0_40, %c0_41] : memref<9x64x64xf32, #tpu.memory_space<vmem>>, vector<1x64x64xf32>
    %102 = vector.shape_cast %101 : vector<1x64x64xf32> to vector<64x64xf32>
    %cst_42 = arith.constant dense<0.000000e+00> : vector<64x256xf32>
    %103 = tpu.matmul %102, %100, %cst_42 {dimension_numbers = #tpu.dot_dimension_numbers<[1], [0], [0], [1], [0, 0, 1, 1], [], []>} : vector<64x64xf32>, vector<64x256xf32>, vector<64x256xf32> -> vector<64x256xf32>
    %104 = arith.addf %96, %103 : vector<64x256xf32>
    %c240_i32 = arith.constant 240 : i32
    %105 = tpu.dynamic_rotate %0 by %c240_i32 dim 1 : vector<64x256xf32>, i32 -> vector<64x256xf32>
    %106 = vector.extract_strided_slice %46 {offsets = [7, 0], sizes = [1, 256], strides = [1, 1]} : vector<9x256xf32> to vector<1x256xf32>
    %107 = vector.broadcast %106 : vector<1x256xf32> to vector<64x256xf32>
    %108 = arith.mulf %105, %107 : vector<64x256xf32>
    %c7 = arith.constant 7 : index
    %c0_43 = arith.constant 0 : index
    %c0_44 = arith.constant 0 : index
    %109 = vector.load %arg5[%c7, %c0_43, %c0_44] : memref<9x64x64xf32, #tpu.memory_space<vmem>>, vector<1x64x64xf32>
    %110 = vector.shape_cast %109 : vector<1x64x64xf32> to vector<64x64xf32>
    %cst_45 = arith.constant dense<0.000000e+00> : vector<64x256xf32>
    %111 = tpu.matmul %110, %108, %cst_45 {dimension_numbers = #tpu.dot_dimension_numbers<[1], [0], [0], [1], [0, 0, 1, 1], [], []>} : vector<64x64xf32>, vector<64x256xf32>, vector<64x256xf32> -> vector<64x256xf32>
    %112 = arith.addf %104, %111 : vector<64x256xf32>
    %c239_i32 = arith.constant 239 : i32
    %113 = tpu.dynamic_rotate %0 by %c239_i32 dim 1 : vector<64x256xf32>, i32 -> vector<64x256xf32>
    %114 = vector.extract_strided_slice %46 {offsets = [8, 0], sizes = [1, 256], strides = [1, 1]} : vector<9x256xf32> to vector<1x256xf32>
    %115 = vector.broadcast %114 : vector<1x256xf32> to vector<64x256xf32>
    %116 = arith.mulf %113, %115 : vector<64x256xf32>
    %c8 = arith.constant 8 : index
    %c0_46 = arith.constant 0 : index
    %c0_47 = arith.constant 0 : index
    %117 = vector.load %arg5[%c8, %c0_46, %c0_47] : memref<9x64x64xf32, #tpu.memory_space<vmem>>, vector<1x64x64xf32>
    %118 = vector.shape_cast %117 : vector<1x64x64xf32> to vector<64x64xf32>
    %cst_48 = arith.constant dense<0.000000e+00> : vector<64x256xf32>
    %119 = tpu.matmul %118, %116, %cst_48 {dimension_numbers = #tpu.dot_dimension_numbers<[1], [0], [0], [1], [0, 0, 1, 1], [], []>} : vector<64x64xf32>, vector<64x256xf32>, vector<64x256xf32> -> vector<64x256xf32>
    %120 = arith.addf %112, %119 : vector<64x256xf32>
    %c0_49 = arith.constant 0 : index
    %c0_50 = arith.constant 0 : index
    %121 = vector.load %arg7[%c0_49, %c0_50] : memref<64x64xf32, #tpu.memory_space<vmem>>, vector<64x64xf32>
    %cst_51 = arith.constant dense<0.000000e+00> : vector<64xf32>
    %122 = vector.multi_reduction <add>, %45, %cst_51 [1] : vector<64x256xf32> to vector<64xf32>
    %123 = vector.shape_cast %122 : vector<64xf32> to vector<64x1xf32>
    %cst_52 = arith.constant 2.560000e+02 : f32
    %124 = vector.broadcast %cst_52 : f32 to vector<64x1xf32>
    %125 = arith.divf %123, %124 : vector<64x1xf32>
    %cst_53 = arith.constant dense<0.000000e+00> : vector<64xf32>
    %126 = vector.multi_reduction <add>, %120, %cst_53 [1] : vector<64x256xf32> to vector<64xf32>
    %127 = vector.shape_cast %126 : vector<64xf32> to vector<64x1xf32>
    %cst_54 = arith.constant 2.560000e+02 : f32
    %128 = vector.broadcast %cst_54 : f32 to vector<64x1xf32>
    %129 = arith.divf %127, %128 : vector<64x1xf32>
    %130 = vector.shape_cast %125 : vector<64x1xf32> to vector<1x64x1xf32>
    %cst_55 = arith.constant dense<0xFF800000> : vector<1xf32>
    %131 = vector.multi_reduction <maximumf>, %130, %cst_55 [1, 2] : vector<1x64x1xf32> to vector<1xf32>
    %132 = vector.shape_cast %131 : vector<1xf32> to vector<1x1x1xf32>
    %133 = vector.extract %132[0, 0, 0] : f32 from vector<1x1x1xf32>
    %134 = vector.broadcast %133 : f32 to vector<64x1xf32>
    %135 = arith.subf %125, %134 : vector<64x1xf32>
    %136 = math.exp %135 : vector<64x1xf32>
    %137 = vector.shape_cast %129 : vector<64x1xf32> to vector<1x64x1xf32>
    %cst_56 = arith.constant dense<0xFF800000> : vector<1xf32>
    %138 = vector.multi_reduction <maximumf>, %137, %cst_56 [1, 2] : vector<1x64x1xf32> to vector<1xf32>
    %139 = vector.shape_cast %138 : vector<1xf32> to vector<1x1x1xf32>
    %140 = vector.extract %139[0, 0, 0] : f32 from vector<1x1x1xf32>
    %141 = vector.broadcast %140 : f32 to vector<64x1xf32>
    %142 = arith.subf %129, %141 : vector<64x1xf32>
    %143 = math.exp %142 : vector<64x1xf32>
    %144 = tpu.concatenate %136, %143 in 1 : vector<64x1xf32>, vector<64x1xf32> -> vector<64x2xf32>
    %cst_57 = arith.constant dense<0.000000e+00> : vector<64x2xf32>
    %145 = tpu.matmul %121, %144, %cst_57 {dimension_numbers = #tpu.dot_dimension_numbers<[1], [0], [0], [1], [0, 0, 1, 1], [], []>} : vector<64x64xf32>, vector<64x2xf32>, vector<64x2xf32> -> vector<64x2xf32>
    %146 = vector.extract_strided_slice %145 {offsets = [0, 0], sizes = [64, 1], strides = [1, 1]} : vector<64x2xf32> to vector<64x1xf32>
    %147 = arith.divf %136, %146 : vector<64x1xf32>
    %148 = vector.extract_strided_slice %145 {offsets = [0, 1], sizes = [64, 1], strides = [1, 1]} : vector<64x2xf32> to vector<64x1xf32>
    %149 = arith.divf %143, %148 : vector<64x1xf32>
    %150 = vector.broadcast %147 : vector<64x1xf32> to vector<64x256xf32>
    %151 = arith.mulf %150, %120 : vector<64x256xf32>
    %152 = vector.broadcast %149 : vector<64x1xf32> to vector<64x256xf32>
    %153 = arith.mulf %152, %45 : vector<64x256xf32>
    %154 = arith.addf %151, %153 : vector<64x256xf32>
    %cst_58 = arith.constant dense<0.000000e+00> : vector<64x256xf32>
    %155 = tpu.matmul %121, %154, %cst_58 {dimension_numbers = #tpu.dot_dimension_numbers<[1], [0], [0], [1], [0, 0, 1, 1], [], []>} : vector<64x64xf32>, vector<64x256xf32>, vector<64x256xf32> -> vector<64x256xf32>
    %156 = arith.negf %155 : vector<64x256xf32>
    %157 = math.exp %156 : vector<64x256xf32>
    %cst_59 = arith.constant 1.000000e+00 : f32
    %158 = vector.broadcast %cst_59 : f32 to vector<64x256xf32>
    %159 = arith.addf %158, %157 : vector<64x256xf32>
    %160 = arith.divf %158, %159 : vector<64x256xf32>
    %161 = arith.mulf %0, %160 : vector<64x256xf32>
    %c0_60 = arith.constant 0 : index
    %c0_61 = arith.constant 0 : index
    %162 = vector.load %arg9[%c0_60, %c0_61] : memref<64x256xf32, #tpu.memory_space<vmem>>, vector<64x256xf32>
    tpu.vector_store %arg9[%c0_60, %c0_61], %161 {strides = array<i32>} : memref<64x256xf32, #tpu.memory_space<vmem>>, vector<64x256xf32>,
    return
  }
  func.func @transform_0(%arg0: i32) -> (i32, i32) {
    %c0_i32 = arith.constant 0 : i32
    %c0_i32_0 = arith.constant 0 : i32
    return %arg0, %c0_i32 : i32, i32
  }
  func.func @transform_1(%arg0: i32) -> (i32, i32) {
    %c0_i32 = arith.constant 0 : i32
    %c0_i32_0 = arith.constant 0 : i32
    %c0_i32_1 = arith.constant 0 : i32
    return %c0_i32, %c0_i32_0 : i32, i32
  }
  func.func @transform_2(%arg0: i32) -> (i32, i32) {
    %c0_i32 = arith.constant 0 : i32
    %c0_i32_0 = arith.constant 0 : i32
    %c0_i32_1 = arith.constant 0 : i32
    return %c0_i32, %c0_i32_0 : i32, i32
  }
  func.func @transform_3(%arg0: i32) -> (i32, i32) {
    %c0_i32 = arith.constant 0 : i32
    %c0_i32_0 = arith.constant 0 : i32
    %c0_i32_1 = arith.constant 0 : i32
    return %c0_i32, %c0_i32_0 : i32, i32
  }
  func.func @transform_4(%arg0: i32) -> (i32, i32, i32) {
    %c0_i32 = arith.constant 0 : i32
    %c0_i32_0 = arith.constant 0 : i32
    %c0_i32_1 = arith.constant 0 : i32
    %c0_i32_2 = arith.constant 0 : i32
    return %c0_i32, %c0_i32_0, %c0_i32_1 : i32, i32, i32
  }
  func.func @transform_5(%arg0: i32) -> (i32, i32) {
    %c0_i32 = arith.constant 0 : i32
    %c0_i32_0 = arith.constant 0 : i32
    %c0_i32_1 = arith.constant 0 : i32
    return %c0_i32, %c0_i32_0 : i32, i32
  }
  func.func @transform_6(%arg0: i32) -> (i32, i32) {
    %c0_i32 = arith.constant 0 : i32
    %c0_i32_0 = arith.constant 0 : i32
    %c0_i32_1 = arith.constant 0 : i32
    return %c0_i32, %c0_i32_0 : i32, i32
  }
  func.func @transform_7(%arg0: i32) -> (i32, i32) {
    %c0_i32 = arith.constant 0 : i32
    %c0_i32_0 = arith.constant 0 : i32
    return %arg0, %c0_i32 : i32, i32
  }
  func.func @transform_8(%arg0: i32) -> (i32, i32) {
    %c0_i32 = arith.constant 0 : i32
    %c0_i32_0 = arith.constant 0 : i32
    return %arg0, %c0_i32 : i32, i32
  }
}

</mosaic_0001>

<llo_original>
// kernel: mul.84
$region0: #{mul.84}
  #allocation0 [shape = 's32[1]{0}', space=sflag, size = 0x4, scoped, tag = 'scoped memory for mul.84']
  %s0 = inlined_call_operand.vmem [shape: f32[64,64], index: 0, kind: input, shape index: {}]
  %s1 = inlined_call_operand.vmem [shape: f32[64,64], index: 1, kind: input, shape index: {}]
  %s2 = inlined_call_operand.vmem [shape: f32[64,64], index: 2, kind: output, shape index: {}]
  %v3 = vld [vmem:[%s0] sm:$0xff]
  %v4 = vld [vmem:[%s1] sm:$0xff]
  %5 = xla_tuple %v3, %v4
  %6 = xla_tuple %5
  %v7 = vmul.f32 %v3, %v4
  %8 = xla_tuple %v7
  %9 = vst [vmem:[%s2] sm:$0xff] %v7
  %s10 = scalar_lea.vmem %s0, 8
  %v11 = vld [vmem:[%s10] sm:$0xff]
  %s12 = scalar_lea.vmem %s1, 8
  %v13 = vld [vmem:[%s12] sm:$0xff]
  %14 = xla_tuple %v11, %v13
  %15 = xla_tuple %14
  %v16 = vmul.f32 %v11, %v13
  %17 = xla_tuple %v16
  %s18 = scalar_lea.vmem %s2, 8
  %19 = vst [vmem:[%s18] sm:$0xff] %v16
  %s20 = scalar_lea.vmem %s0, 16
  %v21 = vld [vmem:[%s20] sm:$0xff]
  %s22 = scalar_lea.vmem %s1, 16
  %v23 = vld [vmem:[%s22] sm:$0xff]
  %24 = xla_tuple %v21, %v23
  %25 = xla_tuple %24
  %v26 = vmul.f32 %v21, %v23
  %27 = xla_tuple %v26
  %s28 = scalar_lea.vmem %s2, 16
  %29 = vst [vmem:[%s28] sm:$0xff] %v26
  %s30 = scalar_lea.vmem %s0, 24
  %v31 = vld [vmem:[%s30] sm:$0xff]
  %s32 = scalar_lea.vmem %s1, 24
  %v33 = vld [vmem:[%s32] sm:$0xff]
  %34 = xla_tuple %v31, %v33
  %35 = xla_tuple %34
  %v36 = vmul.f32 %v31, %v33
  %37 = xla_tuple %v36
  %s38 = scalar_lea.vmem %s2, 24
  %39 = vst [vmem:[%s38] sm:$0xff] %v36
  %s40 = scalar_lea.vmem %s0, 32
  %v41 = vld [vmem:[%s40] sm:$0xff]
  %s42 = scalar_lea.vmem %s1, 32
  %v43 = vld [vmem:[%s42] sm:$0xff]
  %44 = xla_tuple %v41, %v43
  %45 = xla_tuple %44
  %v46 = vmul.f32 %v41, %v43
  %47 = xla_tuple %v46
  %s48 = scalar_lea.vmem %s2, 32
  %49 = vst [vmem:[%s48] sm:$0xff] %v46
  %s50 = scalar_lea.vmem %s0, 40
  %v51 = vld [vmem:[%s50] sm:$0xff]
  %s52 = scalar_lea.vmem %s1, 40
  %v53 = vld [vmem:[%s52] sm:$0xff]
  %54 = xla_tuple %v51, %v53
  %55 = xla_tuple %54
  %v56 = vmul.f32 %v51, %v53
  %57 = xla_tuple %v56
  %s58 = scalar_lea.vmem %s2, 40
  %59 = vst [vmem:[%s58] sm:$0xff] %v56
  %s60 = scalar_lea.vmem %s0, 48
  %v61 = vld [vmem:[%s60] sm:$0xff]
  %s62 = scalar_lea.vmem %s1, 48
  %v63 = vld [vmem:[%s62] sm:$0xff]
  %64 = xla_tuple %v61, %v63
  %65 = xla_tuple %64
  %v66 = vmul.f32 %v61, %v63
  %67 = xla_tuple %v66
  %s68 = scalar_lea.vmem %s2, 48
  %69 = vst [vmem:[%s68] sm:$0xff] %v66
  %s70 = scalar_lea.vmem %s0, 56
  %v71 = vld [vmem:[%s70] sm:$0xff]
  %s72 = scalar_lea.vmem %s1, 56
  %v73 = vld [vmem:[%s72] sm:$0xff]
  %74 = xla_tuple %v71, %v73
  %75 = xla_tuple %74
  %v76 = vmul.f32 %v71, %v73
  %77 = xla_tuple %v76
  %s78 = scalar_lea.vmem %s2, 56
  %79 = vst [vmem:[%s78] sm:$0xff] %v76

// kernel: tile.23
$region0: #{tile.23}
  #allocation0 [shape = 's32[1]{0}', space=sflag, size = 0x4, scoped, tag = 'scoped memory for tile.23']
  %s0 = inlined_call_operand.vmem [shape: f32[4], index: 0, kind: input, shape index: {}]
  %s1 = inlined_call_operand.vmem [shape: f32[32,4], index: 1, kind: output, shape index: {}]
  // Predicated region
  $region2: #{tile.23} parent=0 // pred_check
    _
  $region3: #{tile.23} parent=0 // pred_check_branch
    %3 = sbr.rel (0) target = $region5
  $region4: #{tile.23} parent=0 // pred_region
    _
  $region5: #{tile.23} parent=0 // pred_fallthru
    _
  %v4 = vld [vmem:[%s0] ss:$0 sm:$0xff]
  %5 = vst [vmem:[%s1] sm:$0xff] %v4
  %s6 = scalar_lea.vmem %s1, 8
  %7 = vst [vmem:[%s6] sm:$0xff] %v4
  %s8 = scalar_lea.vmem %s1, 16
  %9 = vst [vmem:[%s8] sm:$0xff] %v4
  %s10 = scalar_lea.vmem %s1, 24
  %11 = vst [vmem:[%s10] sm:$0xff] %v4

// kernel: tile.36
$region0: #{tile.36}
  %s0 = inlined_call_operand.vmem [shape: f32[32,4], index: 0, kind: input, shape index: {}]
  %s1 = inlined_call_operand.vmem [shape: f32[128,1], index: 1, kind: output, shape index: {}]
  $region1: #{tile.36} parent=0
    #allocation0 [shape = 'u8[4096]{0}', space=vmem, size = 0x1000, scoped, tag = 'scoped mem for output reshape']
    %v2 = vld [vmem:[%s0] sm:$0x1]
    %vm3 = vcmask 31744
    %4 = vst.msk [vmem:[#allocation0] sm:$0x1] %vm3, %v2
    %s5 = scalar_lea.vmem %s0, 31
    %v6 = vld [vmem:[%s5] sm:$0x1]
    %7 = vrot.lane.b32.xlu0 %v6, 124
    %v8 = vpop.permute.xlu0 %7
    %vm9 = vcmask 1048544
    %10 = vst.msk [vmem:[#allocation0] sm:$0x1] %vm9, %v8
    %s11 = scalar_lea.vmem %s0, 30
    %v12 = vld [vmem:[%s11] sm:$0x1]
    %13 = vrot.lane.b32.xlu0 %v12, 120
    %v14 = vpop.permute.xlu0 %13
    %vm15 = vcmask 1015744
    %16 = vst.msk [vmem:[#allocation0] sm:$0x1] %vm15, %v14
    %s17 = scalar_lea.vmem %s0, 29
    %v18 = vld [vmem:[%s17] sm:$0x1]
    %19 = vrot.lane.b32.xlu0 %v18, 116
    %v20 = vpop.permute.xlu0 %19
    %vm21 = vcmask 982944
    %22 = vst.msk [vmem:[#allocation0] sm:$0x1] %vm21, %v20
    %s23 = scalar_lea.vmem %s0, 28
    %v24 = vld [vmem:[%s23] sm:$0x1]
    %25 = vrot.lane.b32.xlu0 %v24, 112
    %v26 = vpop.permute.xlu0 %25
    %vm27 = vcmask 950144
    %28 = vst.msk [vmem:[#allocation0] sm:$0x1] %vm27, %v26
    %s29 = scalar_lea.vmem %s0, 27
    %v30 = vld [vmem:[%s29] sm:$0x1]
    %31 = vrot.lane.b32.xlu0 %v30, 108
    %v32 = vpop.permute.xlu0 %31
    %vm33 = vcmask 917344
    %34 = vst.msk [vmem:[#allocation0] sm:$0x1] %vm33, %v32
    %s35 = scalar_lea.vmem %s0, 26
    %v36 = vld [vmem:[%s35] sm:$0x1]
    %37 = vrot.lane.b32.xlu0 %v36, 104
    %v38 = vpop.permute.xlu0 %37
    %vm39 = vcmask 884544
    %40 = vst.msk [vmem:[#allocation0] sm:$0x1] %vm39, %v38
    %s41 = scalar_lea.vmem %s0, 25
    %v42 = vld [vmem:[%s41] sm:$0x1]
    %43 = vrot.lane.b32.xlu0 %v42, 100
    %v44 = vpop.permute.xlu0 %43
    %vm45 = vcmask 851744
    %46 = vst.msk [vmem:[#allocation0] sm:$0x1] %vm45, %v44
    %s47 = scalar_lea.vmem %s0, 24
    %v48 = vld [vmem:[%s47] sm:$0x1]
    %49 = vrot.lane.b32.xlu0 %v48, 96
    %v50 = vpop.permute.xlu0 %49
    %vm51 = vcmask 818944
    %52 = vst.msk [vmem:[#allocation0] sm:$0x1] %vm51, %v50
    %s53 = scalar_lea.vmem %s0, 23
    %v54 = vld [vmem:[%s53] sm:$0x1]
    %55 = vrot.lane.b32.xlu0 %v54, 92
    %v56 = vpop.permute.xlu0 %55
    %vm57 = vcmask 786144
    %58 = vst.msk [vmem:[#allocation0] sm:$0x1] %vm57, %v56
    %s59 = scalar_lea.vmem %s0, 22
    %v60 = vld [vmem:[%s59] sm:$0x1]
    %61 = vrot.lane.b32.xlu0 %v60, 88
    %v62 = vpop.permute.xlu0 %61
    %vm63 = vcmask 753344
    %64 = vst.msk [vmem:[#allocation0] sm:$0x1] %vm63, %v62
    %s65 = scalar_lea.vmem %s0, 21
    %v66 = vld [vmem:[%s65] sm:$0x1]
    %67 = vrot.lane.b32.xlu0 %v66, 84
    %v68 = vpop.permute.xlu0 %67
    %vm69 = vcmask 720544
    %70 = vst.msk [vmem:[#allocation0] sm:$0x1] %vm69, %v68
    %s71 = scalar_lea.vmem %s0, 20
    %v72 = vld [vmem:[%s71] sm:$0x1]
    %73 = vrot.lane.b32.xlu0 %v72, 80
    %v74 = vpop.permute.xlu0 %73
    %vm75 = vcmask 687744
    %76 = vst.msk [vmem:[#allocation0] sm:$0x1] %vm75, %v74
    %s77 = scalar_lea.vmem %s0, 19
    %v78 = vld [vmem:[%s77] sm:$0x1]
    %79 = vrot.lane.b32.xlu0 %v78, 76
    %v80 = vpop.permute.xlu0 %79
    %vm81 = vcmask 654944
    %82 = vst.msk [vmem:[#allocation0] sm:$0x1] %vm81, %v80
    %s83 = scalar_lea.vmem %s0, 18
    %v84 = vld [vmem:[%s83] sm:$0x1]
    %85 = vrot.lane.b32.xlu0 %v84, 72
    %v86 = vpop.permute.xlu0 %85
    %vm87 = vcmask 622144
    %88 = vst.msk [vmem:[#allocation0] sm:$0x1] %vm87, %v86
    %s89 = scalar_lea.vmem %s0, 17
    %v90 = vld [vmem:[%s89] sm:$0x1]
    %91 = vrot.lane.b32.xlu0 %v90, 68
    %v92 = vpop.permute.xlu0 %91
    %vm93 = vcmask 589344
    %94 = vst.msk [vmem:[#allocation0] sm:$0x1] %vm93, %v92
    %s95 = scalar_lea.vmem %s0, 16
    %v96 = vld [vmem:[%s95] sm:$0x1]
    %97 = vrot.lane.b32.xlu0 %v96, 64
    %v98 = vpop.permute.xlu0 %97
    %vm99 = vcmask 556544
    %100 = vst.msk [vmem:[#allocation0] sm:$0x1] %vm99, %v98
    %s101 = scalar_lea.vmem %s0, 15
    %v102 = vld [vmem:[%s101] sm:$0x1]
    %103 = vrot.lane.b32.xlu0 %v102, 60
    %v104 = vpop.permute.xlu0 %103
    %vm105 = vcmask 523744
    %106 = vst.msk [vmem:[#allocation0] sm:$0x1] %vm105, %v104
    %s107 = scalar_lea.vmem %s0, 14
    %v108 = vld [vmem:[%s107] sm:$0x1]
    %109 = vrot.lane.b32.xlu0 %v108, 56
    %v110 = vpop.permute.xlu0 %109
    %vm111 = vcmask 490944
    %112 = vst.msk [vmem:[#allocation0] sm:$0x1] %vm111, %v110
    %s113 = scalar_lea.vmem %s0, 13
    %v114 = vld [vmem:[%s113] sm:$0x1]
    %115 = vrot.lane.b32.xlu0 %v114, 52
    %v116 = vpop.permute.xlu0 %115
    %vm117 = vcmask 458144
    %118 = vst.msk [vmem:[#allocation0] sm:$0x1] %vm117, %v116
    %s119 = scalar_lea.vmem %s0, 12
    %v120 = vld [vmem:[%s119] sm:$0x1]
    %121 = vrot.lane.b32.xlu0 %v120, 48
    %v122 = vpop.permute.xlu0 %121
    %vm123 = vcmask 425344
    %124 = vst.msk [vmem:[#allocation0] sm:$0x1] %vm123, %v122
    %s125 = scalar_lea.vmem %s0, 11
    %v126 = vld [vmem:[%s125] sm:$0x1]
    %127 = vrot.lane.b32.xlu0 %v126, 44
    %v128 = vpop.permute.xlu0 %127
    %vm129 = vcmask 392544
    %130 = vst.msk [vmem:[#allocation0] sm:$0x1] %vm129, %v128
    %s131 = scalar_lea.vmem %s0, 10
    %v132 = vld [vmem:[%s131] sm:$0x1]
    %133 = vrot.lane.b32.xlu0 %v132, 40
    %v134 = vpop.permute.xlu0 %133
    %vm135 = vcmask 359744
    %136 = vst.msk [vmem:[#allocation0] sm:$0x1] %vm135, %v134
    %s137 = scalar_lea.vmem %s0, 9
    %v138 = vld [vmem:[%s137] sm:$0x1]
    %139 = vrot.lane.b32.xlu0 %v138, 36
    %v140 = vpop.permute.xlu0 %139
    %vm141 = vcmask 326944
    %142 = vst.msk [vmem:[#allocation0] sm:$0x1] %vm141, %v140
    %s143 = scalar_lea.vmem %s0, 8
    %v144 = vld [vmem:[%s143] sm:$0x1]
    %145 = vrot.lane.b32.xlu0 %v144, 32
    %v146 = vpop.permute.xlu0 %145
    %vm147 = vcmask 294144
    %148 = vst.msk [vmem:[#allocation0] sm:$0x1] %vm147, %v146
    %s149 = scalar_lea.vmem %s0, 7
    %v150 = vld [vmem:[%s149] sm:$0x1]
    %151 = vrot.lane.b32.xlu0 %v150, 28
    %v152 = vpop.permute.xlu0 %151
    %vm153 = vcmask 261344
    %154 = vst.msk [vmem:[#allocation0] sm:$0x1] %vm153, %v152
    %s155 = scalar_lea.vmem %s0, 6
    %v156 = vld [vmem:[%s155] sm:$0x1]
    %157 = vrot.lane.b32.xlu0 %v156, 24
    %v158 = vpop.permute.xlu0 %157
    %vm159 = vcmask 228544
    %160 = vst.msk [vmem:[#allocation0] sm:$0x1] %vm159, %v158
    %s161 = scalar_lea.vmem %s0, 5
    %v162 = vld [vmem:[%s161] sm:$0x1]
    %163 = vrot.lane.b32.xlu0 %v162, 20
    %v164 = vpop.permute.xlu0 %163
    %vm165 = vcmask 195744
    %166 = vst.msk [vmem:[#allocation0] sm:$0x1] %vm165, %v164
    %s167 = scalar_lea.vmem %s0, 4
    %v168 = vld [vmem:[%s167] sm:$0x1]
    %169 = vrot.lane.b32.xlu0 %v168, 16
    %v170 = vpop.permute.xlu0 %169
    %vm171 = vcmask 162944
    %172 = vst.msk [vmem:[#allocation0] sm:$0x1] %vm171, %v170
    %s173 = scalar_lea.vmem %s0, 3
    %v174 = vld [vmem:[%s173] sm:$0x1]
    %175 = vrot.lane.b32.xlu0 %v174, 12
    %v176 = vpop.permute.xlu0 %175
    %vm177 = vcmask 130144
    %178 = vst.msk [vmem:[#allocation0] sm:$0x1] %vm177, %v176
    %s179 = scalar_lea.vmem %s0, 2
    %v180 = vld [vmem:[%s179] sm:$0x1]
    %181 = vrot.lane.b32.xlu0 %v180, 8
    %v182 = vpop.permute.xlu0 %181
    %vm183 = vcmask 97344
    %184 = vst.msk [vmem:[#allocation0] sm:$0x1] %vm183, %v182
    %s185 = scalar_lea.vmem %s0, 1
    %v186 = vld [vmem:[%s185] sm:$0x1]
    %187 = vrot.lane.b32.xlu0 %v186, 4
    %v188 = vpop.permute.xlu0 %187
    %vm189 = vcmask 64544
    %190 = vst.msk [vmem:[#allocation0] sm:$0x1] %vm189, %v188
    %s192 = sshllo.u32 0, 1
    %v194 = vld [vmem:[#allocation0] sm:%s192]
    %s195 = sshllo.u32 0, 1
    %196 = vst [vmem:[%s1] sm:%s195] %v194

// kernel: ema_forward.1
$region0: #{ema_forward.1}
  #allocation0 [shape = 'u32[]', space=smem, size = 0x4, offset = 0x4, fixed_abs, tag = 'smem constant byte address 0x4 - core index']
  #allocation1 [shape = 'u32[144,128]{1,0:T(1,128)}', space=vmem, size = 0x12000, scoped, tag = 'internal scratch']
  %s0 = inlined_call_operand.vmem [shape: f32[128,256], index: 0, kind: input, shape index: {}]
  %s1 = inlined_call_operand.vmem [shape: f32[256,32], index: 1, kind: input, shape index: {}]
  %s2 = inlined_call_operand.vmem [shape: f32[32,256], index: 2, kind: input, shape index: {}]
  %s3 = inlined_call_operand.vmem [shape: f32[64,64], index: 3, kind: input, shape index: {}]
  %s4 = inlined_call_operand.vmem [shape: f32[9,64,64], index: 4, kind: input, shape index: {}]
  %s5 = inlined_call_operand.vmem [shape: f32[9,256], index: 5, kind: input, shape index: {}]
  %s6 = inlined_call_operand.vmem [shape: f32[64,64], index: 6, kind: input, shape index: {}]
  %s7 = inlined_call_operand.vmem [shape: f32[128,4], index: 7, kind: input, shape index: {}]
  %s8 = inlined_call_operand.vmem [shape: f32[128,256], index: 8, kind: output, shape index: {}]
  %s9 = sld [smem:[#allocation0]]
  $region65: #{ema_forward.1} parent=0
    _
  %s11 = ssub.s32 1, %s9
  %s12 = scalar_select 0, %s11, %s9
  loop: start=0, step=1, limit=4
  $region2: #{ema_forward.1} parent=0 // loop_pre_header
    _
  $region3: #{ema_forward.1} parent=0 // loop_header
    %s14 = sphi 0, %s18
    %p15 = scmp.ge.s32.totalorder %s14, 4
    %s24 = sphi 0, %s26
    %s27 = sphi 0, %s24
    %s28 = sphi 0, %s27
    %s44 = sphi 0, %s28
    %s48 = sphi 0, %s48
    %s50 = sphi 0, %s48
    %s51 = sphi 0, %s50
    %s65 = sphi 0, %s51
    %s69 = sphi 0, %s69
    %s71 = sphi 0, %s69
    %s72 = sphi 0, %s71
    %s86 = sphi 0, %s72
    %s90 = sphi 0, %s90
    %s92 = sphi 0, %s90
    %s93 = sphi 0, %s92
    %s107 = sphi 0, %s93
    %s111 = sphi 0, %s111
    %s113 = sphi 0, %s111
    %s114 = sphi 0, %s113
    %s128 = sphi 0, %s114
    %s132 = sphi 0, %s132
    %s134 = sphi 0, %s132
    %s135 = sphi 0, %s134
    %s149 = sphi 0, %s135
    %s153 = sphi 0, %s153
    %s155 = sphi 0, %s153
    %s156 = sphi 0, %s155
    %s170 = sphi 0, %s156
    %s176 = sphi 0, %s178
    %s179 = sphi 0, %s176
    %s180 = sphi 0, %s179
    %s196 = sphi 0, %s180
    %s202 = sphi 0, %s204
    %s205 = sphi 0, %s202
    %s206 = sphi 0, %s205
    %s222 = sphi 0, %s206
  $region4: #{ema_forward.1} parent=0 // loop_header_branch
    %17 = sbr.rel (%p15) target = $region8
  $region5: #{ema_forward.1} parent=0 // loop_body
    %s19 = ssub.s32 %s14, 1
    %s20 = ssub.s32 %s14, 2
    %s21 = sadd.s32 %s14, 1
    %s22 = ssub.s32 %s14, %s21
    %p23 = scmp.eq.s32.totalorder %s22, 0
    %s25 = sadd.s32 %s24, 1
    %s26 = scalar_select %p23, %s24, %s25
    %p29 = pneg %p23
    %p30 = scmp.eq.s32.totalorder %s14, 1
    %p31 = por %p29, %p30
    %p32 = scmp.ne.s32.totalorder %s24, %s27
    %p33 = scmp.eq.s32.totalorder %s14, 0
    %p34 = por %p32, %p33
    %p35 = scmp.ne.s32.totalorder %s24, %s27
    %p36 = scmp.eq.s32.totalorder %s19, 1
    %p37 = por %p35, %p36
    %p38 = scmp.ne.s32.totalorder %s27, %s28
    %p39 = scmp.eq.s32.totalorder %s19, 0
    %p40 = por %p38, %p39
    %p41 = scmp.ne.s32.totalorder %s27, %s28
    %p42 = scmp.eq.s32.totalorder %s20, 1
    %p43 = por %p41, %p42
    %p45 = scmp.ne.s32.totalorder %s28, %s44
    %p46 = scmp.eq.s32.totalorder %s20, 0
    %p47 = por %p45, %p46
    %s49 = sadd.s32 %s48, 1
    %p52 = scmp.eq.s32.totalorder %s14, 1
    %p53 = scmp.ne.s32.totalorder %s48, %s50
    %p54 = scmp.eq.s32.totalorder %s14, 0
    %p55 = por %p53, %p54
    %p56 = scmp.ne.s32.totalorder %s48, %s50
    %p57 = scmp.eq.s32.totalorder %s19, 1
    %p58 = por %p56, %p57
    %p59 = scmp.ne.s32.totalorder %s50, %s51
    %p60 = scmp.eq.s32.totalorder %s19, 0
    %p61 = por %p59, %p60
    %p62 = scmp.ne.s32.totalorder %s50, %s51
    %p63 = scmp.eq.s32.totalorder %s20, 1
    %p64 = por %p62, %p63
    %p66 = scmp.ne.s32.totalorder %s51, %s65
    %p67 = scmp.eq.s32.totalorder %s20, 0
    %p68 = por %p66, %p67
    %s70 = sadd.s32 %s69, 1
    %p73 = scmp.eq.s32.totalorder %s14, 1
    %p74 = scmp.ne.s32.totalorder %s69, %s71
    %p75 = scmp.eq.s32.totalorder %s14, 0
    %p76 = por %p74, %p75
    %p77 = scmp.ne.s32.totalorder %s69, %s71
    %p78 = scmp.eq.s32.totalorder %s19, 1
    %p79 = por %p77, %p78
    %p80 = scmp.ne.s32.totalorder %s71, %s72
    %p81 = scmp.eq.s32.totalorder %s19, 0
    %p82 = por %p80, %p81
    %p83 = scmp.ne.s32.totalorder %s71, %s72
    %p84 = scmp.eq.s32.totalorder %s20, 1
    %p85 = por %p83, %p84
    %p87 = scmp.ne.s32.totalorder %s72, %s86
    %p88 = scmp.eq.s32.totalorder %s20, 0
    %p89 = por %p87, %p88
    %s91 = sadd.s32 %s90, 1
    %p94 = scmp.eq.s32.totalorder %s14, 1
    %p95 = scmp.ne.s32.totalorder %s90, %s92
    %p96 = scmp.eq.s32.totalorder %s14, 0
    %p97 = por %p95, %p96
    %p98 = scmp.ne.s32.totalorder %s90, %s92
    %p99 = scmp.eq.s32.totalorder %s19, 1
    %p100 = por %p98, %p99
    %p101 = scmp.ne.s32.totalorder %s92, %s93
    %p102 = scmp.eq.s32.totalorder %s19, 0
    %p103 = por %p101, %p102
    %p104 = scmp.ne.s32.totalorder %s92, %s93
    %p105 = scmp.eq.s32.totalorder %s20, 1
    %p106 = por %p104, %p105
    %p108 = scmp.ne.s32.totalorder %s93, %s107
    %p109 = scmp.eq.s32.totalorder %s20, 0
    %p110 = por %p108, %p109
    %s112 = sadd.s32 %s111, 1
    %p115 = scmp.eq.s32.totalorder %s14, 1
    %p116 = scmp.ne.s32.totalorder %s111, %s113
    %p117 = scmp.eq.s32.totalorder %s14, 0
    %p118 = por %p116, %p117
    %p119 = scmp.ne.s32.totalorder %s111, %s113
    %p120 = scmp.eq.s32.totalorder %s19, 1
    %p121 = por %p119, %p120
    %p122 = scmp.ne.s32.totalorder %s113, %s114
    %p123 = scmp.eq.s32.totalorder %s19, 0
    %p124 = por %p122, %p123
    %p125 = scmp.ne.s32.totalorder %s113, %s114
    %p126 = scmp.eq.s32.totalorder %s20, 1
    %p127 = por %p125, %p126
    %p129 = scmp.ne.s32.totalorder %s114, %s128
    %p130 = scmp.eq.s32.totalorder %s20, 0
    %p131 = por %p129, %p130
    %s133 = sadd.s32 %s132, 1
    %p136 = scmp.eq.s32.totalorder %s14, 1
    %p137 = scmp.ne.s32.totalorder %s132, %s134
    %p138 = scmp.eq.s32.totalorder %s14, 0
    %p139 = por %p137, %p138
    %p140 = scmp.ne.s32.totalorder %s132, %s134
    %p141 = scmp.eq.s32.totalorder %s19, 1
    %p142 = por %p140, %p141
    %p143 = scmp.ne.s32.totalorder %s134, %s135
    %p144 = scmp.eq.s32.totalorder %s19, 0
    %p145 = por %p143, %p144
    %p146 = scmp.ne.s32.totalorder %s134, %s135
    %p147 = scmp.eq.s32.totalorder %s20, 1
    %p148 = por %p146, %p147
    %p150 = scmp.ne.s32.totalorder %s135, %s149
    %p151 = scmp.eq.s32.totalorder %s20, 0
    %p152 = por %p150, %p151
    %s154 = sadd.s32 %s153, 1
    %p157 = scmp.eq.s32.totalorder %s14, 1
    %p158 = scmp.ne.s32.totalorder %s153, %s155
    %p159 = scmp.eq.s32.totalorder %s14, 0
    %p160 = por %p158, %p159
    %p161 = scmp.ne.s32.totalorder %s153, %s155
    %p162 = scmp.eq.s32.totalorder %s19, 1
    %p163 = por %p161, %p162
    %p164 = scmp.ne.s32.totalorder %s155, %s156
    %p165 = scmp.eq.s32.totalorder %s19, 0
    %p166 = por %p164, %p165
    %p167 = scmp.ne.s32.totalorder %s155, %s156
    %p168 = scmp.eq.s32.totalorder %s20, 1
    %p169 = por %p167, %p168
    %p171 = scmp.ne.s32.totalorder %s156, %s170
    %p172 = scmp.eq.s32.totalorder %s20, 0
    %p173 = por %p171, %p172
    %s174 = ssub.s32 %s14, %s21
    %p175 = scmp.eq.s32.totalorder %s174, 0
    %s177 = sadd.s32 %s176, 1
    %s178 = scalar_select %p175, %s176, %s177
    %p181 = pneg %p175
    %p182 = scmp.eq.s32.totalorder %s14, 1
    %p183 = por %p181, %p182
    %p184 = scmp.ne.s32.totalorder %s176, %s179
    %p185 = scmp.eq.s32.totalorder %s14, 0
    %p186 = por %p184, %p185
    %p187 = scmp.ne.s32.totalorder %s176, %s179
    %p188 = scmp.eq.s32.totalorder %s19, 1
    %p189 = por %p187, %p188
    %p190 = scmp.ne.s32.totalorder %s179, %s180
    %p191 = scmp.eq.s32.totalorder %s19, 0
    %p192 = por %p190, %p191
    %p193 = scmp.ne.s32.totalorder %s179, %s180
    %p194 = scmp.eq.s32.totalorder %s20, 1
    %p195 = por %p193, %p194
    %p197 = scmp.ne.s32.totalorder %s180, %s196
    %p198 = scmp.eq.s32.totalorder %s20, 0
    %p199 = por %p197, %p198
    %s200 = ssub.s32 %s14, %s21
    %p201 = scmp.eq.s32.totalorder %s200, 0
    %s203 = sadd.s32 %s202, 1
    %s204 = scalar_select %p201, %s202, %s203
    %p207 = pneg %p201
    %p208 = scmp.eq.s32.totalorder %s14, 1
    %p209 = por %p207, %p208
    %p210 = scmp.ne.s32.totalorder %s202, %s205
    %p211 = scmp.eq.s32.totalorder %s14, 0
    %p212 = por %p210, %p211
    %p213 = scmp.ne.s32.totalorder %s202, %s205
    %p214 = scmp.eq.s32.totalorder %s19, 1
    %p215 = por %p213, %p214
    %p216 = scmp.ne.s32.totalorder %s205, %s206
    %p217 = scmp.eq.s32.totalorder %s19, 0
    %p218 = por %p216, %p217
    %p219 = scmp.ne.s32.totalorder %s205, %s206
    %p220 = scmp.eq.s32.totalorder %s20, 1
    %p221 = por %p219, %p220
    %p223 = scmp.ne.s32.totalorder %s206, %s222
    %p224 = scmp.eq.s32.totalorder %s20, 0
    %p225 = por %p223, %p224
    %p226 = scmp.le.s32.totalorder 1, %s14
    %p227 = scmp.lt.s32.totalorder %s14, 3
    %p228 = pnand %p226, %p227
    %p229 = pneg %p228
    // Predicated region
    $region9: #{ema_forward.1} parent=5 // pred_check
      _
    $region10: #{ema_forward.1} parent=5 // pred_check_branch
      %231 = sbr.rel (%p228) target = $region12
    $region11: #{ema_forward.1} parent=5 // pred_region
      %s232 = ssub.s32 %s14, 1
      // Predicated region
      $region13: #{ema_forward.1} parent=11 // pred_check
        %p233 = pneg %p61
      $region14: #{ema_forward.1} parent=11 // pred_check_branch
        %235 = sbr.rel (%p233) target = $region16
      $region15: #{ema_forward.1} parent=11 // pred_region
        _
      $region16: #{ema_forward.1} parent=11 // pred_fallthru
        _
      // Predicated region
      $region17: #{ema_forward.1} parent=11 // pred_check
        %p236 = pneg %p82
      $region18: #{ema_forward.1} parent=11 // pred_check_branch
        %238 = sbr.rel (%p236) target = $region20
      $region19: #{ema_forward.1} parent=11 // pred_region
        _
      $region20: #{ema_forward.1} parent=11 // pred_fallthru
        _
      // Predicated region
      $region21: #{ema_forward.1} parent=11 // pred_check
        %p239 = pneg %p103
      $region22: #{ema_forward.1} parent=11 // pred_check_branch
        %241 = sbr.rel (%p239) target = $region24
      $region23: #{ema_forward.1} parent=11 // pred_region
        _
      $region24: #{ema_forward.1} parent=11 // pred_fallthru
        _
      // Predicated region
      $region25: #{ema_forward.1} parent=11 // pred_check
        %p242 = pneg %p124
      $region26: #{ema_forward.1} parent=11 // pred_check_branch
        %244 = sbr.rel (%p242) target = $region28
      $region27: #{ema_forward.1} parent=11 // pred_region
        _
      $region28: #{ema_forward.1} parent=11 // pred_fallthru
        _
      // Predicated region
      $region29: #{ema_forward.1} parent=11 // pred_check
        %p245 = pneg %p145
      $region30: #{ema_forward.1} parent=11 // pred_check_branch
        %247 = sbr.rel (%p245) target = $region32
      $region31: #{ema_forward.1} parent=11 // pred_region
        _
      $region32: #{ema_forward.1} parent=11 // pred_fallthru
        _
      // Predicated region
      $region33: #{ema_forward.1} parent=11 // pred_check
        %p248 = pneg %p166
      $region34: #{ema_forward.1} parent=11 // pred_check_branch
        %250 = sbr.rel (%p248) target = $region36
      $region35: #{ema_forward.1} parent=11 // pred_region
        _
      $region36: #{ema_forward.1} parent=11 // pred_fallthru
        _
    $region12: #{ema_forward.1} parent=5 // pred_fallthru
      _
    %p251 = scmp.lt.s32.totalorder %s14, 2
    // Predicated region
    $region37: #{ema_forward.1} parent=5 // pred_check
      %p252 = pneg %p251
    $region38: #{ema_forward.1} parent=5 // pred_check_branch
      %254 = sbr.rel (%p252) target = $region40
    $region39: #{ema_forward.1} parent=5 // pred_region
      // Predicated region
      $region41: #{ema_forward.1} parent=39 // pred_check
        %p255 = pneg %p34
      $region42: #{ema_forward.1} parent=39 // pred_check_branch
        %257 = sbr.rel (%p255) target = $region44
      $region43: #{ema_forward.1} parent=39 // pred_region
        %s258 = smul.u32 8, %s14
        %p259 = scmp.lt.s32.totalorder %s258, 15
        %s260 = scalar_select %p259, %s258, 15
        %s261 = smul.addr %s260, 2
        %s262 = smul.addr %s261, 8
        %s263 = scalar_lea.vmem %s0, %s262
        %s264 = smul.u32 8, %s14
      $region44: #{ema_forward.1} parent=39 // pred_fallthru
        _
      // Predicated region
      $region45: #{ema_forward.1} parent=39 // pred_check
        %p265 = pneg %p186
      $region46: #{ema_forward.1} parent=39 // pred_check_branch
        %267 = sbr.rel (%p265) target = $region48
      $region47: #{ema_forward.1} parent=39 // pred_region
        %s268 = smul.u32 8, %s14
        %p269 = scmp.lt.s32.totalorder %s268, 15
        %s270 = scalar_select %p269, %s268, 15
        %s271 = smul.addr %s270, 8
        %s272 = scalar_lea.vmem %s7, %s271
        %s273 = smul.u32 8, %s14
      $region48: #{ema_forward.1} parent=39 // pred_fallthru
        _
    $region40: #{ema_forward.1} parent=5 // pred_fallthru
      _
    %p274 = scmp.le.s32.totalorder 1, %s14
    %p275 = scmp.lt.s32.totalorder %s14, 3
    %p276 = pnand %p274, %p275
    %p277 = pneg %p276
    // Predicated region
    $region49: #{ema_forward.1} parent=5 // pred_check
      _
    $region50: #{ema_forward.1} parent=5 // pred_check_branch
      %279 = sbr.rel (%p276) target = $region52
    $region51: #{ema_forward.1} parent=5 // pred_region
      %s280 = ssub.s32 %s14, 1
      %s281 = smul.u32 8, %s19
      %p282 = scmp.lt.s32.totalorder %s281, 15
      %s283 = scalar_select %p282, %s281, 15
      %s284 = smul.addr %s283, 2
      %s285 = smul.addr %s284, 8
      %s286 = scalar_lea.vmem %s0, %s285
      %p287 = pneg %p40
      %p288 = pneg %p37
      %p289 = pneg %p61
      %p290 = pneg %p58
      %p291 = pneg %p82
      %p292 = pneg %p79
      %p293 = pneg %p103
      %p294 = pneg %p100
      %p295 = pneg %p124
      %p296 = pneg %p121
      %p297 = pneg %p145
      %p298 = pneg %p142
      %p299 = pneg %p166
      %p300 = pneg %p163
      %s301 = smul.u32 8, %s19
      %p302 = scmp.lt.s32.totalorder %s301, 15
      %s303 = scalar_select %p302, %s301, 15
      %s304 = smul.addr %s303, 8
      %s305 = scalar_lea.vmem %s7, %s304
      %p306 = pneg %p192
      %p307 = pneg %p189
      %p308 = pneg %p218
      %p309 = pneg %p215
      %s310 = smul.u32 8, %s19
      %p311 = scmp.lt.s32.totalorder %s310, 15
      %s312 = scalar_select %p311, %s310, 15
      %s313 = smul.addr %s312, 2
      %s314 = smul.addr %s313, 8
      %s315 = scalar_lea.vmem %s8, %s314
      %s316 = smul.u32 8, %s19
      %p317 = scmp.lt.s32.totalorder %s316, 15
      %s318 = scalar_select %p317, %s316, 15
      %s319 = smul.addr %s318, 2
      %s320 = smul.addr %s319, 8
      %s321 = scalar_lea.vmem %s0, %s320
      %s322 = smul.u32 8, %s19
      %s323 = smul.u32 8, %s19
      %p324 = scmp.lt.s32.totalorder %s323, 15
      %s325 = scalar_select %p324, %s323, 15
      %s326 = smul.addr %s325, 8
      %s327 = scalar_lea.vmem %s7, %s326
      %s328 = smul.u32 8, %s19
      %s329 = smul.u32 8, %s19
      %p330 = scmp.lt.s32.totalorder %s329, 15
      %s331 = scalar_select %p330, %s329, 15
      %s332 = smul.addr %s331, 2
      %s333 = smul.addr %s332, 8
      %s334 = scalar_lea.vmem %s8, %s333
      %s335 = smul.u32 8, %s19
      %v336 = vld [vmem:[%s321] sm:$0xff]
      %v337 = vld [vmem:[%s321 + $0x8] sm:$0xff]
      %v338 = vld [vmem:[%s321 + $0x10] sm:$0xff]
      %v339 = vld [vmem:[%s321 + $0x18] sm:$0xff]
      %v340 = vld [vmem:[%s321 + $0x20] sm:$0xff]
      %v341 = vld [vmem:[%s321 + $0x28] sm:$0xff]
      %v342 = vld [vmem:[%s321 + $0x30] sm:$0xff]
      %v343 = vld [vmem:[%s321 + $0x38] sm:$0xff]
      %v344 = vld [vmem:[%s321 + $0x40] sm:$0xff]
      %v345 = vld [vmem:[%s321 + $0x48] sm:$0xff]
      %v346 = vld [vmem:[%s321 + $0x50] sm:$0xff]
      %v347 = vld [vmem:[%s321 + $0x58] sm:$0xff]
      %v348 = vld [vmem:[%s321 + $0x60] sm:$0xff]
      %v349 = vld [vmem:[%s321 + $0x68] sm:$0xff]
      %v350 = vld [vmem:[%s321 + $0x70] sm:$0xff]
      %v351 = vld [vmem:[%s321 + $0x78] sm:$0xff]
      %v352 = vld [vmem:[%s327] sm:$0xff]
      %v353 = vld [vmem:[%s327 + $0x8] sm:$0xff]
      %v354 = vld [vmem:[%s327 + $0x10] sm:$0xff]
      %v355 = vld [vmem:[%s327 + $0x18] sm:$0xff]
      %v356 = vld [vmem:[%s327 + $0x20] sm:$0xff]
      %v357 = vld [vmem:[%s327 + $0x28] sm:$0xff]
      %v358 = vld [vmem:[%s327 + $0x30] sm:$0xff]
      %v359 = vld [vmem:[%s327 + $0x38] sm:$0xff]
      %v360 = vld [vmem:[%s1] sm:$0xff]
      %v361 = vld [vmem:[%s1 + $0x8] sm:$0xff]
      %v362 = vld [vmem:[%s1 + $0x10] sm:$0xff]
      %v363 = vld [vmem:[%s1 + $0x18] sm:$0xff]
      %v364 = vld [vmem:[%s1 + $0x20] sm:$0xff]
      %v365 = vld [vmem:[%s1 + $0x28] sm:$0xff]
      %v366 = vld [vmem:[%s1 + $0x30] sm:$0xff]
      %v367 = vld [vmem:[%s1 + $0x38] sm:$0xff]
      %v368 = vld [vmem:[%s1 + $0x40] sm:$0xff]
      %v369 = vld [vmem:[%s1 + $0x48] sm:$0xff]
      %v370 = vld [vmem:[%s1 + $0x50] sm:$0xff]
      %v371 = vld [vmem:[%s1 + $0x58] sm:$0xff]
      %v372 = vld [vmem:[%s1 + $0x60] sm:$0xff]
      %v373 = vld [vmem:[%s1 + $0x68] sm:$0xff]
      %v374 = vld [vmem:[%s1 + $0x70] sm:$0xff]
      %v375 = vld [vmem:[%s1 + $0x78] sm:$0xff]
      %v376 = vld [vmem:[%s1 + $0x80] sm:$0xff]
      %v377 = vld [vmem:[%s1 + $0x88] sm:$0xff]
      %v378 = vld [vmem:[%s1 + $0x90] sm:$0xff]
      %v379 = vld [vmem:[%s1 + $0x98] sm:$0xff]
      %v380 = vld [vmem:[%s1 + $0xa0] sm:$0xff]
      %v381 = vld [vmem:[%s1 + $0xa8] sm:$0xff]
      %v382 = vld [vmem:[%s1 + $0xb0] sm:$0xff]
      %v383 = vld [vmem:[%s1 + $0xb8] sm:$0xff]
      %v384 = vld [vmem:[%s1 + $0xc0] sm:$0xff]
      %v385 = vld [vmem:[%s1 + $0xc8] sm:$0xff]
      %v386 = vld [vmem:[%s1 + $0xd0] sm:$0xff]
      %v387 = vld [vmem:[%s1 + $0xd8] sm:$0xff]
      %v388 = vld [vmem:[%s1 + $0xe0] sm:$0xff]
      %v389 = vld [vmem:[%s1 + $0xe8] sm:$0xff]
      %v390 = vld [vmem:[%s1 + $0xf0] sm:$0xff]
      %v391 = vld [vmem:[%s1 + $0xf8] sm:$0xff]
      %392 = vmatprep.subr.mxu0 0.0
      %393 = vmatpush1.msra.mxu0 %v360
      %394 = vmatprep.subr.mxu0 0.0
      %395 = vmatpush1.msra.mxu0 %v361
      %396 = vmatprep.subr.mxu0 0.0
      %397 = vmatpush1.msra.mxu0 %v362
      %398 = vmatprep.subr.mxu0 0.0
      %399 = vmatpush1.msra.mxu0 %v363
      %400 = vmatprep.subr.mxu0 0.0
      %401 = vmatpush1.msra.mxu0 %v364
      %402 = vmatprep.subr.mxu0 0.0
      %403 = vmatpush1.msra.mxu0 %v365
      %404 = vmatprep.subr.mxu0 0.0
      %405 = vmatpush1.msra.mxu0 %v366
      %406 = vmatprep.subr.mxu0 0.0
      %407 = vmatpush1.msra.mxu0 %v367
      %408 = vmatprep.subr.mxu0 0.0
      %409 = vmatpush1.msra.mxu0 %v368
      %410 = vmatprep.subr.mxu0 0.0
      %411 = vmatpush1.msra.mxu0 %v369
      %412 = vmatprep.subr.mxu0 0.0
      %413 = vmatpush1.msra.mxu0 %v370
      %414 = vmatprep.subr.mxu0 0.0
      %415 = vmatpush1.msra.mxu0 %v371
      %416 = vmatprep.subr.mxu0 0.0
      %417 = vmatpush1.msra.mxu0 %v372
      %418 = vmatprep.subr.mxu0 0.0
      %419 = vmatpush1.msra.mxu0 %v373
      %420 = vmatprep.subr.mxu0 0.0
      %421 = vmatpush1.msra.mxu0 %v374
      %422 = vmatprep.subr.mxu0 0.0
      %423 = vmatpush1.msra.mxu0 %v375
      %424 = vmatprep.subr.mxu0 0.0
      %425 = vmatpush1.msra.mxu0 %v376
      %426 = vmatprep.subr.mxu0 0.0
      %427 = vmatpush1.msra.mxu0 %v377
      %428 = vmatprep.subr.mxu0 0.0
      %429 = vmatpush1.msra.mxu0 %v378
      %430 = vmatprep.subr.mxu0 0.0
      %431 = vmatpush1.msra.mxu0 %v379
      %432 = vmatprep.subr.mxu0 0.0
      %433 = vmatpush1.msra.mxu0 %v380
      %434 = vmatprep.subr.mxu0 0.0
      %435 = vmatpush1.msra.mxu0 %v381
      %436 = vmatprep.subr.mxu0 0.0
      %437 = vmatpush1.msra.mxu0 %v382
      %438 = vmatprep.subr.mxu0 0.0
      %439 = vmatpush1.msra.mxu0 %v383
      %440 = vmatprep.subr.mxu0 0.0
      %441 = vmatpush1.msra.mxu0 %v384
      %442 = vmatprep.subr.mxu0 0.0
      %443 = vmatpush1.msra.mxu0 %v385
      %444 = vmatprep.subr.mxu0 0.0
      %445 = vmatpush1.msra.mxu0 %v386
      %446 = vmatprep.subr.mxu0 0.0
      %447 = vmatpush1.msra.mxu0 %v387
      %448 = vmatprep.subr.mxu0 0.0
      %449 = vmatpush1.msra.mxu0 %v388
      %450 = vmatprep.subr.mxu0 0.0
      %451 = vmatpush1.msra.mxu0 %v389
      %452 = vmatprep.subr.mxu0 0.0
      %453 = vmatpush1.msra.mxu0 %v390
      %454 = vmatprep.subr.mxu0 0.0
      %455 = vmatpush1.msra.mxu0 %v391
      %456 = vmatprep.mubr.f32.mxu0 %v337
      %457 = vmatmul.mubr.f32.gmra.mrb[0].mxu0 %v336
      %v458 = vpop.f32.mrb[0].mxu0
      %v459 = vadd.f32 0.0, %v458
      %v460 = vpop.f32.mrb[0].mxu0
      %461 = vmatprep.mubr.f32.mxu0 %v339
      %462 = vmatmul.mubr.f32.gmra.mrb[0].mxu0 %v338
      %v463 = vpop.f32.mrb[0].mxu0
      %v464 = vadd.f32 0.0, %v463
      %v465 = vpop.f32.mrb[0].mxu0
      %466 = vmatprep.mubr.f32.mxu0 %v341
      %467 = vmatmul.mubr.f32.gmra.mrb[0].mxu0 %v340
      %v468 = vpop.f32.mrb[0].mxu0
      %v469 = vadd.f32 0.0, %v468
      %v470 = vpop.f32.mrb[0].mxu0
      %471 = vmatprep.mubr.f32.mxu0 %v343
      %472 = vmatmul.mubr.f32.gmra.mrb[0].mxu0 %v342
      %v473 = vpop.f32.mrb[0].mxu0
      %v474 = vadd.f32 0.0, %v473
      %v475 = vpop.f32.mrb[0].mxu0
      %476 = vmatprep.mubr.f32.mxu0 %v345
      %477 = vmatmul.mubr.f32.gmra.mrb[0].mxu0 %v344
      %v478 = vpop.f32.mrb[0].mxu0
      %v479 = vadd.f32 0.0, %v478
      %v480 = vpop.f32.mrb[0].mxu0
      %481 = vmatprep.mubr.f32.mxu0 %v347
      %482 = vmatmul.mubr.f32.gmra.mrb[0].mxu0 %v346
      %v483 = vpop.f32.mrb[0].mxu0
      %v484 = vadd.f32 0.0, %v483
      %v485 = vpop.f32.mrb[0].mxu0
      %486 = vmatprep.mubr.f32.mxu0 %v349
      %487 = vmatmul.mubr.f32.gmra.mrb[0].mxu0 %v348
      %v488 = vpop.f32.mrb[0].mxu0
      %v489 = vadd.f32 0.0, %v488
      %v490 = vpop.f32.mrb[0].mxu0
      %491 = vmatprep.mubr.f32.mxu0 %v351
      %492 = vmatmul.mubr.f32.gmra.mrb[0].mxu0 %v350
      %v493 = vpop.f32.mrb[0].mxu0
      %v494 = vadd.f32 0.0, %v493
      %v495 = vpop.f32.mrb[0].mxu0
      %496 = vdwg.mxu0
      %v497 = vld [vmem:[%s3] sm:$0xff]
      %v498 = vld [vmem:[%s3 + $0x8] sm:$0xff]
      %v499 = vld [vmem:[%s3 + $0x10] sm:$0xff]
      %v500 = vld [vmem:[%s3 + $0x18] sm:$0xff]
      %v501 = vld [vmem:[%s3 + $0x20] sm:$0xff]
      %v502 = vld [vmem:[%s3 + $0x28] sm:$0xff]
      %v503 = vld [vmem:[%s3 + $0x30] sm:$0xff]
      %v504 = vld [vmem:[%s3 + $0x38] sm:$0xff]
      %506 = vset.pattern.permute.xlu0 0
      %507 = vperm.xlu0 %506, %v352
      %v508 = vpop.permute.xlu0 %507
      %511 = vset.pattern.permute.xlu0 0
      %512 = vperm.xlu0 %511, %v353
      %v513 = vpop.permute.xlu0 %512
      %516 = vset.pattern.permute.xlu0 0
      %517 = vperm.xlu0 %516, %v354
      %v518 = vpop.permute.xlu0 %517
      %521 = vset.pattern.permute.xlu0 0
      %522 = vperm.xlu0 %521, %v355
      %v523 = vpop.permute.xlu0 %522
      %526 = vset.pattern.permute.xlu0 0
      %527 = vperm.xlu0 %526, %v356
      %v528 = vpop.permute.xlu0 %527
      %531 = vset.pattern.permute.xlu0 0
      %532 = vperm.xlu0 %531, %v357
      %v533 = vpop.permute.xlu0 %532
      %536 = vset.pattern.permute.xlu0 0
      %537 = vperm.xlu0 %536, %v358
      %v538 = vpop.permute.xlu0 %537
      %541 = vset.pattern.permute.xlu0 0
      %542 = vperm.xlu0 %541, %v359
      %v543 = vpop.permute.xlu0 %542
      %vm545 = vcmask 523264
      %v547 = vsel %vm545, %v497, 0
      %v550 = vsel %vm545, %v498, 0
      %v553 = vsel %vm545, %v499, 0
      %v556 = vsel %vm545, %v500, 0
      %v559 = vsel %vm545, %v501, 0
      %v562 = vsel %vm545, %v502, 0
      %v565 = vsel %vm545, %v503, 0
      %v568 = vsel %vm545, %v504, 0
      %570 = vmatprep.subr.mxu0 0.0
      %571 = vmatpush1.msra.mxu0 %v459
      %572 = vmatprep.subr.mxu0 0.0
      %573 = vmatpush1.msra.mxu0 %v464
      %574 = vmatprep.subr.mxu0 0.0
      %575 = vmatpush1.msra.mxu0 %v469
      %576 = vmatprep.subr.mxu0 0.0
      %577 = vmatpush1.msra.mxu0 %v474
      %578 = vmatprep.subr.mxu0 0.0
      %579 = vmatpush1.msra.mxu0 %v479
      %580 = vmatprep.subr.mxu0 0.0
      %581 = vmatpush1.msra.mxu0 %v484
      %582 = vmatprep.subr.mxu0 0.0
      %583 = vmatpush1.msra.mxu0 %v489
      %584 = vmatprep.subr.mxu0 0.0
      %585 = vmatpush1.msra.mxu0 %v494
      %586 = vmatprep.subr.mxu0 0.0
      %587 = vmatpush1.msra.mxu0 0.0
      %588 = vmatprep.subr.mxu0 0.0
      %589 = vmatpush1.msra.mxu0 0.0
      %590 = vmatprep.subr.mxu0 0.0
      %591 = vmatpush1.msra.mxu0 0.0
      %592 = vmatprep.subr.mxu0 0.0
      %593 = vmatpush1.msra.mxu0 0.0
      %594 = vmatprep.subr.mxu0 0.0
      %595 = vmatpush1.msra.mxu0 0.0
      %596 = vmatprep.subr.mxu0 0.0
      %597 = vmatpush1.msra.mxu0 0.0
      %598 = vmatprep.subr.mxu0 0.0
      %599 = vmatpush1.msra.mxu0 0.0
      %600 = vmatprep.subr.mxu0 0.0
      %601 = vmatpush1.msra.mxu0 0.0
      %602 = vmatprep.subr.mxu0 0.0
      %603 = vmatpush1.msra.mxu0 0.0
      %604 = vmatprep.subr.mxu0 0.0
      %605 = vmatpush1.msra.mxu0 0.0
      %606 = vmatprep.subr.mxu0 0.0
      %607 = vmatpush1.msra.mxu0 0.0
      %608 = vmatprep.subr.mxu0 0.0
      %609 = vmatpush1.msra.mxu0 0.0
      %610 = vmatprep.subr.mxu0 0.0
      %611 = vmatpush1.msra.mxu0 0.0
      %612 = vmatprep.subr.mxu0 0.0
      %613 = vmatpush1.msra.mxu0 0.0
      %614 = vmatprep.subr.mxu0 0.0
      %615 = vmatpush1.msra.mxu0 0.0
      %616 = vmatprep.subr.mxu0 0.0
      %617 = vmatpush1.msra.mxu0 0.0
      %618 = vmatprep.subr.mxu0 0.0
      %619 = vmatpush1.msra.mxu0 0.0
      %620 = vmatprep.subr.mxu0 0.0
      %621 = vmatpush1.msra.mxu0 0.0
      %622 = vmatprep.subr.mxu0 0.0
      %623 = vmatpush1.msra.mxu0 0.0
      %624 = vmatprep.subr.mxu0 0.0
      %625 = vmatpush1.msra.mxu0 0.0
      %626 = vmatprep.subr.mxu0 0.0
      %627 = vmatpush1.msra.mxu0 0.0
      %628 = vmatprep.subr.mxu0 0.0
      %629 = vmatpush1.msra.mxu0 0.0
      %630 = vmatprep.subr.mxu0 0.0
      %631 = vmatpush1.msra.mxu0 0.0
      %632 = vmatprep.subr.mxu0 0.0
      %633 = vmatpush1.msra.mxu0 0.0
      %634 = vmatprep.mubr.f32.mxu0 0.0
      %635 = vmatmul.mubr.f32.gmra.mrb[0].mxu0 %v547
      %v636 = vpop.f32.mrb[0].mxu0
      %v637 = vadd.f32 %v508, %v636
      %v638 = vpop.f32.mrb[0].mxu0
      %639 = vmatprep.mubr.f32.mxu0 0.0
      %640 = vmatmul.mubr.f32.gmra.mrb[0].mxu0 %v550
      %v641 = vpop.f32.mrb[0].mxu0
      %v642 = vadd.f32 %v513, %v641
      %v643 = vpop.f32.mrb[0].mxu0
      %644 = vmatprep.mubr.f32.mxu0 0.0
      %645 = vmatmul.mubr.f32.gmra.mrb[0].mxu0 %v553
      %v646 = vpop.f32.mrb[0].mxu0
      %v647 = vadd.f32 %v518, %v646
      %v648 = vpop.f32.mrb[0].mxu0
      %649 = vmatprep.mubr.f32.mxu0 0.0
      %650 = vmatmul.mubr.f32.gmra.mrb[0].mxu0 %v556
      %v651 = vpop.f32.mrb[0].mxu0
      %v652 = vadd.f32 %v523, %v651
      %v653 = vpop.f32.mrb[0].mxu0
      %654 = vmatprep.mubr.f32.mxu0 0.0
      %655 = vmatmul.mubr.f32.gmra.mrb[0].mxu0 %v559
      %v656 = vpop.f32.mrb[0].mxu0
      %v657 = vadd.f32 %v528, %v656
      %v658 = vpop.f32.mrb[0].mxu0
      %659 = vmatprep.mubr.f32.mxu0 0.0
      %660 = vmatmul.mubr.f32.gmra.mrb[0].mxu0 %v562
      %v661 = vpop.f32.mrb[0].mxu0
      %v662 = vadd.f32 %v533, %v661
      %v663 = vpop.f32.mrb[0].mxu0
      %664 = vmatprep.mubr.f32.mxu0 0.0
      %665 = vmatmul.mubr.f32.gmra.mrb[0].mxu0 %v565
      %v666 = vpop.f32.mrb[0].mxu0
      %v667 = vadd.f32 %v538, %v666
      %v668 = vpop.f32.mrb[0].mxu0
      %669 = vmatprep.mubr.f32.mxu0 0.0
      %670 = vmatmul.mubr.f32.gmra.mrb[0].mxu0 %v568
      %v671 = vpop.f32.mrb[0].mxu0
      %v672 = vadd.f32 %v543, %v671
      %v673 = vpop.f32.mrb[0].mxu0
      %674 = vdwg.mxu0
      %v675 = vxor.u32 %v637, 2147483648
      %v676 = vxor.u32 %v642, 2147483648
      %v677 = vxor.u32 %v647, 2147483648
      %v678 = vxor.u32 %v652, 2147483648
      %v679 = vxor.u32 %v657, 2147483648
      %v680 = vxor.u32 %v662, 2147483648
      %v681 = vxor.u32 %v667, 2147483648
      %v682 = vxor.u32 %v672, 2147483648
      %v683 = vmul.f32 %v675, 1.442695
      %v684 = vpow.pop %v683
      %v685 = vmul.f32 %v676, 1.442695
      %v686 = vpow.pop %v685
      %v687 = vmul.f32 %v677, 1.442695
      %v688 = vpow.pop %v687
      %v689 = vmul.f32 %v678, 1.442695
      %v690 = vpow.pop %v689
      %v691 = vmul.f32 %v679, 1.442695
      %v692 = vpow.pop %v691
      %v693 = vmul.f32 %v680, 1.442695
      %v694 = vpow.pop %v693
      %v695 = vmul.f32 %v681, 1.442695
      %v696 = vpow.pop %v695
      %v697 = vmul.f32 %v682, 1.442695
      %v698 = vpow.pop %v697
      %v699 = vadd.f32 %v684, 1.0
      %v700 = vadd.f32 %v686, 1.0
      %v701 = vadd.f32 %v688, 1.0
      %v702 = vadd.f32 %v690, 1.0
      %v703 = vadd.f32 %v692, 1.0
      %v704 = vadd.f32 %v694, 1.0
      %v705 = vadd.f32 %v696, 1.0
      %v706 = vadd.f32 %v698, 1.0
      %v707 = vrcp.pop %v699
      %v708 = vmul.f32 1.0, %v707
      %v709 = vrcp.pop %v700
      %v710 = vmul.f32 1.0, %v709
      %v711 = vrcp.pop %v701
      %v712 = vmul.f32 1.0, %v711
      %v713 = vrcp.pop %v702
      %v714 = vmul.f32 1.0, %v713
      %v715 = vrcp.pop %v703
      %v716 = vmul.f32 1.0, %v715
      %v717 = vrcp.pop %v704
      %v718 = vmul.f32 1.0, %v717
      %v719 = vrcp.pop %v705
      %v720 = vmul.f32 1.0, %v719
      %v721 = vrcp.pop %v706
      %v722 = vmul.f32 1.0, %v721
      %v723 = vld [vmem:[%s2] sm:$0xff]
      %v724 = vld [vmem:[%s2 + $0x8] sm:$0xff]
      %v725 = vld [vmem:[%s2 + $0x10] sm:$0xff]
      %v726 = vld [vmem:[%s2 + $0x18] sm:$0xff]
      %v727 = vld [vmem:[%s2 + $0x20] sm:$0xff]
      %v728 = vld [vmem:[%s2 + $0x28] sm:$0xff]
      %v729 = vld [vmem:[%s2 + $0x30] sm:$0xff]
      %v730 = vld [vmem:[%s2 + $0x38] sm:$0xff]
      %vm731 = vcmask 130048
      %v733 = vsel %vm731, %v708, 0
      %v736 = vsel %vm731, %v710, 0
      %v739 = vsel %vm731, %v712, 0
      %v742 = vsel %vm731, %v714, 0
      %v745 = vsel %vm731, %v716, 0
      %v748 = vsel %vm731, %v718, 0
      %v751 = vsel %vm731, %v720, 0
      %v754 = vsel %vm731, %v722, 0
      %756 = vmatprep.subr.mxu0 %v724
      %757 = vmatpush1.msra.mxu0 %v723
      %758 = vmatprep.subr.mxu0 %v726
      %759 = vmatpush1.msra.mxu0 %v725
      %760 = vmatprep.subr.mxu0 0.0
      %761 = vmatpush1.msra.mxu0 0.0
      %762 = vmatprep.subr.mxu0 0.0
      %763 = vmatpush1.msra.mxu0 0.0
      %764 = vmatprep.subr.mxu0 0.0
      %765 = vmatpush1.msra.mxu0 0.0
      %766 = vmatprep.subr.mxu0 0.0
      %767 = vmatpush1.msra.mxu0 0.0
      %768 = vmatprep.subr.mxu0 0.0
      %769 = vmatpush1.msra.mxu0 0.0
      %770 = vmatprep.subr.mxu0 0.0
      %771 = vmatpush1.msra.mxu0 0.0
      %772 = vmatprep.subr.mxu0 0.0
      %773 = vmatpush1.msra.mxu0 0.0
      %774 = vmatprep.subr.mxu0 0.0
      %775 = vmatpush1.msra.mxu0 0.0
      %776 = vmatprep.subr.mxu0 0.0
      %777 = vmatpush1.msra.mxu0 0.0
      %778 = vmatprep.subr.mxu0 0.0
      %779 = vmatpush1.msra.mxu0 0.0
      %780 = vmatprep.subr.mxu0 0.0
      %781 = vmatpush1.msra.mxu0 0.0
      %782 = vmatprep.subr.mxu0 0.0
      %783 = vmatpush1.msra.mxu0 0.0
      %784 = vmatprep.subr.mxu0 0.0
      %785 = vmatpush1.msra.mxu0 0.0
      %786 = vmatprep.subr.mxu0 0.0
      %787 = vmatpush1.msra.mxu0 0.0
      %788 = vmatprep.subr.mxu0 0.0
      %789 = vmatpush1.msra.mxu0 0.0
      %790 = vmatprep.subr.mxu0 0.0
      %791 = vmatpush1.msra.mxu0 0.0
      %792 = vmatprep.subr.mxu0 0.0
      %793 = vmatpush1.msra.mxu0 0.0
      %794 = vmatprep.subr.mxu0 0.0
      %795 = vmatpush1.msra.mxu0 0.0
      %796 = vmatprep.subr.mxu0 0.0
      %797 = vmatpush1.msra.mxu0 0.0
      %798 = vmatprep.subr.mxu0 0.0
      %799 = vmatpush1.msra.mxu0 0.0
      %800 = vmatprep.subr.mxu0 0.0
      %801 = vmatpush1.msra.mxu0 0.0
      %802 = vmatprep.subr.mxu0 0.0
      %803 = vmatpush1.msra.mxu0 0.0
      %804 = vmatprep.subr.mxu0 0.0
      %805 = vmatpush1.msra.mxu0 0.0
      %806 = vmatprep.subr.mxu0 0.0
      %807 = vmatpush1.msra.mxu0 0.0
      %808 = vmatprep.subr.mxu0 0.0
      %809 = vmatpush1.msra.mxu0 0.0
      %810 = vmatprep.subr.mxu0 0.0
      %811 = vmatpush1.msra.mxu0 0.0
      %812 = vmatprep.subr.mxu0 0.0
      %813 = vmatpush1.msra.mxu0 0.0
      %814 = vmatprep.subr.mxu0 0.0
      %815 = vmatpush1.msra.mxu0 0.0
      %816 = vmatprep.subr.mxu0 0.0
      %817 = vmatpush1.msra.mxu0 0.0
      %818 = vmatprep.subr.mxu0 0.0
      %819 = vmatpush1.msra.mxu0 0.0
      %820 = vmatprep.mubr.f32.mxu0 0.0
      %821 = vmatmul.mubr.f32.gmra.mrb[0].mxu0 %v733
      %v822 = vpop.f32.mrb[0].mxu0
      %v823 = vadd.f32 0.0, %v822
      %v824 = vpop.f32.mrb[0].mxu0
      %v825 = vadd.f32 0.0, %v824
      %826 = vmatprep.mubr.f32.mxu0 0.0
      %827 = vmatmul.mubr.f32.gmra.mrb[0].mxu0 %v736
      %v828 = vpop.f32.mrb[0].mxu0
      %v829 = vadd.f32 0.0, %v828
      %v830 = vpop.f32.mrb[0].mxu0
      %v831 = vadd.f32 0.0, %v830
      %832 = vmatprep.mubr.f32.mxu0 0.0
      %833 = vmatmul.mubr.f32.gmra.mrb[0].mxu0 %v739
      %v834 = vpop.f32.mrb[0].mxu0
      %v835 = vadd.f32 0.0, %v834
      %v836 = vpop.f32.mrb[0].mxu0
      %v837 = vadd.f32 0.0, %v836
      %838 = vmatprep.mubr.f32.mxu0 0.0
      %839 = vmatmul.mubr.f32.gmra.mrb[0].mxu0 %v742
      %v840 = vpop.f32.mrb[0].mxu0
      %v841 = vadd.f32 0.0, %v840
      %v842 = vpop.f32.mrb[0].mxu0
      %v843 = vadd.f32 0.0, %v842
      %844 = vmatprep.mubr.f32.mxu0 0.0
      %845 = vmatmul.mubr.f32.gmra.mrb[0].mxu0 %v745
      %v846 = vpop.f32.mrb[0].mxu0
      %v847 = vadd.f32 0.0, %v846
      %v848 = vpop.f32.mrb[0].mxu0
      %v849 = vadd.f32 0.0, %v848
      %850 = vmatprep.mubr.f32.mxu0 0.0
      %851 = vmatmul.mubr.f32.gmra.mrb[0].mxu0 %v748
      %v852 = vpop.f32.mrb[0].mxu0
      %v853 = vadd.f32 0.0, %v852
      %v854 = vpop.f32.mrb[0].mxu0
      %v855 = vadd.f32 0.0, %v854
      %856 = vmatprep.mubr.f32.mxu0 0.0
      %857 = vmatmul.mubr.f32.gmra.mrb[0].mxu0 %v751
      %v858 = vpop.f32.mrb[0].mxu0
      %v859 = vadd.f32 0.0, %v858
      %v860 = vpop.f32.mrb[0].mxu0
      %v861 = vadd.f32 0.0, %v860
      %862 = vmatprep.mubr.f32.mxu0 0.0
      %863 = vmatmul.mubr.f32.gmra.mrb[0].mxu0 %v754
      %v864 = vpop.f32.mrb[0].mxu0
      %v865 = vadd.f32 0.0, %v864
      %v866 = vpop.f32.mrb[0].mxu0
      %v867 = vadd.f32 0.0, %v866
      %868 = vdwg.mxu0
      %869 = vrot.lane.b32.xlu0 %v708, 112
      %v870 = vpop.permute.xlu0 %869
      %871 = vrot.lane.b32.xlu0 %v710, 112
      %v872 = vpop.permute.xlu0 %871
      %873 = vrot.lane.b32.xlu0 %v712, 112
      %v874 = vpop.permute.xlu0 %873
      %875 = vrot.lane.b32.xlu0 %v714, 112
      %v876 = vpop.permute.xlu0 %875
      %877 = vrot.lane.b32.xlu0 %v716, 112
      %v878 = vpop.permute.xlu0 %877
      %879 = vrot.lane.b32.xlu0 %v718, 112
      %v880 = vpop.permute.xlu0 %879
      %881 = vrot.lane.b32.xlu0 %v720, 112
      %v882 = vpop.permute.xlu0 %881
      %883 = vrot.lane.b32.xlu0 %v722, 112
      %v884 = vpop.permute.xlu0 %883
      %v885 = vsel %vm731, %v870, 0
      %v887 = vsel %vm731, %v872, 0
      %v889 = vsel %vm731, %v874, 0
      %v891 = vsel %vm731, %v876, 0
      %v893 = vsel %vm731, %v878, 0
      %v895 = vsel %vm731, %v880, 0
      %v897 = vsel %vm731, %v882, 0
      %v899 = vsel %vm731, %v884, 0
      %901 = vmatprep.subr.mxu0 %v728
      %902 = vmatpush1.msra.mxu0 %v727
      %903 = vmatprep.subr.mxu0 %v730
      %904 = vmatpush1.msra.mxu0 %v729
      %905 = vmatprep.subr.mxu0 0.0
      %906 = vmatpush1.msra.mxu0 0.0
      %907 = vmatprep.subr.mxu0 0.0
      %908 = vmatpush1.msra.mxu0 0.0
      %909 = vmatprep.subr.mxu0 0.0
      %910 = vmatpush1.msra.mxu0 0.0
      %911 = vmatprep.subr.mxu0 0.0
      %912 = vmatpush1.msra.mxu0 0.0
      %913 = vmatprep.subr.mxu0 0.0
      %914 = vmatpush1.msra.mxu0 0.0
      %915 = vmatprep.subr.mxu0 0.0
      %916 = vmatpush1.msra.mxu0 0.0
      %917 = vmatprep.subr.mxu0 0.0
      %918 = vmatpush1.msra.mxu0 0.0
      %919 = vmatprep.subr.mxu0 0.0
      %920 = vmatpush1.msra.mxu0 0.0
      %921 = vmatprep.subr.mxu0 0.0
      %922 = vmatpush1.msra.mxu0 0.0
      %923 = vmatprep.subr.mxu0 0.0
      %924 = vmatpush1.msra.mxu0 0.0
      %925 = vmatprep.subr.mxu0 0.0
      %926 = vmatpush1.msra.mxu0 0.0
      %927 = vmatprep.subr.mxu0 0.0
      %928 = vmatpush1.msra.mxu0 0.0
      %929 = vmatprep.subr.mxu0 0.0
      %930 = vmatpush1.msra.mxu0 0.0
      %931 = vmatprep.subr.mxu0 0.0
      %932 = vmatpush1.msra.mxu0 0.0
      %933 = vmatprep.subr.mxu0 0.0
      %934 = vmatpush1.msra.mxu0 0.0
      %935 = vmatprep.subr.mxu0 0.0
      %936 = vmatpush1.msra.mxu0 0.0
      %937 = vmatprep.subr.mxu0 0.0
      %938 = vmatpush1.msra.mxu0 0.0
      %939 = vmatprep.subr.mxu0 0.0
      %940 = vmatpush1.msra.mxu0 0.0
      %941 = vmatprep.subr.mxu0 0.0
      %942 = vmatpush1.msra.mxu0 0.0
      %943 = vmatprep.subr.mxu0 0.0
      %944 = vmatpush1.msra.mxu0 0.0
      %945 = vmatprep.subr.mxu0 0.0
      %946 = vmatpush1.msra.mxu0 0.0
      %947 = vmatprep.subr.mxu0 0.0
      %948 = vmatpush1.msra.mxu0 0.0
      %949 = vmatprep.subr.mxu0 0.0
      %950 = vmatpush1.msra.mxu0 0.0
      %951 = vmatprep.subr.mxu0 0.0
      %952 = vmatpush1.msra.mxu0 0.0
      %953 = vmatprep.subr.mxu0 0.0
      %954 = vmatpush1.msra.mxu0 0.0
      %955 = vmatprep.subr.mxu0 0.0
      %956 = vmatpush1.msra.mxu0 0.0
      %957 = vmatprep.subr.mxu0 0.0
      %958 = vmatpush1.msra.mxu0 0.0
      %959 = vmatprep.subr.mxu0 0.0
      %960 = vmatpush1.msra.mxu0 0.0
      %961 = vmatprep.subr.mxu0 0.0
      %962 = vmatpush1.msra.mxu0 0.0
      %963 = vmatprep.subr.mxu0 0.0
      %964 = vmatpush1.msra.mxu0 0.0
      %965 = vmatprep.mubr.f32.mxu0 0.0
      %966 = vmatmul.mubr.f32.gmra.mrb[0].mxu0 %v885
      %v967 = vpop.f32.mrb[0].mxu0
      %v968 = vadd.f32 0.0, %v967
      %v969 = vpop.f32.mrb[0].mxu0
      %v970 = vadd.f32 0.0, %v969
      %971 = vmatprep.mubr.f32.mxu0 0.0
      %972 = vmatmul.mubr.f32.gmra.mrb[0].mxu0 %v887
      %v973 = vpop.f32.mrb[0].mxu0
      %v974 = vadd.f32 0.0, %v973
      %v975 = vpop.f32.mrb[0].mxu0
      %v976 = vadd.f32 0.0, %v975
      %977 = vmatprep.mubr.f32.mxu0 0.0
      %978 = vmatmul.mubr.f32.gmra.mrb[0].mxu0 %v889
      %v979 = vpop.f32.mrb[0].mxu0
      %v980 = vadd.f32 0.0, %v979
      %v981 = vpop.f32.mrb[0].mxu0
      %v982 = vadd.f32 0.0, %v981
      %983 = vmatprep.mubr.f32.mxu0 0.0
      %984 = vmatmul.mubr.f32.gmra.mrb[0].mxu0 %v891
      %v985 = vpop.f32.mrb[0].mxu0
      %v986 = vadd.f32 0.0, %v985
      %v987 = vpop.f32.mrb[0].mxu0
      %v988 = vadd.f32 0.0, %v987
      %989 = vmatprep.mubr.f32.mxu0 0.0
      %990 = vmatmul.mubr.f32.gmra.mrb[0].mxu0 %v893
      %v991 = vpop.f32.mrb[0].mxu0
      %v992 = vadd.f32 0.0, %v991
      %v993 = vpop.f32.mrb[0].mxu0
      %v994 = vadd.f32 0.0, %v993
      %995 = vmatprep.mubr.f32.mxu0 0.0
      %996 = vmatmul.mubr.f32.gmra.mrb[0].mxu0 %v895
      %v997 = vpop.f32.mrb[0].mxu0
      %v998 = vadd.f32 0.0, %v997
      %v999 = vpop.f32.mrb[0].mxu0
      %v1000 = vadd.f32 0.0, %v999
      %1001 = vmatprep.mubr.f32.mxu0 0.0
      %1002 = vmatmul.mubr.f32.gmra.mrb[0].mxu0 %v897
      %v1003 = vpop.f32.mrb[0].mxu0
      %v1004 = vadd.f32 0.0, %v1003
      %v1005 = vpop.f32.mrb[0].mxu0
      %v1006 = vadd.f32 0.0, %v1005
      %1007 = vmatprep.mubr.f32.mxu0 0.0
      %1008 = vmatmul.mubr.f32.gmra.mrb[0].mxu0 %v899
      %v1009 = vpop.f32.mrb[0].mxu0
      %v1010 = vadd.f32 0.0, %v1009
      %v1011 = vpop.f32.mrb[0].mxu0
      %v1012 = vadd.f32 0.0, %v1011
      %1013 = vdwg.mxu0
      %v1014 = vmul.f32 %v336, %v823
      %v1015 = vmul.f32 %v337, %v825
      %v1016 = vmul.f32 %v338, %v829
      %v1017 = vmul.f32 %v339, %v831
      %v1018 = vmul.f32 %v340, %v835
      %v1019 = vmul.f32 %v341, %v837
      %v1020 = vmul.f32 %v342, %v841
      %v1021 = vmul.f32 %v343, %v843
      %v1022 = vmul.f32 %v344, %v847
      %v1023 = vmul.f32 %v345, %v849
      %v1024 = vmul.f32 %v346, %v853
      %v1025 = vmul.f32 %v347, %v855
      %v1026 = vmul.f32 %v348, %v859
      %v1027 = vmul.f32 %v349, %v861
      %v1028 = vmul.f32 %v350, %v865
      %v1029 = vmul.f32 %v351, %v867
      %v1030 = vmul.f32 %v1014, %v968
      %v1031 = vmul.f32 %v1015, %v970
      %v1032 = vmul.f32 %v1016, %v974
      %v1033 = vmul.f32 %v1017, %v976
      %v1034 = vmul.f32 %v1018, %v980
      %v1035 = vmul.f32 %v1019, %v982
      %v1036 = vmul.f32 %v1020, %v986
      %v1037 = vmul.f32 %v1021, %v988
      %v1038 = vmul.f32 %v1022, %v992
      %v1039 = vmul.f32 %v1023, %v994
      %v1040 = vmul.f32 %v1024, %v998
      %v1041 = vmul.f32 %v1025, %v1000
      %v1042 = vmul.f32 %v1026, %v1004
      %v1043 = vmul.f32 %v1027, %v1006
      %v1044 = vmul.f32 %v1028, %v1010
      %v1045 = vmul.f32 %v1029, %v1012
      %v1046 = vadd.f32 %v1030, %v1031
      %1047 = vadd.xlane.f32.xlu0 %v1046
      %v1048 = vpop.xlane.xlu0 %1047
      %v1049 = vadd.f32 %v1032, %v1033
      %1050 = vadd.xlane.f32.xlu0 %v1049
      %v1051 = vpop.xlane.xlu0 %1050
      %v1052 = vadd.f32 %v1034, %v1035
      %1053 = vadd.xlane.f32.xlu0 %v1052
      %v1054 = vpop.xlane.xlu0 %1053
      %v1055 = vadd.f32 %v1036, %v1037
      %1056 = vadd.xlane.f32.xlu0 %v1055
      %v1057 = vpop.xlane.xlu0 %1056
      %v1058 = vadd.f32 %v1038, %v1039
      %1059 = vadd.xlane.f32.xlu0 %v1058
      %v1060 = vpop.xlane.xlu0 %1059
      %v1061 = vadd.f32 %v1040, %v1041
      %1062 = vadd.xlane.f32.xlu0 %v1061
      %v1063 = vpop.xlane.xlu0 %1062
      %v1064 = vadd.f32 %v1042, %v1043
      %1065 = vadd.xlane.f32.xlu0 %v1064
      %v1066 = vpop.xlane.xlu0 %1065
      %v1067 = vadd.f32 %v1044, %v1045
      %1068 = vadd.xlane.f32.xlu0 %v1067
      %v1069 = vpop.xlane.xlu0 %1068
      %v1070 = vrcp.pop 256.0
      %v1071 = vmul.f32 %v1048, %v1070
      %v1072 = vmul.f32 %v1051, %v1070
      %v1073 = vmul.f32 %v1054, %v1070
      %v1074 = vmul.f32 %v1057, %v1070
      %v1075 = vmul.f32 %v1060, %v1070
      %v1076 = vmul.f32 %v1063, %v1070
      %v1077 = vmul.f32 %v1066, %v1070
      %v1078 = vmul.f32 %v1069, %v1070
      %v1079 = vsub.f32 %v1030, %v1071
      %v1080 = vsub.f32 %v1031, %v1071
      %v1081 = vsub.f32 %v1032, %v1072
      %v1082 = vsub.f32 %v1033, %v1072
      %v1083 = vsub.f32 %v1034, %v1073
      %v1084 = vsub.f32 %v1035, %v1073
      %v1085 = vsub.f32 %v1036, %v1074
      %v1086 = vsub.f32 %v1037, %v1074
      %v1087 = vsub.f32 %v1038, %v1075
      %v1088 = vsub.f32 %v1039, %v1075
      %v1089 = vsub.f32 %v1040, %v1076
      %v1090 = vsub.f32 %v1041, %v1076
      %v1091 = vsub.f32 %v1042, %v1077
      %v1092 = vsub.f32 %v1043, %v1077
      %v1093 = vsub.f32 %v1044, %v1078
      %v1094 = vsub.f32 %v1045, %v1078
      %v1095 = vmul.f32 %v1079, %v1079
      %v1096 = vmul.f32 %v1080, %v1080
      %v1097 = vmul.f32 %v1081, %v1081
      %v1098 = vmul.f32 %v1082, %v1082
      %v1099 = vmul.f32 %v1083, %v1083
      %v1100 = vmul.f32 %v1084, %v1084
      %v1101 = vmul.f32 %v1085, %v1085
      %v1102 = vmul.f32 %v1086, %v1086
      %v1103 = vmul.f32 %v1087, %v1087
      %v1104 = vmul.f32 %v1088, %v1088
      %v1105 = vmul.f32 %v1089, %v1089
      %v1106 = vmul.f32 %v1090, %v1090
      %v1107 = vmul.f32 %v1091, %v1091
      %v1108 = vmul.f32 %v1092, %v1092
      %v1109 = vmul.f32 %v1093, %v1093
      %v1110 = vmul.f32 %v1094, %v1094
      %v1111 = vadd.f32 %v1095, %v1096
      %1112 = vadd.xlane.f32.xlu0 %v1111
      %v1113 = vpop.xlane.xlu0 %1112
      %v1114 = vadd.f32 %v1097, %v1098
      %1115 = vadd.xlane.f32.xlu0 %v1114
      %v1116 = vpop.xlane.xlu0 %1115
      %v1117 = vadd.f32 %v1099, %v1100
      %1118 = vadd.xlane.f32.xlu0 %v1117
      %v1119 = vpop.xlane.xlu0 %1118
      %v1120 = vadd.f32 %v1101, %v1102
      %1121 = vadd.xlane.f32.xlu0 %v1120
      %v1122 = vpop.xlane.xlu0 %1121
      %v1123 = vadd.f32 %v1103, %v1104
      %1124 = vadd.xlane.f32.xlu0 %v1123
      %v1125 = vpop.xlane.xlu0 %1124
      %v1126 = vadd.f32 %v1105, %v1106
      %1127 = vadd.xlane.f32.xlu0 %v1126
      %v1128 = vpop.xlane.xlu0 %1127
      %v1129 = vadd.f32 %v1107, %v1108
      %1130 = vadd.xlane.f32.xlu0 %v1129
      %v1131 = vpop.xlane.xlu0 %1130
      %v1132 = vadd.f32 %v1109, %v1110
      %1133 = vadd.xlane.f32.xlu0 %v1132
      %v1134 = vpop.xlane.xlu0 %1133
      %v1135 = vmul.f32 %v1113, %v1070
      %v1136 = vmul.f32 %v1116, %v1070
      %v1137 = vmul.f32 %v1119, %v1070
      %v1138 = vmul.f32 %v1122, %v1070
      %v1139 = vmul.f32 %v1125, %v1070
      %v1140 = vmul.f32 %v1128, %v1070
      %v1141 = vmul.f32 %v1131, %v1070
      %v1142 = vmul.f32 %v1134, %v1070
      %v1143 = vadd.f32 %v1135, 1e-05
      %v1144 = vadd.f32 %v1136, 1e-05
      %v1145 = vadd.f32 %v1137, 1e-05
      %v1146 = vadd.f32 %v1138, 1e-05
      %v1147 = vadd.f32 %v1139, 1e-05
      %v1148 = vadd.f32 %v1140, 1e-05
      %v1149 = vadd.f32 %v1141, 1e-05
      %v1150 = vadd.f32 %v1142, 1e-05
      %v1151 = vrsqrt.pop %v1143
      %v1152 = vrsqrt.pop %v1144
      %v1153 = vrsqrt.pop %v1145
      %v1154 = vrsqrt.pop %v1146
      %v1155 = vrsqrt.pop %v1147
      %v1156 = vrsqrt.pop %v1148
      %v1157 = vrsqrt.pop %v1149
      %v1158 = vrsqrt.pop %v1150
      %v1159 = vmul.f32 %v1079, %v1151
      %v1160 = vmul.f32 %v1080, %v1151
      %v1161 = vmul.f32 %v1081, %v1152
      %v1162 = vmul.f32 %v1082, %v1152
      %v1163 = vmul.f32 %v1083, %v1153
      %v1164 = vmul.f32 %v1084, %v1153
      %v1165 = vmul.f32 %v1085, %v1154
      %v1166 = vmul.f32 %v1086, %v1154
      %v1167 = vmul.f32 %v1087, %v1155
      %v1168 = vmul.f32 %v1088, %v1155
      %v1169 = vmul.f32 %v1089, %v1156
      %v1170 = vmul.f32 %v1090, %v1156
      %v1171 = vmul.f32 %v1091, %v1157
      %v1172 = vmul.f32 %v1092, %v1157
      %v1173 = vmul.f32 %v1093, %v1158
      %v1174 = vmul.f32 %v1094, %v1158
      %1175 = vset.pattern.permute.xlu0 2
      %1176 = vperm.xlu0 %1175, %v352
      %v1177 = vpop.permute.xlu0 %1176
      %1179 = vset.pattern.permute.xlu0 2
      %1180 = vperm.xlu0 %1179, %v353
      %v1181 = vpop.permute.xlu0 %1180
      %1183 = vset.pattern.permute.xlu0 2
      %1184 = vperm.xlu0 %1183, %v354
      %v1185 = vpop.permute.xlu0 %1184
      %1187 = vset.pattern.permute.xlu0 2
      %1188 = vperm.xlu0 %1187, %v355
      %v1189 = vpop.permute.xlu0 %1188
      %1191 = vset.pattern.permute.xlu0 2
      %1192 = vperm.xlu0 %1191, %v356
      %v1193 = vpop.permute.xlu0 %1192
      %1195 = vset.pattern.permute.xlu0 2
      %1196 = vperm.xlu0 %1195, %v357
      %v1197 = vpop.permute.xlu0 %1196
      %1199 = vset.pattern.permute.xlu0 2
      %1200 = vperm.xlu0 %1199, %v358
      %v1201 = vpop.permute.xlu0 %1200
      %1203 = vset.pattern.permute.xlu0 2
      %1204 = vperm.xlu0 %1203, %v359
      %v1205 = vpop.permute.xlu0 %1204
      %v1207 = vmul.f32 %v1159, %v1177
      %v1208 = vmul.f32 %v1160, %v1177
      %v1209 = vmul.f32 %v1161, %v1181
      %v1210 = vmul.f32 %v1162, %v1181
      %v1211 = vmul.f32 %v1163, %v1185
      %v1212 = vmul.f32 %v1164, %v1185
      %v1213 = vmul.f32 %v1165, %v1189
      %v1214 = vmul.f32 %v1166, %v1189
      %v1215 = vmul.f32 %v1167, %v1193
      %v1216 = vmul.f32 %v1168, %v1193
      %v1217 = vmul.f32 %v1169, %v1197
      %v1218 = vmul.f32 %v1170, %v1197
      %v1219 = vmul.f32 %v1171, %v1201
      %v1220 = vmul.f32 %v1172, %v1201
      %v1221 = vmul.f32 %v1173, %v1205
      %v1222 = vmul.f32 %v1174, %v1205
      %1223 = vset.pattern.permute.xlu0 3
      %1224 = vperm.xlu0 %1223, %v352
      %v1225 = vpop.permute.xlu0 %1224
      %1227 = vset.pattern.permute.xlu0 3
      %1228 = vperm.xlu0 %1227, %v353
      %v1229 = vpop.permute.xlu0 %1228
      %1231 = vset.pattern.permute.xlu0 3
      %1232 = vperm.xlu0 %1231, %v354
      %v1233 = vpop.permute.xlu0 %1232
      %1235 = vset.pattern.permute.xlu0 3
      %1236 = vperm.xlu0 %1235, %v355
      %v1237 = vpop.permute.xlu0 %1236
      %1239 = vset.pattern.permute.xlu0 3
      %1240 = vperm.xlu0 %1239, %v356
      %v1241 = vpop.permute.xlu0 %1240
      %1243 = vset.pattern.permute.xlu0 3
      %1244 = vperm.xlu0 %1243, %v357
      %v1245 = vpop.permute.xlu0 %1244
      %1247 = vset.pattern.permute.xlu0 3
      %1248 = vperm.xlu0 %1247, %v358
      %v1249 = vpop.permute.xlu0 %1248
      %1251 = vset.pattern.permute.xlu0 3
      %1252 = vperm.xlu0 %1251, %v359
      %v1253 = vpop.permute.xlu0 %1252
      %v1255 = vadd.f32 %v1207, %v1225
      %v1256 = vadd.f32 %v1208, %v1225
      %v1257 = vadd.f32 %v1209, %v1229
      %v1258 = vadd.f32 %v1210, %v1229
      %v1259 = vadd.f32 %v1211, %v1233
      %v1260 = vadd.f32 %v1212, %v1233
      %v1261 = vadd.f32 %v1213, %v1237
      %v1262 = vadd.f32 %v1214, %v1237
      %v1263 = vadd.f32 %v1215, %v1241
      %v1264 = vadd.f32 %v1216, %v1241
      %v1265 = vadd.f32 %v1217, %v1245
      %v1266 = vadd.f32 %v1218, %v1245
      %v1267 = vadd.f32 %v1219, %v1249
      %v1268 = vadd.f32 %v1220, %v1249
      %v1269 = vadd.f32 %v1221, %v1253
      %v1270 = vadd.f32 %v1222, %v1253
      %v1271 = vld [vmem:[%s5] sm:$0xff]
      %v1272 = vld [vmem:[%s5 + $0x8] sm:$0xff]
      %v1273 = vld [vmem:[%s5 + $0x10] sm:$0x1]
      %v1274 = vld [vmem:[%s5 + $0x18] sm:$0x1]
      %1275 = vset.pattern.permute.xlu0 1
      %1276 = vperm.xlu0 %1275, %v352
      %v1277 = vpop.permute.xlu0 %1276
      %1279 = vset.pattern.permute.xlu0 1
      %1280 = vperm.xlu0 %1279, %v353
      %v1281 = vpop.permute.xlu0 %1280
      %1283 = vset.pattern.permute.xlu0 1
      %1284 = vperm.xlu0 %1283, %v354
      %v1285 = vpop.permute.xlu0 %1284
      %1287 = vset.pattern.permute.xlu0 1
      %1288 = vperm.xlu0 %1287, %v355
      %v1289 = vpop.permute.xlu0 %1288
      %1291 = vset.pattern.permute.xlu0 1
      %1292 = vperm.xlu0 %1291, %v356
      %v1293 = vpop.permute.xlu0 %1292
      %1295 = vset.pattern.permute.xlu0 1
      %1296 = vperm.xlu0 %1295, %v357
      %v1297 = vpop.permute.xlu0 %1296
      %1299 = vset.pattern.permute.xlu0 1
      %1300 = vperm.xlu0 %1299, %v358
      %v1301 = vpop.permute.xlu0 %1300
      %1303 = vset.pattern.permute.xlu0 1
      %1304 = vperm.xlu0 %1303, %v359
      %v1305 = vpop.permute.xlu0 %1304
      %v1307 = vadd.f32 %v1277, 0.0
      %v1308 = vadd.f32 %v1281, 0.0
      %v1309 = vadd.f32 %v1285, 0.0
      %v1310 = vadd.f32 %v1289, 0.0
      %v1311 = vadd.f32 %v1293, 0.0
      %v1312 = vadd.f32 %v1297, 0.0
      %v1313 = vadd.f32 %v1301, 0.0
      %v1314 = vadd.f32 %v1305, 0.0
      %1315 = vrot.lane.b32.xlu0 %v336, 17
      %v1316 = vpop.permute.xlu0 %1315
      %1317 = vrot.lane.b32.xlu0 %v338, 17
      %v1318 = vpop.permute.xlu0 %1317
      %1319 = vrot.lane.b32.xlu0 %v340, 17
      %v1320 = vpop.permute.xlu0 %1319
      %1321 = vrot.lane.b32.xlu0 %v342, 17
      %v1322 = vpop.permute.xlu0 %1321
      %1323 = vrot.lane.b32.xlu0 %v344, 17
      %v1324 = vpop.permute.xlu0 %1323
      %1325 = vrot.lane.b32.xlu0 %v346, 17
      %v1326 = vpop.permute.xlu0 %1325
      %1327 = vrot.lane.b32.xlu0 %v348, 17
      %v1328 = vpop.permute.xlu0 %1327
      %1329 = vrot.lane.b32.xlu0 %v350, 17
      %v1330 = vpop.permute.xlu0 %1329
      %1331 = vrot.lane.b32.xlu0 %v337, 17
      %v1332 = vpop.permute.xlu0 %1331
      %1333 = vrot.lane.b32.xlu0 %v339, 17
      %v1334 = vpop.permute.xlu0 %1333
      %1335 = vrot.lane.b32.xlu0 %v341, 17
      %v1336 = vpop.permute.xlu0 %1335
      %1337 = vrot.lane.b32.xlu0 %v343, 17
      %v1338 = vpop.permute.xlu0 %1337
      %1339 = vrot.lane.b32.xlu0 %v345, 17
      %v1340 = vpop.permute.xlu0 %1339
      %1341 = vrot.lane.b32.xlu0 %v347, 17
      %v1342 = vpop.permute.xlu0 %1341
      %1343 = vrot.lane.b32.xlu0 %v349, 17
      %v1344 = vpop.permute.xlu0 %1343
      %1345 = vrot.lane.b32.xlu0 %v351, 17
      %v1346 = vpop.permute.xlu0 %1345
      %v1347 = vlaneseq
      %v1348 = vand.u32 %v1347, 127
      %vm1349 = vcmp.lt.s32.totalorder %v1348, 17
      %v1350 = vsel %vm1349, %v1316, %v1332
      %v1351 = vsel %vm1349, %v1318, %v1334
      %v1352 = vsel %vm1349, %v1320, %v1336
      %v1353 = vsel %vm1349, %v1322, %v1338
      %v1354 = vsel %vm1349, %v1324, %v1340
      %v1355 = vsel %vm1349, %v1326, %v1342
      %v1356 = vsel %vm1349, %v1328, %v1344
      %v1357 = vsel %vm1349, %v1330, %v1346
      %v1358 = vsel %vm1349, %v1332, %v1316
      %v1359 = vsel %vm1349, %v1334, %v1318
      %v1360 = vsel %vm1349, %v1336, %v1320
      %v1361 = vsel %vm1349, %v1338, %v1322
      %v1362 = vsel %vm1349, %v1340, %v1324
      %v1363 = vsel %vm1349, %v1342, %v1326
      %v1364 = vsel %vm1349, %v1344, %v1328
      %v1365 = vsel %vm1349, %v1346, %v1330
      %v1366 = vlaneseq
      %v1367 = vshrl.u32 %v1366, 7
      %v1368 = vsub.s32 0, %v1367
      %v1369 = vrot.slane %v1271, %v1368
      %v1370 = vlaneseq
      %v1371 = vshrl.u32 %v1370, 7
      %v1372 = vsub.s32 0, %v1371
      %v1373 = vrot.slane %v1272, %v1372
      %v1374 = vmul.f32 %v1358, %v1369
      %v1375 = vmul.f32 %v1350, %v1373
      %v1376 = vmul.f32 %v1359, %v1369
      %v1377 = vmul.f32 %v1351, %v1373
      %v1378 = vmul.f32 %v1360, %v1369
      %v1379 = vmul.f32 %v1352, %v1373
      %v1380 = vmul.f32 %v1361, %v1369
      %v1381 = vmul.f32 %v1353, %v1373
      %v1382 = vmul.f32 %v1362, %v1369
      %v1383 = vmul.f32 %v1354, %v1373
      %v1384 = vmul.f32 %v1363, %v1369
      %v1385 = vmul.f32 %v1355, %v1373
      %v1386 = vmul.f32 %v1364, %v1369
      %v1387 = vmul.f32 %v1356, %v1373
      %v1388 = vmul.f32 %v1365, %v1369
      %v1389 = vmul.f32 %v1357, %v1373
      %v1390 = vld [vmem:[%s4] sm:$0xff]
      %v1391 = vld [vmem:[%s4 + $0x8] sm:$0xff]
      %v1392 = vld [vmem:[%s4 + $0x10] sm:$0xff]
      %v1393 = vld [vmem:[%s4 + $0x18] sm:$0xff]
      %v1394 = vld [vmem:[%s4 + $0x20] sm:$0xff]
      %v1395 = vld [vmem:[%s4 + $0x28] sm:$0xff]
      %v1396 = vld [vmem:[%s4 + $0x30] sm:$0xff]
      %v1397 = vld [vmem:[%s4 + $0x38] sm:$0xff]
      %v1399 = vsel %vm545, %v1390, 0
      %v1402 = vsel %vm545, %v1391, 0
      %v1405 = vsel %vm545, %v1392, 0
      %v1408 = vsel %vm545, %v1393, 0
      %v1411 = vsel %vm545, %v1394, 0
      %v1414 = vsel %vm545, %v1395, 0
      %v1417 = vsel %vm545, %v1396, 0
      %v1420 = vsel %vm545, %v1397, 0
      %1422 = vmatprep.subr.mxu0 %v1375
      %1423 = vmatpush1.msra.mxu0 %v1374
      %1424 = vmatprep.subr.mxu0 %v1377
      %1425 = vmatpush1.msra.mxu0 %v1376
      %1426 = vmatprep.subr.mxu0 %v1379
      %1427 = vmatpush1.msra.mxu0 %v1378
      %1428 = vmatprep.subr.mxu0 %v1381
      %1429 = vmatpush1.msra.mxu0 %v1380
      %1430 = vmatprep.subr.mxu0 %v1383
      %1431 = vmatpush1.msra.mxu0 %v1382
      %1432 = vmatprep.subr.mxu0 %v1385
      %1433 = vmatpush1.msra.mxu0 %v1384
      %1434 = vmatprep.subr.mxu0 %v1387
      %1435 = vmatpush1.msra.mxu0 %v1386
      %1436 = vmatprep.subr.mxu0 %v1389
      %1437 = vmatpush1.msra.mxu0 %v1388
      %1438 = vmatprep.subr.mxu0 0.0
      %1439 = vmatpush1.msra.mxu0 0.0
      %1440 = vmatprep.subr.mxu0 0.0
      %1441 = vmatpush1.msra.mxu0 0.0
      %1442 = vmatprep.subr.mxu0 0.0
      %1443 = vmatpush1.msra.mxu0 0.0
      %1444 = vmatprep.subr.mxu0 0.0
      %1445 = vmatpush1.msra.mxu0 0.0
      %1446 = vmatprep.subr.mxu0 0.0
      %1447 = vmatpush1.msra.mxu0 0.0
      %1448 = vmatprep.subr.mxu0 0.0
      %1449 = vmatpush1.msra.mxu0 0.0
      %1450 = vmatprep.subr.mxu0 0.0
      %1451 = vmatpush1.msra.mxu0 0.0
      %1452 = vmatprep.subr.mxu0 0.0
      %1453 = vmatpush1.msra.mxu0 0.0
      %1454 = vmatprep.subr.mxu0 0.0
      %1455 = vmatpush1.msra.mxu0 0.0
      %1456 = vmatprep.subr.mxu0 0.0
      %1457 = vmatpush1.msra.mxu0 0.0
      %1458 = vmatprep.subr.mxu0 0.0
      %1459 = vmatpush1.msra.mxu0 0.0
      %1460 = vmatprep.subr.mxu0 0.0
      %1461 = vmatpush1.msra.mxu0 0.0
      %1462 = vmatprep.subr.mxu0 0.0
      %1463 = vmatpush1.msra.mxu0 0.0
      %1464 = vmatprep.subr.mxu0 0.0
      %1465 = vmatpush1.msra.mxu0 0.0
      %1466 = vmatprep.subr.mxu0 0.0
      %1467 = vmatpush1.msra.mxu0 0.0
      %1468 = vmatprep.subr.mxu0 0.0
      %1469 = vmatpush1.msra.mxu0 0.0
      %1470 = vmatprep.subr.mxu0 0.0
      %1471 = vmatpush1.msra.mxu0 0.0
      %1472 = vmatprep.subr.mxu0 0.0
      %1473 = vmatpush1.msra.mxu0 0.0
      %1474 = vmatprep.subr.mxu0 0.0
      %1475 = vmatpush1.msra.mxu0 0.0
      %1476 = vmatprep.subr.mxu0 0.0
      %1477 = vmatpush1.msra.mxu0 0.0
      %1478 = vmatprep.subr.mxu0 0.0
      %1479 = vmatpush1.msra.mxu0 0.0
      %1480 = vmatprep.subr.mxu0 0.0
      %1481 = vmatpush1.msra.mxu0 0.0
      %1482 = vmatprep.subr.mxu0 0.0
      %1483 = vmatpush1.msra.mxu0 0.0
      %1484 = vmatprep.subr.mxu0 0.0
      %1485 = vmatpush1.msra.mxu0 0.0
      %1486 = vmatprep.mubr.f32.mxu0 0.0
      %1487 = vmatmul.mubr.f32.gmra.mrb[0].mxu0 %v1399
      %v1488 = vpop.f32.mrb[0].mxu0
      %v1489 = vadd.f32 0.0, %v1488
      %v1490 = vpop.f32.mrb[0].mxu0
      %v1491 = vadd.f32 0.0, %v1490
      %1492 = vmatprep.mubr.f32.mxu0 0.0
      %1493 = vmatmul.mubr.f32.gmra.mrb[0].mxu0 %v1402
      %v1494 = vpop.f32.mrb[0].mxu0
      %v1495 = vadd.f32 0.0, %v1494
      %v1496 = vpop.f32.mrb[0].mxu0
      %v1497 = vadd.f32 0.0, %v1496
      %1498 = vmatprep.mubr.f32.mxu0 0.0
      %1499 = vmatmul.mubr.f32.gmra.mrb[0].mxu0 %v1405
      %v1500 = vpop.f32.mrb[0].mxu0
      %v1501 = vadd.f32 0.0, %v1500
      %v1502 = vpop.f32.mrb[0].mxu0
      %v1503 = vadd.f32 0.0, %v1502
      %1504 = vmatprep.mubr.f32.mxu0 0.0
      %1505 = vmatmul.mubr.f32.gmra.mrb[0].mxu0 %v1408
      %v1506 = vpop.f32.mrb[0].mxu0
      %v1507 = vadd.f32 0.0, %v1506
      %v1508 = vpop.f32.mrb[0].mxu0
      %v1509 = vadd.f32 0.0, %v1508
      %1510 = vmatprep.mubr.f32.mxu0 0.0
      %1511 = vmatmul.mubr.f32.gmra.mrb[0].mxu0 %v1411
      %v1512 = vpop.f32.mrb[0].mxu0
      %v1513 = vadd.f32 0.0, %v1512
      %v1514 = vpop.f32.mrb[0].mxu0
      %v1515 = vadd.f32 0.0, %v1514
      %1516 = vmatprep.mubr.f32.mxu0 0.0
      %1517 = vmatmul.mubr.f32.gmra.mrb[0].mxu0 %v1414
      %v1518 = vpop.f32.mrb[0].mxu0
      %v1519 = vadd.f32 0.0, %v1518
      %v1520 = vpop.f32.mrb[0].mxu0
      %v1521 = vadd.f32 0.0, %v1520
      %1522 = vmatprep.mubr.f32.mxu0 0.0
      %1523 = vmatmul.mubr.f32.gmra.mrb[0].mxu0 %v1417
      %v1524 = vpop.f32.mrb[0].mxu0
      %v1525 = vadd.f32 0.0, %v1524
      %v1526 = vpop.f32.mrb[0].mxu0
      %v1527 = vadd.f32 0.0, %v1526
      %1528 = vmatprep.mubr.f32.mxu0 0.0
      %1529 = vmatmul.mubr.f32.gmra.mrb[0].mxu0 %v1420
      %v1530 = vpop.f32.mrb[0].mxu0
      %v1531 = vadd.f32 0.0, %v1530
      %v1532 = vpop.f32.mrb[0].mxu0
      %v1533 = vadd.f32 0.0, %v1532
      %1534 = vdwg.mxu0
      %v1535 = vadd.f32 %v1307, %v1489
      %v1536 = vadd.f32 %v1307, %v1491
      %v1537 = vadd.f32 %v1308, %v1495
      %v1538 = vadd.f32 %v1308, %v1497
      %v1539 = vadd.f32 %v1309, %v1501
      %v1540 = vadd.f32 %v1309, %v1503
      %v1541 = vadd.f32 %v1310, %v1507
      %v1542 = vadd.f32 %v1310, %v1509
      %v1543 = vadd.f32 %v1311, %v1513
      %v1544 = vadd.f32 %v1311, %v1515
      %v1545 = vadd.f32 %v1312, %v1519
      %v1546 = vadd.f32 %v1312, %v1521
      %v1547 = vadd.f32 %v1313, %v1525
      %v1548 = vadd.f32 %v1313, %v1527
      %v1549 = vadd.f32 %v1314, %v1531
      %v1550 = vadd.f32 %v1314, %v1533
      %1551 = vrot.lane.b32.xlu0 %v336, 16
      %v1552 = vpop.permute.xlu0 %1551
      %1553 = vrot.lane.b32.xlu0 %v338, 16
      %v1554 = vpop.permute.xlu0 %1553
      %1555 = vrot.lane.b32.xlu0 %v340, 16
      %v1556 = vpop.permute.xlu0 %1555
      %1557 = vrot.lane.b32.xlu0 %v342, 16
      %v1558 = vpop.permute.xlu0 %1557
      %1559 = vrot.lane.b32.xlu0 %v344, 16
      %v1560 = vpop.permute.xlu0 %1559
      %1561 = vrot.lane.b32.xlu0 %v346, 16
      %v1562 = vpop.permute.xlu0 %1561
      %1563 = vrot.lane.b32.xlu0 %v348, 16
      %v1564 = vpop.permute.xlu0 %1563
      %1565 = vrot.lane.b32.xlu0 %v350, 16
      %v1566 = vpop.permute.xlu0 %1565
      %1567 = vrot.lane.b32.xlu0 %v337, 16
      %v1568 = vpop.permute.xlu0 %1567
      %1569 = vrot.lane.b32.xlu0 %v339, 16
      %v1570 = vpop.permute.xlu0 %1569
      %1571 = vrot.lane.b32.xlu0 %v341, 16
      %v1572 = vpop.permute.xlu0 %1571
      %1573 = vrot.lane.b32.xlu0 %v343, 16
      %v1574 = vpop.permute.xlu0 %1573
      %1575 = vrot.lane.b32.xlu0 %v345, 16
      %v1576 = vpop.permute.xlu0 %1575
      %1577 = vrot.lane.b32.xlu0 %v347, 16
      %v1578 = vpop.permute.xlu0 %1577
      %1579 = vrot.lane.b32.xlu0 %v349, 16
      %v1580 = vpop.permute.xlu0 %1579
      %1581 = vrot.lane.b32.xlu0 %v351, 16
      %v1582 = vpop.permute.xlu0 %1581
      %vm1583 = vcmp.lt.s32.totalorder %v1348, 16
      %v1584 = vsel %vm1583, %v1552, %v1568
      %v1585 = vsel %vm1583, %v1554, %v1570
      %v1586 = vsel %vm1583, %v1556, %v1572
      %v1587 = vsel %vm1583, %v1558, %v1574
      %v1588 = vsel %vm1583, %v1560, %v1576
      %v1589 = vsel %vm1583, %v1562, %v1578
      %v1590 = vsel %vm1583, %v1564, %v1580
      %v1591 = vsel %vm1583, %v1566, %v1582
      %v1592 = vsel %vm1583, %v1568, %v1552
      %v1593 = vsel %vm1583, %v1570, %v1554
      %v1594 = vsel %vm1583, %v1572, %v1556
      %v1595 = vsel %vm1583, %v1574, %v1558
      %v1596 = vsel %vm1583, %v1576, %v1560
      %v1597 = vsel %vm1583, %v1578, %v1562
      %v1598 = vsel %vm1583, %v1580, %v1564
      %v1599 = vsel %vm1583, %v1582, %v1566
      %v1600 = vlaneseq
      %v1601 = vshrl.u32 %v1600, 7
      %v1602 = vsub.s32 1, %v1601
      %v1603 = vrot.slane %v1271, %v1602
      %v1604 = vlaneseq
      %v1605 = vshrl.u32 %v1604, 7
      %v1606 = vsub.s32 1, %v1605
      %v1607 = vrot.slane %v1272, %v1606
      %v1608 = vmul.f32 %v1592, %v1603
      %v1609 = vmul.f32 %v1584, %v1607
      %v1610 = vmul.f32 %v1593, %v1603
      %v1611 = vmul.f32 %v1585, %v1607
      %v1612 = vmul.f32 %v1594, %v1603
      %v1613 = vmul.f32 %v1586, %v1607
      %v1614 = vmul.f32 %v1595, %v1603
      %v1615 = vmul.f32 %v1587, %v1607
      %v1616 = vmul.f32 %v1596, %v1603
      %v1617 = vmul.f32 %v1588, %v1607
      %v1618 = vmul.f32 %v1597, %v1603
      %v1619 = vmul.f32 %v1589, %v1607
      %v1620 = vmul.f32 %v1598, %v1603
      %v1621 = vmul.f32 %v1590, %v1607
      %v1622 = vmul.f32 %v1599, %v1603
      %v1623 = vmul.f32 %v1591, %v1607
      %s1624 = scalar_lea.vmem %s4, 64
      %v1625 = vld [vmem:[%s1624] sm:$0xff]
      %v1626 = vld [vmem:[%s1624 + $0x8] sm:$0xff]
      %v1627 = vld [vmem:[%s1624 + $0x10] sm:$0xff]
      %v1628 = vld [vmem:[%s1624 + $0x18] sm:$0xff]
      %v1629 = vld [vmem:[%s1624 + $0x20] sm:$0xff]
      %v1630 = vld [vmem:[%s1624 + $0x28] sm:$0xff]
      %v1631 = vld [vmem:[%s1624 + $0x30] sm:$0xff]
      %v1632 = vld [vmem:[%s1624 + $0x38] sm:$0xff]
      %v1634 = vsel %vm545, %v1625, 0
      %v1637 = vsel %vm545, %v1626, 0
      %v1640 = vsel %vm545, %v1627, 0
      %v1643 = vsel %vm545, %v1628, 0
      %v1646 = vsel %vm545, %v1629, 0
      %v1649 = vsel %vm545, %v1630, 0
      %v1652 = vsel %vm545, %v1631, 0
      %v1655 = vsel %vm545, %v1632, 0
      %1657 = vmatprep.subr.mxu0 %v1609
      %1658 = vmatpush1.msra.mxu0 %v1608
      %1659 = vmatprep.subr.mxu0 %v1611
      %1660 = vmatpush1.msra.mxu0 %v1610
      %1661 = vmatprep.subr.mxu0 %v1613
      %1662 = vmatpush1.msra.mxu0 %v1612
      %1663 = vmatprep.subr.mxu0 %v1615
      %1664 = vmatpush1.msra.mxu0 %v1614
      %1665 = vmatprep.subr.mxu0 %v1617
      %1666 = vmatpush1.msra.mxu0 %v1616
      %1667 = vmatprep.subr.mxu0 %v1619
      %1668 = vmatpush1.msra.mxu0 %v1618
      %1669 = vmatprep.subr.mxu0 %v1621
      %1670 = vmatpush1.msra.mxu0 %v1620
      %1671 = vmatprep.subr.mxu0 %v1623
      %1672 = vmatpush1.msra.mxu0 %v1622
      %1673 = vmatprep.subr.mxu0 0.0
      %1674 = vmatpush1.msra.mxu0 0.0
      %1675 = vmatprep.subr.mxu0 0.0
      %1676 = vmatpush1.msra.mxu0 0.0
      %1677 = vmatprep.subr.mxu0 0.0
      %1678 = vmatpush1.msra.mxu0 0.0
      %1679 = vmatprep.subr.mxu0 0.0
      %1680 = vmatpush1.msra.mxu0 0.0
      %1681 = vmatprep.subr.mxu0 0.0
      %1682 = vmatpush1.msra.mxu0 0.0
      %1683 = vmatprep.subr.mxu0 0.0
      %1684 = vmatpush1.msra.mxu0 0.0
      %1685 = vmatprep.subr.mxu0 0.0
      %1686 = vmatpush1.msra.mxu0 0.0
      %1687 = vmatprep.subr.mxu0 0.0
      %1688 = vmatpush1.msra.mxu0 0.0
      %1689 = vmatprep.subr.mxu0 0.0
      %1690 = vmatpush1.msra.mxu0 0.0
      %1691 = vmatprep.subr.mxu0 0.0
      %1692 = vmatpush1.msra.mxu0 0.0
      %1693 = vmatprep.subr.mxu0 0.0
      %1694 = vmatpush1.msra.mxu0 0.0
      %1695 = vmatprep.subr.mxu0 0.0
      %1696 = vmatpush1.msra.mxu0 0.0
      %1697 = vmatprep.subr.mxu0 0.0
      %1698 = vmatpush1.msra.mxu0 0.0
      %1699 = vmatprep.subr.mxu0 0.0
      %1700 = vmatpush1.msra.mxu0 0.0
      %1701 = vmatprep.subr.mxu0 0.0
      %1702 = vmatpush1.msra.mxu0 0.0
      %1703 = vmatprep.subr.mxu0 0.0
      %1704 = vmatpush1.msra.mxu0 0.0
      %1705 = vmatprep.subr.mxu0 0.0
      %1706 = vmatpush1.msra.mxu0 0.0
      %1707 = vmatprep.subr.mxu0 0.0
      %1708 = vmatpush1.msra.mxu0 0.0
      %1709 = vmatprep.subr.mxu0 0.0
      %1710 = vmatpush1.msra.mxu0 0.0
      %1711 = vmatprep.subr.mxu0 0.0
      %1712 = vmatpush1.msra.mxu0 0.0
      %1713 = vmatprep.subr.mxu0 0.0
      %1714 = vmatpush1.msra.mxu0 0.0
      %1715 = vmatprep.subr.mxu0 0.0
      %1716 = vmatpush1.msra.mxu0 0.0
      %1717 = vmatprep.subr.mxu0 0.0
      %1718 = vmatpush1.msra.mxu0 0.0
      %1719 = vmatprep.subr.mxu0 0.0
      %1720 = vmatpush1.msra.mxu0 0.0
      %1721 = vmatprep.mubr.f32.mxu0 0.0
      %1722 = vmatmul.mubr.f32.gmra.mrb[0].mxu0 %v1634
      %v1723 = vpop.f32.mrb[0].mxu0
      %v1724 = vadd.f32 0.0, %v1723
      %v1725 = vpop.f32.mrb[0].mxu0
      %v1726 = vadd.f32 0.0, %v1725
      %1727 = vmatprep.mubr.f32.mxu0 0.0
      %1728 = vmatmul.mubr.f32.gmra.mrb[0].mxu0 %v1637
      %v1729 = vpop.f32.mrb[0].mxu0
      %v1730 = vadd.f32 0.0, %v1729
      %v1731 = vpop.f32.mrb[0].mxu0
      %v1732 = vadd.f32 0.0, %v1731
      %1733 = vmatprep.mubr.f32.mxu0 0.0
      %1734 = vmatmul.mubr.f32.gmra.mrb[0].mxu0 %v1640
      %v1735 = vpop.f32.mrb[0].mxu0
      %v1736 = vadd.f32 0.0, %v1735
      %v1737 = vpop.f32.mrb[0].mxu0
      %v1738 = vadd.f32 0.0, %v1737
      %1739 = vmatprep.mubr.f32.mxu0 0.0
      %1740 = vmatmul.mubr.f32.gmra.mrb[0].mxu0 %v1643
      %v1741 = vpop.f32.mrb[0].mxu0
      %v1742 = vadd.f32 0.0, %v1741
      %v1743 = vpop.f32.mrb[0].mxu0
      %v1744 = vadd.f32 0.0, %v1743
      %1745 = vmatprep.mubr.f32.mxu0 0.0
      %1746 = vmatmul.mubr.f32.gmra.mrb[0].mxu0 %v1646
      %v1747 = vpop.f32.mrb[0].mxu0
      %v1748 = vadd.f32 0.0, %v1747
      %v1749 = vpop.f32.mrb[0].mxu0
      %v1750 = vadd.f32 0.0, %v1749
      %1751 = vmatprep.mubr.f32.mxu0 0.0
      %1752 = vmatmul.mubr.f32.gmra.mrb[0].mxu0 %v1649
      %v1753 = vpop.f32.mrb[0].mxu0
      %v1754 = vadd.f32 0.0, %v1753
      %v1755 = vpop.f32.mrb[0].mxu0
      %v1756 = vadd.f32 0.0, %v1755
      %1757 = vmatprep.mubr.f32.mxu0 0.0
      %1758 = vmatmul.mubr.f32.gmra.mrb[0].mxu0 %v1652
      %v1759 = vpop.f32.mrb[0].mxu0
      %v1760 = vadd.f32 0.0, %v1759
      %v1761 = vpop.f32.mrb[0].mxu0
      %v1762 = vadd.f32 0.0, %v1761
      %1763 = vmatprep.mubr.f32.mxu0 0.0
      %1764 = vmatmul.mubr.f32.gmra.mrb[0].mxu0 %v1655
      %v1765 = vpop.f32.mrb[0].mxu0
      %v1766 = vadd.f32 0.0, %v1765
      %v1767 = vpop.f32.mrb[0].mxu0
      %v1768 = vadd.f32 0.0, %v1767
      %1769 = vdwg.mxu0
      %v1770 = vadd.f32 %v1535, %v1724
      %v1771 = vadd.f32 %v1536, %v1726
      %v1772 = vadd.f32 %v1537, %v1730
      %v1773 = vadd.f32 %v1538, %v1732
      %v1774 = vadd.f32 %v1539, %v1736
      %v1775 = vadd.f32 %v1540, %v1738
      %v1776 = vadd.f32 %v1541, %v1742
      %v1777 = vadd.f32 %v1542, %v1744
      %v1778 = vadd.f32 %v1543, %v1748
      %v1779 = vadd.f32 %v1544, %v1750
      %v1780 = vadd.f32 %v1545, %v1754
      %v1781 = vadd.f32 %v1546, %v1756
      %v1782 = vadd.f32 %v1547, %v1760
      %v1783 = vadd.f32 %v1548, %v1762
      %v1784 = vadd.f32 %v1549, %v1766
      %v1785 = vadd.f32 %v1550, %v1768
      %1786 = vrot.lane.b32.xlu0 %v336, 15
      %v1787 = vpop.permute.xlu0 %1786
      %1788 = vrot.lane.b32.xlu0 %v338, 15
      %v1789 = vpop.permute.xlu0 %1788
      %1790 = vrot.lane.b32.xlu0 %v340, 15
      %v1791 = vpop.permute.xlu0 %1790
      %1792 = vrot.lane.b32.xlu0 %v342, 15
      %v1793 = vpop.permute.xlu0 %1792
      %1794 = vrot.lane.b32.xlu0 %v344, 15
      %v1795 = vpop.permute.xlu0 %1794
      %1796 = vrot.lane.b32.xlu0 %v346, 15
      %v1797 = vpop.permute.xlu0 %1796
      %1798 = vrot.lane.b32.xlu0 %v348, 15
      %v1799 = vpop.permute.xlu0 %1798
      %1800 = vrot.lane.b32.xlu0 %v350, 15
      %v1801 = vpop.permute.xlu0 %1800
      %1802 = vrot.lane.b32.xlu0 %v337, 15
      %v1803 = vpop.permute.xlu0 %1802
      %1804 = vrot.lane.b32.xlu0 %v339, 15
      %v1805 = vpop.permute.xlu0 %1804
      %1806 = vrot.lane.b32.xlu0 %v341, 15
      %v1807 = vpop.permute.xlu0 %1806
      %1808 = vrot.lane.b32.xlu0 %v343, 15
      %v1809 = vpop.permute.xlu0 %1808
      %1810 = vrot.lane.b32.xlu0 %v345, 15
      %v1811 = vpop.permute.xlu0 %1810
      %1812 = vrot.lane.b32.xlu0 %v347, 15
      %v1813 = vpop.permute.xlu0 %1812
      %1814 = vrot.lane.b32.xlu0 %v349, 15
      %v1815 = vpop.permute.xlu0 %1814
      %1816 = vrot.lane.b32.xlu0 %v351, 15
      %v1817 = vpop.permute.xlu0 %1816
      %vm1818 = vcmp.lt.s32.totalorder %v1348, 15
      %v1819 = vsel %vm1818, %v1787, %v1803
      %v1820 = vsel %vm1818, %v1789, %v1805
      %v1821 = vsel %vm1818, %v1791, %v1807
      %v1822 = vsel %vm1818, %v1793, %v1809
      %v1823 = vsel %vm1818, %v1795, %v1811
      %v1824 = vsel %vm1818, %v1797, %v1813
      %v1825 = vsel %vm1818, %v1799, %v1815
      %v1826 = vsel %vm1818, %v1801, %v1817
      %v1827 = vsel %vm1818, %v1803, %v1787
      %v1828 = vsel %vm1818, %v1805, %v1789
      %v1829 = vsel %vm1818, %v1807, %v1791
      %v1830 = vsel %vm1818, %v1809, %v1793
      %v1831 = vsel %vm1818, %v1811, %v1795
      %v1832 = vsel %vm1818, %v1813, %v1797
      %v1833 = vsel %vm1818, %v1815, %v1799
      %v1834 = vsel %vm1818, %v1817, %v1801
      %v1835 = vlaneseq
      %v1836 = vshrl.u32 %v1835, 7
      %v1837 = vsub.s32 2, %v1836
      %v1838 = vrot.slane %v1271, %v1837
      %v1839 = vlaneseq
      %v1840 = vshrl.u32 %v1839, 7
      %v1841 = vsub.s32 2, %v1840
      %v1842 = vrot.slane %v1272, %v1841
      %v1843 = vmul.f32 %v1827, %v1838
      %v1844 = vmul.f32 %v1819, %v1842
      %v1845 = vmul.f32 %v1828, %v1838
      %v1846 = vmul.f32 %v1820, %v1842
      %v1847 = vmul.f32 %v1829, %v1838
      %v1848 = vmul.f32 %v1821, %v1842
      %v1849 = vmul.f32 %v1830, %v1838
      %v1850 = vmul.f32 %v1822, %v1842
      %v1851 = vmul.f32 %v1831, %v1838
      %v1852 = vmul.f32 %v1823, %v1842
      %v1853 = vmul.f32 %v1832, %v1838
      %v1854 = vmul.f32 %v1824, %v1842
      %v1855 = vmul.f32 %v1833, %v1838
      %v1856 = vmul.f32 %v1825, %v1842
      %v1857 = vmul.f32 %v1834, %v1838
      %v1858 = vmul.f32 %v1826, %v1842
      %s1859 = scalar_lea.vmem %s4, 128
      %v1860 = vld [vmem:[%s1859] sm:$0xff]
      %v1861 = vld [vmem:[%s1859 + $0x8] sm:$0xff]
      %v1862 = vld [vmem:[%s1859 + $0x10] sm:$0xff]
      %v1863 = vld [vmem:[%s1859 + $0x18] sm:$0xff]
      %v1864 = vld [vmem:[%s1859 + $0x20] sm:$0xff]
      %v1865 = vld [vmem:[%s1859 + $0x28] sm:$0xff]
      %v1866 = vld [vmem:[%s1859 + $0x30] sm:$0xff]
      %v1867 = vld [vmem:[%s1859 + $0x38] sm:$0xff]
      %v1869 = vsel %vm545, %v1860, 0
      %v1872 = vsel %vm545, %v1861, 0
      %v1875 = vsel %vm545, %v1862, 0
      %v1878 = vsel %vm545, %v1863, 0
      %v1881 = vsel %vm545, %v1864, 0
      %v1884 = vsel %vm545, %v1865, 0
      %v1887 = vsel %vm545, %v1866, 0
      %v1890 = vsel %vm545, %v1867, 0
      %1892 = vmatprep.subr.mxu0 %v1844
      %1893 = vmatpush1.msra.mxu0 %v1843
      %1894 = vmatprep.subr.mxu0 %v1846
      %1895 = vmatpush1.msra.mxu0 %v1845
      %1896 = vmatprep.subr.mxu0 %v1848
      %1897 = vmatpush1.msra.mxu0 %v1847
      %1898 = vmatprep.subr.mxu0 %v1850
      %1899 = vmatpush1.msra.mxu0 %v1849
      %1900 = vmatprep.subr.mxu0 %v1852
      %1901 = vmatpush1.msra.mxu0 %v1851
      %1902 = vmatprep.subr.mxu0 %v1854
      %1903 = vmatpush1.msra.mxu0 %v1853
      %1904 = vmatprep.subr.mxu0 %v1856
      %1905 = vmatpush1.msra.mxu0 %v1855
      %1906 = vmatprep.subr.mxu0 %v1858
      %1907 = vmatpush1.msra.mxu0 %v1857
      %1908 = vmatprep.subr.mxu0 0.0
      %1909 = vmatpush1.msra.mxu0 0.0
      %1910 = vmatprep.subr.mxu0 0.0
      %1911 = vmatpush1.msra.mxu0 0.0
      %1912 = vmatprep.subr.mxu0 0.0
      %1913 = vmatpush1.msra.mxu0 0.0
      %1914 = vmatprep.subr.mxu0 0.0
      %1915 = vmatpush1.msra.mxu0 0.0
      %1916 = vmatprep.subr.mxu0 0.0
      %1917 = vmatpush1.msra.mxu0 0.0
      %1918 = vmatprep.subr.mxu0 0.0
      %1919 = vmatpush1.msra.mxu0 0.0
      %1920 = vmatprep.subr.mxu0 0.0
      %1921 = vmatpush1.msra.mxu0 0.0
      %1922 = vmatprep.subr.mxu0 0.0
      %1923 = vmatpush1.msra.mxu0 0.0
      %1924 = vmatprep.subr.mxu0 0.0
      %1925 = vmatpush1.msra.mxu0 0.0
      %1926 = vmatprep.subr.mxu0 0.0
      %1927 = vmatpush1.msra.mxu0 0.0
      %1928 = vmatprep.subr.mxu0 0.0
      %1929 = vmatpush1.msra.mxu0 0.0
      %1930 = vmatprep.subr.mxu0 0.0
      %1931 = vmatpush1.msra.mxu0 0.0
      %1932 = vmatprep.subr.mxu0 0.0
      %1933 = vmatpush1.msra.mxu0 0.0
      %1934 = vmatprep.subr.mxu0 0.0
      %1935 = vmatpush1.msra.mxu0 0.0
      %1936 = vmatprep.subr.mxu0 0.0
      %1937 = vmatpush1.msra.mxu0 0.0
      %1938 = vmatprep.subr.mxu0 0.0
      %1939 = vmatpush1.msra.mxu0 0.0
      %1940 = vmatprep.subr.mxu0 0.0
      %1941 = vmatpush1.msra.mxu0 0.0
      %1942 = vmatprep.subr.mxu0 0.0
      %1943 = vmatpush1.msra.mxu0 0.0
      %1944 = vmatprep.subr.mxu0 0.0
      %1945 = vmatpush1.msra.mxu0 0.0
      %1946 = vmatprep.subr.mxu0 0.0
      %1947 = vmatpush1.msra.mxu0 0.0
      %1948 = vmatprep.subr.mxu0 0.0
      %1949 = vmatpush1.msra.mxu0 0.0
      %1950 = vmatprep.subr.mxu0 0.0
      %1951 = vmatpush1.msra.mxu0 0.0
      %1952 = vmatprep.subr.mxu0 0.0
      %1953 = vmatpush1.msra.mxu0 0.0
      %1954 = vmatprep.subr.mxu0 0.0
      %1955 = vmatpush1.msra.mxu0 0.0
      %1956 = vmatprep.mubr.f32.mxu0 0.0
      %1957 = vmatmul.mubr.f32.gmra.mrb[0].mxu0 %v1869
      %v1958 = vpop.f32.mrb[0].mxu0
      %v1959 = vadd.f32 0.0, %v1958
      %v1960 = vpop.f32.mrb[0].mxu0
      %v1961 = vadd.f32 0.0, %v1960
      %1962 = vmatprep.mubr.f32.mxu0 0.0
      %1963 = vmatmul.mubr.f32.gmra.mrb[0].mxu0 %v1872
      %v1964 = vpop.f32.mrb[0].mxu0
      %v1965 = vadd.f32 0.0, %v1964
      %v1966 = vpop.f32.mrb[0].mxu0
      %v1967 = vadd.f32 0.0, %v1966
      %1968 = vmatprep.mubr.f32.mxu0 0.0
      %1969 = vmatmul.mubr.f32.gmra.mrb[0].mxu0 %v1875
      %v1970 = vpop.f32.mrb[0].mxu0
      %v1971 = vadd.f32 0.0, %v1970
      %v1972 = vpop.f32.mrb[0].mxu0
      %v1973 = vadd.f32 0.0, %v1972
      %1974 = vmatprep.mubr.f32.mxu0 0.0
      %1975 = vmatmul.mubr.f32.gmra.mrb[0].mxu0 %v1878
      %v1976 = vpop.f32.mrb[0].mxu0
      %v1977 = vadd.f32 0.0, %v1976
      %v1978 = vpop.f32.mrb[0].mxu0
      %v1979 = vadd.f32 0.0, %v1978
      %1980 = vmatprep.mubr.f32.mxu0 0.0
      %1981 = vmatmul.mubr.f32.gmra.mrb[0].mxu0 %v1881
      %v1982 = vpop.f32.mrb[0].mxu0
      %v1983 = vadd.f32 0.0, %v1982
      %v1984 = vpop.f32.mrb[0].mxu0
      %v1985 = vadd.f32 0.0, %v1984
      %1986 = vmatprep.mubr.f32.mxu0 0.0
      %1987 = vmatmul.mubr.f32.gmra.mrb[0].mxu0 %v1884
      %v1988 = vpop.f32.mrb[0].mxu0
      %v1989 = vadd.f32 0.0, %v1988
      %v1990 = vpop.f32.mrb[0].mxu0
      %v1991 = vadd.f32 0.0, %v1990
      %1992 = vmatprep.mubr.f32.mxu0 0.0
      %1993 = vmatmul.mubr.f32.gmra.mrb[0].mxu0 %v1887
      %v1994 = vpop.f32.mrb[0].mxu0
      %v1995 = vadd.f32 0.0, %v1994
      %v1996 = vpop.f32.mrb[0].mxu0
      %v1997 = vadd.f32 0.0, %v1996
      %1998 = vmatprep.mubr.f32.mxu0 0.0
      %1999 = vmatmul.mubr.f32.gmra.mrb[0].mxu0 %v1890
      %v2000 = vpop.f32.mrb[0].mxu0
      %v2001 = vadd.f32 0.0, %v2000
      %v2002 = vpop.f32.mrb[0].mxu0
      %v2003 = vadd.f32 0.0, %v2002
      %2004 = vdwg.mxu0
      %v2005 = vadd.f32 %v1770, %v1959
      %v2006 = vadd.f32 %v1771, %v1961
      %v2007 = vadd.f32 %v1772, %v1965
      %v2008 = vadd.f32 %v1773, %v1967
      %v2009 = vadd.f32 %v1774, %v1971
      %v2010 = vadd.f32 %v1775, %v1973
      %v2011 = vadd.f32 %v1776, %v1977
      %v2012 = vadd.f32 %v1777, %v1979
      %v2013 = vadd.f32 %v1778, %v1983
      %v2014 = vadd.f32 %v1779, %v1985
      %v2015 = vadd.f32 %v1780, %v1989
      %v2016 = vadd.f32 %v1781, %v1991
      %v2017 = vadd.f32 %v1782, %v1995
      %v2018 = vadd.f32 %v1783, %v1997
      %v2019 = vadd.f32 %v1784, %v2001
      %v2020 = vadd.f32 %v1785, %v2003
      %2021 = vrot.lane.b32.xlu0 %v336, 1
      %v2022 = vpop.permute.xlu0 %2021
      %2023 = vrot.lane.b32.xlu0 %v338, 1
      %v2024 = vpop.permute.xlu0 %2023
      %2025 = vrot.lane.b32.xlu0 %v340, 1
      %v2026 = vpop.permute.xlu0 %2025
      %2027 = vrot.lane.b32.xlu0 %v342, 1
      %v2028 = vpop.permute.xlu0 %2027
      %2029 = vrot.lane.b32.xlu0 %v344, 1
      %v2030 = vpop.permute.xlu0 %2029
      %2031 = vrot.lane.b32.xlu0 %v346, 1
      %v2032 = vpop.permute.xlu0 %2031
      %2033 = vrot.lane.b32.xlu0 %v348, 1
      %v2034 = vpop.permute.xlu0 %2033
      %2035 = vrot.lane.b32.xlu0 %v350, 1
      %v2036 = vpop.permute.xlu0 %2035
      %2037 = vrot.lane.b32.xlu0 %v337, 1
      %v2038 = vpop.permute.xlu0 %2037
      %2039 = vrot.lane.b32.xlu0 %v339, 1
      %v2040 = vpop.permute.xlu0 %2039
      %2041 = vrot.lane.b32.xlu0 %v341, 1
      %v2042 = vpop.permute.xlu0 %2041
      %2043 = vrot.lane.b32.xlu0 %v343, 1
      %v2044 = vpop.permute.xlu0 %2043
      %2045 = vrot.lane.b32.xlu0 %v345, 1
      %v2046 = vpop.permute.xlu0 %2045
      %2047 = vrot.lane.b32.xlu0 %v347, 1
      %v2048 = vpop.permute.xlu0 %2047
      %2049 = vrot.lane.b32.xlu0 %v349, 1
      %v2050 = vpop.permute.xlu0 %2049
      %2051 = vrot.lane.b32.xlu0 %v351, 1
      %v2052 = vpop.permute.xlu0 %2051
      %vm2053 = vcmp.lt.s32.totalorder %v1348, 1
      %v2054 = vsel %vm2053, %v2022, %v2038
      %v2055 = vsel %vm2053, %v2024, %v2040
      %v2056 = vsel %vm2053, %v2026, %v2042
      %v2057 = vsel %vm2053, %v2028, %v2044
      %v2058 = vsel %vm2053, %v2030, %v2046
      %v2059 = vsel %vm2053, %v2032, %v2048
      %v2060 = vsel %vm2053, %v2034, %v2050
      %v2061 = vsel %vm2053, %v2036, %v2052
      %v2062 = vsel %vm2053, %v2038, %v2022
      %v2063 = vsel %vm2053, %v2040, %v2024
      %v2064 = vsel %vm2053, %v2042, %v2026
      %v2065 = vsel %vm2053, %v2044, %v2028
      %v2066 = vsel %vm2053, %v2046, %v2030
      %v2067 = vsel %vm2053, %v2048, %v2032
      %v2068 = vsel %vm2053, %v2050, %v2034
      %v2069 = vsel %vm2053, %v2052, %v2036
      %v2070 = vlaneseq
      %v2071 = vshrl.u32 %v2070, 7
      %v2072 = vsub.s32 3, %v2071
      %v2073 = vrot.slane %v1271, %v2072
      %v2074 = vlaneseq
      %v2075 = vshrl.u32 %v2074, 7
      %v2076 = vsub.s32 3, %v2075
      %v2077 = vrot.slane %v1272, %v2076
      %v2078 = vmul.f32 %v2062, %v2073
      %v2079 = vmul.f32 %v2054, %v2077
      %v2080 = vmul.f32 %v2063, %v2073
      %v2081 = vmul.f32 %v2055, %v2077
      %v2082 = vmul.f32 %v2064, %v2073
      %v2083 = vmul.f32 %v2056, %v2077
      %v2084 = vmul.f32 %v2065, %v2073
      %v2085 = vmul.f32 %v2057, %v2077
      %v2086 = vmul.f32 %v2066, %v2073
      %v2087 = vmul.f32 %v2058, %v2077
      %v2088 = vmul.f32 %v2067, %v2073
      %v2089 = vmul.f32 %v2059, %v2077
      %v2090 = vmul.f32 %v2068, %v2073
      %v2091 = vmul.f32 %v2060, %v2077
      %v2092 = vmul.f32 %v2069, %v2073
      %v2093 = vmul.f32 %v2061, %v2077
      %s2094 = scalar_lea.vmem %s4, 192
      %v2095 = vld [vmem:[%s2094] sm:$0xff]
      %v2096 = vld [vmem:[%s2094 + $0x8] sm:$0xff]
      %v2097 = vld [vmem:[%s2094 + $0x10] sm:$0xff]
      %v2098 = vld [vmem:[%s2094 + $0x18] sm:$0xff]
      %v2099 = vld [vmem:[%s2094 + $0x20] sm:$0xff]
      %v2100 = vld [vmem:[%s2094 + $0x28] sm:$0xff]
      %v2101 = vld [vmem:[%s2094 + $0x30] sm:$0xff]
      %v2102 = vld [vmem:[%s2094 + $0x38] sm:$0xff]
      %v2104 = vsel %vm545, %v2095, 0
      %v2107 = vsel %vm545, %v2096, 0
      %v2110 = vsel %vm545, %v2097, 0
      %v2113 = vsel %vm545, %v2098, 0
      %v2116 = vsel %vm545, %v2099, 0
      %v2119 = vsel %vm545, %v2100, 0
      %v2122 = vsel %vm545, %v2101, 0
      %v2125 = vsel %vm545, %v2102, 0
      %2127 = vmatprep.subr.mxu0 %v2079
      %2128 = vmatpush1.msra.mxu0 %v2078
      %2129 = vmatprep.subr.mxu0 %v2081
      %2130 = vmatpush1.msra.mxu0 %v2080
      %2131 = vmatprep.subr.mxu0 %v2083
      %2132 = vmatpush1.msra.mxu0 %v2082
      %2133 = vmatprep.subr.mxu0 %v2085
      %2134 = vmatpush1.msra.mxu0 %v2084
      %2135 = vmatprep.subr.mxu0 %v2087
      %2136 = vmatpush1.msra.mxu0 %v2086
      %2137 = vmatprep.subr.mxu0 %v2089
      %2138 = vmatpush1.msra.mxu0 %v2088
      %2139 = vmatprep.subr.mxu0 %v2091
      %2140 = vmatpush1.msra.mxu0 %v2090
      %2141 = vmatprep.subr.mxu0 %v2093
      %2142 = vmatpush1.msra.mxu0 %v2092
      %2143 = vmatprep.subr.mxu0 0.0
      %2144 = vmatpush1.msra.mxu0 0.0
      %2145 = vmatprep.subr.mxu0 0.0
      %2146 = vmatpush1.msra.mxu0 0.0
      %2147 = vmatprep.subr.mxu0 0.0
      %2148 = vmatpush1.msra.mxu0 0.0
      %2149 = vmatprep.subr.mxu0 0.0
      %2150 = vmatpush1.msra.mxu0 0.0
      %2151 = vmatprep.subr.mxu0 0.0
      %2152 = vmatpush1.msra.mxu0 0.0
      %2153 = vmatprep.subr.mxu0 0.0
      %2154 = vmatpush1.msra.mxu0 0.0
      %2155 = vmatprep.subr.mxu0 0.0
      %2156 = vmatpush1.msra.mxu0 0.0
      %2157 = vmatprep.subr.mxu0 0.0
      %2158 = vmatpush1.msra.mxu0 0.0
      %2159 = vmatprep.subr.mxu0 0.0
      %2160 = vmatpush1.msra.mxu0 0.0
      %2161 = vmatprep.subr.mxu0 0.0
      %2162 = vmatpush1.msra.mxu0 0.0
      %2163 = vmatprep.subr.mxu0 0.0
      %2164 = vmatpush1.msra.mxu0 0.0
      %2165 = vmatprep.subr.mxu0 0.0
      %2166 = vmatpush1.msra.mxu0 0.0
      %2167 = vmatprep.subr.mxu0 0.0
      %2168 = vmatpush1.msra.mxu0 0.0
      %2169 = vmatprep.subr.mxu0 0.0
      %2170 = vmatpush1.msra.mxu0 0.0
      %2171 = vmatprep.subr.mxu0 0.0
      %2172 = vmatpush1.msra.mxu0 0.0
      %2173 = vmatprep.subr.mxu0 0.0
      %2174 = vmatpush1.msra.mxu0 0.0
      %2175 = vmatprep.subr.mxu0 0.0
      %2176 = vmatpush1.msra.mxu0 0.0
      %2177 = vmatprep.subr.mxu0 0.0
      %2178 = vmatpush1.msra.mxu0 0.0
      %2179 = vmatprep.subr.mxu0 0.0
      %2180 = vmatpush1.msra.mxu0 0.0
      %2181 = vmatprep.subr.mxu0 0.0
      %2182 = vmatpush1.msra.mxu0 0.0
      %2183 = vmatprep.subr.mxu0 0.0
      %2184 = vmatpush1.msra.mxu0 0.0
      %2185 = vmatprep.subr.mxu0 0.0
      %2186 = vmatpush1.msra.mxu0 0.0
      %2187 = vmatprep.subr.mxu0 0.0
      %2188 = vmatpush1.msra.mxu0 0.0
      %2189 = vmatprep.subr.mxu0 0.0
      %2190 = vmatpush1.msra.mxu0 0.0
      %2191 = vmatprep.mubr.f32.mxu0 0.0
      %2192 = vmatmul.mubr.f32.gmra.mrb[0].mxu0 %v2104
      %v2193 = vpop.f32.mrb[0].mxu0
      %v2194 = vadd.f32 0.0, %v2193
      %v2195 = vpop.f32.mrb[0].mxu0
      %v2196 = vadd.f32 0.0, %v2195
      %2197 = vmatprep.mubr.f32.mxu0 0.0
      %2198 = vmatmul.mubr.f32.gmra.mrb[0].mxu0 %v2107
      %v2199 = vpop.f32.mrb[0].mxu0
      %v2200 = vadd.f32 0.0, %v2199
      %v2201 = vpop.f32.mrb[0].mxu0
      %v2202 = vadd.f32 0.0, %v2201
      %2203 = vmatprep.mubr.f32.mxu0 0.0
      %2204 = vmatmul.mubr.f32.gmra.mrb[0].mxu0 %v2110
      %v2205 = vpop.f32.mrb[0].mxu0
      %v2206 = vadd.f32 0.0, %v2205
      %v2207 = vpop.f32.mrb[0].mxu0
      %v2208 = vadd.f32 0.0, %v2207
      %2209 = vmatprep.mubr.f32.mxu0 0.0
      %2210 = vmatmul.mubr.f32.gmra.mrb[0].mxu0 %v2113
      %v2211 = vpop.f32.mrb[0].mxu0
      %v2212 = vadd.f32 0.0, %v2211
      %v2213 = vpop.f32.mrb[0].mxu0
      %v2214 = vadd.f32 0.0, %v2213
      %2215 = vmatprep.mubr.f32.mxu0 0.0
      %2216 = vmatmul.mubr.f32.gmra.mrb[0].mxu0 %v2116
      %v2217 = vpop.f32.mrb[0].mxu0
      %v2218 = vadd.f32 0.0, %v2217
      %v2219 = vpop.f32.mrb[0].mxu0
      %v2220 = vadd.f32 0.0, %v2219
      %2221 = vmatprep.mubr.f32.mxu0 0.0
      %2222 = vmatmul.mubr.f32.gmra.mrb[0].mxu0 %v2119
      %v2223 = vpop.f32.mrb[0].mxu0
      %v2224 = vadd.f32 0.0, %v2223
      %v2225 = vpop.f32.mrb[0].mxu0
      %v2226 = vadd.f32 0.0, %v2225
      %2227 = vmatprep.mubr.f32.mxu0 0.0
      %2228 = vmatmul.mubr.f32.gmra.mrb[0].mxu0 %v2122
      %v2229 = vpop.f32.mrb[0].mxu0
      %v2230 = vadd.f32 0.0, %v2229
      %v2231 = vpop.f32.mrb[0].mxu0
      %v2232 = vadd.f32 0.0, %v2231
      %2233 = vmatprep.mubr.f32.mxu0 0.0
      %2234 = vmatmul.mubr.f32.gmra.mrb[0].mxu0 %v2125
      %v2235 = vpop.f32.mrb[0].mxu0
      %v2236 = vadd.f32 0.0, %v2235
      %v2237 = vpop.f32.mrb[0].mxu0
      %v2238 = vadd.f32 0.0, %v2237
      %2239 = vdwg.mxu0
      %v2240 = vadd.f32 %v2005, %v2194
      %v2241 = vadd.f32 %v2006, %v2196
      %v2242 = vadd.f32 %v2007, %v2200
      %v2243 = vadd.f32 %v2008, %v2202
      %v2244 = vadd.f32 %v2009, %v2206
      %v2245 = vadd.f32 %v2010, %v2208
      %v2246 = vadd.f32 %v2011, %v2212
      %v2247 = vadd.f32 %v2012, %v2214
      %v2248 = vadd.f32 %v2013, %v2218
      %v2249 = vadd.f32 %v2014, %v2220
      %v2250 = vadd.f32 %v2015, %v2224
      %v2251 = vadd.f32 %v2016, %v2226
      %v2252 = vadd.f32 %v2017, %v2230
      %v2253 = vadd.f32 %v2018, %v2232
      %v2254 = vadd.f32 %v2019, %v2236
      %v2255 = vadd.f32 %v2020, %v2238
      %v2256 = vlaneseq
      %v2257 = vshrl.u32 %v2256, 7
      %v2258 = vsub.s32 4, %v2257
      %v2259 = vrot.slane %v1271, %v2258
      %v2260 = vlaneseq
      %v2261 = vshrl.u32 %v2260, 7
      %v2262 = vsub.s32 4, %v2261
      %v2263 = vrot.slane %v1272, %v2262
      %v2264 = vmul.f32 %v336, %v2259
      %v2265 = vmul.f32 %v337, %v2263
      %v2266 = vmul.f32 %v338, %v2259
      %v2267 = vmul.f32 %v339, %v2263
      %v2268 = vmul.f32 %v340, %v2259
      %v2269 = vmul.f32 %v341, %v2263
      %v2270 = vmul.f32 %v342, %v2259
      %v2271 = vmul.f32 %v343, %v2263
      %v2272 = vmul.f32 %v344, %v2259
      %v2273 = vmul.f32 %v345, %v2263
      %v2274 = vmul.f32 %v346, %v2259
      %v2275 = vmul.f32 %v347, %v2263
      %v2276 = vmul.f32 %v348, %v2259
      %v2277 = vmul.f32 %v349, %v2263
      %v2278 = vmul.f32 %v350, %v2259
      %v2279 = vmul.f32 %v351, %v2263
      %s2280 = scalar_lea.vmem %s4, 256
      %v2281 = vld [vmem:[%s2280] sm:$0xff]
      %v2282 = vld [vmem:[%s2280 + $0x8] sm:$0xff]
      %v2283 = vld [vmem:[%s2280 + $0x10] sm:$0xff]
      %v2284 = vld [vmem:[%s2280 + $0x18] sm:$0xff]
      %v2285 = vld [vmem:[%s2280 + $0x20] sm:$0xff]
      %v2286 = vld [vmem:[%s2280 + $0x28] sm:$0xff]
      %v2287 = vld [vmem:[%s2280 + $0x30] sm:$0xff]
      %v2288 = vld [vmem:[%s2280 + $0x38] sm:$0xff]
      %v2290 = vsel %vm545, %v2281, 0
      %v2293 = vsel %vm545, %v2282, 0
      %v2296 = vsel %vm545, %v2283, 0
      %v2299 = vsel %vm545, %v2284, 0
      %v2302 = vsel %vm545, %v2285, 0
      %v2305 = vsel %vm545, %v2286, 0
      %v2308 = vsel %vm545, %v2287, 0
      %v2311 = vsel %vm545, %v2288, 0
      %2313 = vmatprep.subr.mxu0 %v2265
      %2314 = vmatpush1.msra.mxu0 %v2264
      %2315 = vmatprep.subr.mxu0 %v2267
      %2316 = vmatpush1.msra.mxu0 %v2266
      %2317 = vmatprep.subr.mxu0 %v2269
      %2318 = vmatpush1.msra.mxu0 %v2268
      %2319 = vmatprep.subr.mxu0 %v2271
      %2320 = vmatpush1.msra.mxu0 %v2270
      %2321 = vmatprep.subr.mxu0 %v2273
      %2322 = vmatpush1.msra.mxu0 %v2272
      %2323 = vmatprep.subr.mxu0 %v2275
      %2324 = vmatpush1.msra.mxu0 %v2274
      %2325 = vmatprep.subr.mxu0 %v2277
      %2326 = vmatpush1.msra.mxu0 %v2276
      %2327 = vmatprep.subr.mxu0 %v2279
      %2328 = vmatpush1.msra.mxu0 %v2278
      %2329 = vmatprep.subr.mxu0 0.0
      %2330 = vmatpush1.msra.mxu0 0.0
      %2331 = vmatprep.subr.mxu0 0.0
      %2332 = vmatpush1.msra.mxu0 0.0
      %2333 = vmatprep.subr.mxu0 0.0
      %2334 = vmatpush1.msra.mxu0 0.0
      %2335 = vmatprep.subr.mxu0 0.0
      %2336 = vmatpush1.msra.mxu0 0.0
      %2337 = vmatprep.subr.mxu0 0.0
      %2338 = vmatpush1.msra.mxu0 0.0
      %2339 = vmatprep.subr.mxu0 0.0
      %2340 = vmatpush1.msra.mxu0 0.0
      %2341 = vmatprep.subr.mxu0 0.0
      %2342 = vmatpush1.msra.mxu0 0.0
      %2343 = vmatprep.subr.mxu0 0.0
      %2344 = vmatpush1.msra.mxu0 0.0
      %2345 = vmatprep.subr.mxu0 0.0
      %2346 = vmatpush1.msra.mxu0 0.0
      %2347 = vmatprep.subr.mxu0 0.0
      %2348 = vmatpush1.msra.mxu0 0.0
      %2349 = vmatprep.subr.mxu0 0.0
      %2350 = vmatpush1.msra.mxu0 0.0
      %2351 = vmatprep.subr.mxu0 0.0
      %2352 = vmatpush1.msra.mxu0 0.0
      %2353 = vmatprep.subr.mxu0 0.0
      %2354 = vmatpush1.msra.mxu0 0.0
      %2355 = vmatprep.subr.mxu0 0.0
      %2356 = vmatpush1.msra.mxu0 0.0
      %2357 = vmatprep.subr.mxu0 0.0
      %2358 = vmatpush1.msra.mxu0 0.0
      %2359 = vmatprep.subr.mxu0 0.0
      %2360 = vmatpush1.msra.mxu0 0.0
      %2361 = vmatprep.subr.mxu0 0.0
      %2362 = vmatpush1.msra.mxu0 0.0
      %2363 = vmatprep.subr.mxu0 0.0
      %2364 = vmatpush1.msra.mxu0 0.0
      %2365 = vmatprep.subr.mxu0 0.0
      %2366 = vmatpush1.msra.mxu0 0.0
      %2367 = vmatprep.subr.mxu0 0.0
      %2368 = vmatpush1.msra.mxu0 0.0
      %2369 = vmatprep.subr.mxu0 0.0
      %2370 = vmatpush1.msra.mxu0 0.0
      %2371 = vmatprep.subr.mxu0 0.0
      %2372 = vmatpush1.msra.mxu0 0.0
      %2373 = vmatprep.subr.mxu0 0.0
      %2374 = vmatpush1.msra.mxu0 0.0
      %2375 = vmatprep.subr.mxu0 0.0
      %2376 = vmatpush1.msra.mxu0 0.0
      %2377 = vmatprep.mubr.f32.mxu0 0.0
      %2378 = vmatmul.mubr.f32.gmra.mrb[0].mxu0 %v2290
      %v2379 = vpop.f32.mrb[0].mxu0
      %v2380 = vadd.f32 0.0, %v2379
      %v2381 = vpop.f32.mrb[0].mxu0
      %v2382 = vadd.f32 0.0, %v2381
      %2383 = vmatprep.mubr.f32.mxu0 0.0
      %2384 = vmatmul.mubr.f32.gmra.mrb[0].mxu0 %v2293
      %v2385 = vpop.f32.mrb[0].mxu0
      %v2386 = vadd.f32 0.0, %v2385
      %v2387 = vpop.f32.mrb[0].mxu0
      %v2388 = vadd.f32 0.0, %v2387
      %2389 = vmatprep.mubr.f32.mxu0 0.0
      %2390 = vmatmul.mubr.f32.gmra.mrb[0].mxu0 %v2296
      %v2391 = vpop.f32.mrb[0].mxu0
      %v2392 = vadd.f32 0.0, %v2391
      %v2393 = vpop.f32.mrb[0].mxu0
      %v2394 = vadd.f32 0.0, %v2393
      %2395 = vmatprep.mubr.f32.mxu0 0.0
      %2396 = vmatmul.mubr.f32.gmra.mrb[0].mxu0 %v2299
      %v2397 = vpop.f32.mrb[0].mxu0
      %v2398 = vadd.f32 0.0, %v2397
      %v2399 = vpop.f32.mrb[0].mxu0
      %v2400 = vadd.f32 0.0, %v2399
      %2401 = vmatprep.mubr.f32.mxu0 0.0
      %2402 = vmatmul.mubr.f32.gmra.mrb[0].mxu0 %v2302
      %v2403 = vpop.f32.mrb[0].mxu0
      %v2404 = vadd.f32 0.0, %v2403
      %v2405 = vpop.f32.mrb[0].mxu0
      %v2406 = vadd.f32 0.0, %v2405
      %2407 = vmatprep.mubr.f32.mxu0 0.0
      %2408 = vmatmul.mubr.f32.gmra.mrb[0].mxu0 %v2305
      %v2409 = vpop.f32.mrb[0].mxu0
      %v2410 = vadd.f32 0.0, %v2409
      %v2411 = vpop.f32.mrb[0].mxu0
      %v2412 = vadd.f32 0.0, %v2411
      %2413 = vmatprep.mubr.f32.mxu0 0.0
      %2414 = vmatmul.mubr.f32.gmra.mrb[0].mxu0 %v2308
      %v2415 = vpop.f32.mrb[0].mxu0
      %v2416 = vadd.f32 0.0, %v2415
      %v2417 = vpop.f32.mrb[0].mxu0
      %v2418 = vadd.f32 0.0, %v2417
      %2419 = vmatprep.mubr.f32.mxu0 0.0
      %2420 = vmatmul.mubr.f32.gmra.mrb[0].mxu0 %v2311
      %v2421 = vpop.f32.mrb[0].mxu0
      %v2422 = vadd.f32 0.0, %v2421
      %v2423 = vpop.f32.mrb[0].mxu0
      %v2424 = vadd.f32 0.0, %v2423
      %2425 = vdwg.mxu0
      %v2426 = vadd.f32 %v2240, %v2380
      %v2427 = vadd.f32 %v2241, %v2382
      %v2428 = vadd.f32 %v2242, %v2386
      %v2429 = vadd.f32 %v2243, %v2388
      %v2430 = vadd.f32 %v2244, %v2392
      %v2431 = vadd.f32 %v2245, %v2394
      %v2432 = vadd.f32 %v2246, %v2398
      %v2433 = vadd.f32 %v2247, %v2400
      %v2434 = vadd.f32 %v2248, %v2404
      %v2435 = vadd.f32 %v2249, %v2406
      %v2436 = vadd.f32 %v2250, %v2410
      %v2437 = vadd.f32 %v2251, %v2412
      %v2438 = vadd.f32 %v2252, %v2416
      %v2439 = vadd.f32 %v2253, %v2418
      %v2440 = vadd.f32 %v2254, %v2422
      %v2441 = vadd.f32 %v2255, %v2424
      %2442 = vrot.lane.b32.xlu0 %v336, 127
      %v2443 = vpop.permute.xlu0 %2442
      %2444 = vrot.lane.b32.xlu0 %v338, 127
      %v2445 = vpop.permute.xlu0 %2444
      %2446 = vrot.lane.b32.xlu0 %v340, 127
      %v2447 = vpop.permute.xlu0 %2446
      %2448 = vrot.lane.b32.xlu0 %v342, 127
      %v2449 = vpop.permute.xlu0 %2448
      %2450 = vrot.lane.b32.xlu0 %v344, 127
      %v2451 = vpop.permute.xlu0 %2450
      %2452 = vrot.lane.b32.xlu0 %v346, 127
      %v2453 = vpop.permute.xlu0 %2452
      %2454 = vrot.lane.b32.xlu0 %v348, 127
      %v2455 = vpop.permute.xlu0 %2454
      %2456 = vrot.lane.b32.xlu0 %v350, 127
      %v2457 = vpop.permute.xlu0 %2456
      %2458 = vrot.lane.b32.xlu0 %v337, 127
      %v2459 = vpop.permute.xlu0 %2458
      %2460 = vrot.lane.b32.xlu0 %v339, 127
      %v2461 = vpop.permute.xlu0 %2460
      %2462 = vrot.lane.b32.xlu0 %v341, 127
      %v2463 = vpop.permute.xlu0 %2462
      %2464 = vrot.lane.b32.xlu0 %v343, 127
      %v2465 = vpop.permute.xlu0 %2464
      %2466 = vrot.lane.b32.xlu0 %v345, 127
      %v2467 = vpop.permute.xlu0 %2466
      %2468 = vrot.lane.b32.xlu0 %v347, 127
      %v2469 = vpop.permute.xlu0 %2468
      %2470 = vrot.lane.b32.xlu0 %v349, 127
      %v2471 = vpop.permute.xlu0 %2470
      %2472 = vrot.lane.b32.xlu0 %v351, 127
      %v2473 = vpop.permute.xlu0 %2472
      %vm2474 = vcmp.lt.s32.totalorder %v1348, 127
      %v2475 = vsel %vm2474, %v2443, %v2459
      %v2476 = vsel %vm2474, %v2445, %v2461
      %v2477 = vsel %vm2474, %v2447, %v2463
      %v2478 = vsel %vm2474, %v2449, %v2465
      %v2479 = vsel %vm2474, %v2451, %v2467
      %v2480 = vsel %vm2474, %v2453, %v2469
      %v2481 = vsel %vm2474, %v2455, %v2471
      %v2482 = vsel %vm2474, %v2457, %v2473
      %v2483 = vsel %vm2474, %v2459, %v2443
      %v2484 = vsel %vm2474, %v2461, %v2445
      %v2485 = vsel %vm2474, %v2463, %v2447
      %v2486 = vsel %vm2474, %v2465, %v2449
      %v2487 = vsel %vm2474, %v2467, %v2451
      %v2488 = vsel %vm2474, %v2469, %v2453
      %v2489 = vsel %vm2474, %v2471, %v2455
      %v2490 = vsel %vm2474, %v2473, %v2457
      %v2491 = vlaneseq
      %v2492 = vshrl.u32 %v2491, 7
      %v2493 = vsub.s32 5, %v2492
      %v2494 = vrot.slane %v1271, %v2493
      %v2495 = vlaneseq
      %v2496 = vshrl.u32 %v2495, 7
      %v2497 = vsub.s32 5, %v2496
      %v2498 = vrot.slane %v1272, %v2497
      %v2499 = vmul.f32 %v2475, %v2494
      %v2500 = vmul.f32 %v2483, %v2498
      %v2501 = vmul.f32 %v2476, %v2494
      %v2502 = vmul.f32 %v2484, %v2498
      %v2503 = vmul.f32 %v2477, %v2494
      %v2504 = vmul.f32 %v2485, %v2498
      %v2505 = vmul.f32 %v2478, %v2494
      %v2506 = vmul.f32 %v2486, %v2498
      %v2507 = vmul.f32 %v2479, %v2494
      %v2508 = vmul.f32 %v2487, %v2498
      %v2509 = vmul.f32 %v2480, %v2494
      %v2510 = vmul.f32 %v2488, %v2498
      %v2511 = vmul.f32 %v2481, %v2494
      %v2512 = vmul.f32 %v2489, %v2498
      %v2513 = vmul.f32 %v2482, %v2494
      %v2514 = vmul.f32 %v2490, %v2498
      %s2515 = scalar_lea.vmem %s4, 320
      %v2516 = vld [vmem:[%s2515] sm:$0xff]
      %v2517 = vld [vmem:[%s2515 + $0x8] sm:$0xff]
      %v2518 = vld [vmem:[%s2515 + $0x10] sm:$0xff]
      %v2519 = vld [vmem:[%s2515 + $0x18] sm:$0xff]
      %v2520 = vld [vmem:[%s2515 + $0x20] sm:$0xff]
      %v2521 = vld [vmem:[%s2515 + $0x28] sm:$0xff]
      %v2522 = vld [vmem:[%s2515 + $0x30] sm:$0xff]
      %v2523 = vld [vmem:[%s2515 + $0x38] sm:$0xff]
      %v2525 = vsel %vm545, %v2516, 0
      %v2528 = vsel %vm545, %v2517, 0
      %v2531 = vsel %vm545, %v2518, 0
      %v2534 = vsel %vm545, %v2519, 0
      %v2537 = vsel %vm545, %v2520, 0
      %v2540 = vsel %vm545, %v2521, 0
      %v2543 = vsel %vm545, %v2522, 0
      %v2546 = vsel %vm545, %v2523, 0
      %2548 = vmatprep.subr.mxu0 %v2500
      %2549 = vmatpush1.msra.mxu0 %v2499
      %2550 = vmatprep.subr.mxu0 %v2502
      %2551 = vmatpush1.msra.mxu0 %v2501
      %2552 = vmatprep.subr.mxu0 %v2504
      %2553 = vmatpush1.msra.mxu0 %v2503
      %2554 = vmatprep.subr.mxu0 %v2506
      %2555 = vmatpush1.msra.mxu0 %v2505
      %2556 = vmatprep.subr.mxu0 %v2508
      %2557 = vmatpush1.msra.mxu0 %v2507
      %2558 = vmatprep.subr.mxu0 %v2510
      %2559 = vmatpush1.msra.mxu0 %v2509
      %2560 = vmatprep.subr.mxu0 %v2512
      %2561 = vmatpush1.msra.mxu0 %v2511
      %2562 = vmatprep.subr.mxu0 %v2514
      %2563 = vmatpush1.msra.mxu0 %v2513
      %2564 = vmatprep.subr.mxu0 0.0
      %2565 = vmatpush1.msra.mxu0 0.0
      %2566 = vmatprep.subr.mxu0 0.0
      %2567 = vmatpush1.msra.mxu0 0.0
      %2568 = vmatprep.subr.mxu0 0.0
      %2569 = vmatpush1.msra.mxu0 0.0
      %2570 = vmatprep.subr.mxu0 0.0
      %2571 = vmatpush1.msra.mxu0 0.0
      %2572 = vmatprep.subr.mxu0 0.0
      %2573 = vmatpush1.msra.mxu0 0.0
      %2574 = vmatprep.subr.mxu0 0.0
      %2575 = vmatpush1.msra.mxu0 0.0
      %2576 = vmatprep.subr.mxu0 0.0
      %2577 = vmatpush1.msra.mxu0 0.0
      %2578 = vmatprep.subr.mxu0 0.0
      %2579 = vmatpush1.msra.mxu0 0.0
      %2580 = vmatprep.subr.mxu0 0.0
      %2581 = vmatpush1.msra.mxu0 0.0
      %2582 = vmatprep.subr.mxu0 0.0
      %2583 = vmatpush1.msra.mxu0 0.0
      %2584 = vmatprep.subr.mxu0 0.0
      %2585 = vmatpush1.msra.mxu0 0.0
      %2586 = vmatprep.subr.mxu0 0.0
      %2587 = vmatpush1.msra.mxu0 0.0
      %2588 = vmatprep.subr.mxu0 0.0
      %2589 = vmatpush1.msra.mxu0 0.0
      %2590 = vmatprep.subr.mxu0 0.0
      %2591 = vmatpush1.msra.mxu0 0.0
      %2592 = vmatprep.subr.mxu0 0.0
      %2593 = vmatpush1.msra.mxu0 0.0
      %2594 = vmatprep.subr.mxu0 0.0
      %2595 = vmatpush1.msra.mxu0 0.0
      %2596 = vmatprep.subr.mxu0 0.0
      %2597 = vmatpush1.msra.mxu0 0.0
      %2598 = vmatprep.subr.mxu0 0.0
      %2599 = vmatpush1.msra.mxu0 0.0
      %2600 = vmatprep.subr.mxu0 0.0
      %2601 = vmatpush1.msra.mxu0 0.0
      %2602 = vmatprep.subr.mxu0 0.0
      %2603 = vmatpush1.msra.mxu0 0.0
      %2604 = vmatprep.subr.mxu0 0.0
      %2605 = vmatpush1.msra.mxu0 0.0
      %2606 = vmatprep.subr.mxu0 0.0
      %2607 = vmatpush1.msra.mxu0 0.0
      %2608 = vmatprep.subr.mxu0 0.0
      %2609 = vmatpush1.msra.mxu0 0.0
      %2610 = vmatprep.subr.mxu0 0.0
      %2611 = vmatpush1.msra.mxu0 0.0
      %2612 = vmatprep.mubr.f32.mxu0 0.0
      %2613 = vmatmul.mubr.f32.gmra.mrb[0].mxu0 %v2525
      %v2614 = vpop.f32.mrb[0].mxu0
      %v2615 = vadd.f32 0.0, %v2614
      %v2616 = vpop.f32.mrb[0].mxu0
      %v2617 = vadd.f32 0.0, %v2616
      %2618 = vmatprep.mubr.f32.mxu0 0.0
      %2619 = vmatmul.mubr.f32.gmra.mrb[0].mxu0 %v2528
      %v2620 = vpop.f32.mrb[0].mxu0
      %v2621 = vadd.f32 0.0, %v2620
      %v2622 = vpop.f32.mrb[0].mxu0
      %v2623 = vadd.f32 0.0, %v2622
      %2624 = vmatprep.mubr.f32.mxu0 0.0
      %2625 = vmatmul.mubr.f32.gmra.mrb[0].mxu0 %v2531
      %v2626 = vpop.f32.mrb[0].mxu0
      %v2627 = vadd.f32 0.0, %v2626
      %v2628 = vpop.f32.mrb[0].mxu0
      %v2629 = vadd.f32 0.0, %v2628
      %2630 = vmatprep.mubr.f32.mxu0 0.0
      %2631 = vmatmul.mubr.f32.gmra.mrb[0].mxu0 %v2534
      %v2632 = vpop.f32.mrb[0].mxu0
      %v2633 = vadd.f32 0.0, %v2632
      %v2634 = vpop.f32.mrb[0].mxu0
      %v2635 = vadd.f32 0.0, %v2634
      %2636 = vmatprep.mubr.f32.mxu0 0.0
      %2637 = vmatmul.mubr.f32.gmra.mrb[0].mxu0 %v2537
      %v2638 = vpop.f32.mrb[0].mxu0
      %v2639 = vadd.f32 0.0, %v2638
      %v2640 = vpop.f32.mrb[0].mxu0
      %v2641 = vadd.f32 0.0, %v2640
      %2642 = vmatprep.mubr.f32.mxu0 0.0
      %2643 = vmatmul.mubr.f32.gmra.mrb[0].mxu0 %v2540
      %v2644 = vpop.f32.mrb[0].mxu0
      %v2645 = vadd.f32 0.0, %v2644
      %v2646 = vpop.f32.mrb[0].mxu0
      %v2647 = vadd.f32 0.0, %v2646
      %2648 = vmatprep.mubr.f32.mxu0 0.0
      %2649 = vmatmul.mubr.f32.gmra.mrb[0].mxu0 %v2543
      %v2650 = vpop.f32.mrb[0].mxu0
      %v2651 = vadd.f32 0.0, %v2650
      %v2652 = vpop.f32.mrb[0].mxu0
      %v2653 = vadd.f32 0.0, %v2652
      %2654 = vmatprep.mubr.f32.mxu0 0.0
      %2655 = vmatmul.mubr.f32.gmra.mrb[0].mxu0 %v2546
      %v2656 = vpop.f32.mrb[0].mxu0
      %v2657 = vadd.f32 0.0, %v2656
      %v2658 = vpop.f32.mrb[0].mxu0
      %v2659 = vadd.f32 0.0, %v2658
      %2660 = vdwg.mxu0
      %v2661 = vadd.f32 %v2426, %v2615
      %v2662 = vadd.f32 %v2427, %v2617
      %v2663 = vadd.f32 %v2428, %v2621
      %v2664 = vadd.f32 %v2429, %v2623
      %v2665 = vadd.f32 %v2430, %v2627
      %v2666 = vadd.f32 %v2431, %v2629
      %v2667 = vadd.f32 %v2432, %v2633
      %v2668 = vadd.f32 %v2433, %v2635
      %v2669 = vadd.f32 %v2434, %v2639
      %v2670 = vadd.f32 %v2435, %v2641
      %v2671 = vadd.f32 %v2436, %v2645
      %v2672 = vadd.f32 %v2437, %v2647
      %v2673 = vadd.f32 %v2438, %v2651
      %v2674 = vadd.f32 %v2439, %v2653
      %v2675 = vadd.f32 %v2440, %v2657
      %v2676 = vadd.f32 %v2441, %v2659
      %2677 = vrot.lane.b32.xlu0 %v336, 113
      %v2678 = vpop.permute.xlu0 %2677
      %2679 = vrot.lane.b32.xlu0 %v338, 113
      %v2680 = vpop.permute.xlu0 %2679
      %2681 = vrot.lane.b32.xlu0 %v340, 113
      %v2682 = vpop.permute.xlu0 %2681
      %2683 = vrot.lane.b32.xlu0 %v342, 113
      %v2684 = vpop.permute.xlu0 %2683
      %2685 = vrot.lane.b32.xlu0 %v344, 113
      %v2686 = vpop.permute.xlu0 %2685
      %2687 = vrot.lane.b32.xlu0 %v346, 113
      %v2688 = vpop.permute.xlu0 %2687
      %2689 = vrot.lane.b32.xlu0 %v348, 113
      %v2690 = vpop.permute.xlu0 %2689
      %2691 = vrot.lane.b32.xlu0 %v350, 113
      %v2692 = vpop.permute.xlu0 %2691
      %2693 = vrot.lane.b32.xlu0 %v337, 113
      %v2694 = vpop.permute.xlu0 %2693
      %2695 = vrot.lane.b32.xlu0 %v339, 113
      %v2696 = vpop.permute.xlu0 %2695
      %2697 = vrot.lane.b32.xlu0 %v341, 113
      %v2698 = vpop.permute.xlu0 %2697
      %2699 = vrot.lane.b32.xlu0 %v343, 113
      %v2700 = vpop.permute.xlu0 %2699
      %2701 = vrot.lane.b32.xlu0 %v345, 113
      %v2702 = vpop.permute.xlu0 %2701
      %2703 = vrot.lane.b32.xlu0 %v347, 113
      %v2704 = vpop.permute.xlu0 %2703
      %2705 = vrot.lane.b32.xlu0 %v349, 113
      %v2706 = vpop.permute.xlu0 %2705
      %2707 = vrot.lane.b32.xlu0 %v351, 113
      %v2708 = vpop.permute.xlu0 %2707
      %vm2709 = vcmp.lt.s32.totalorder %v1348, 113
      %v2710 = vsel %vm2709, %v2678, %v2694
      %v2711 = vsel %vm2709, %v2680, %v2696
      %v2712 = vsel %vm2709, %v2682, %v2698
      %v2713 = vsel %vm2709, %v2684, %v2700
      %v2714 = vsel %vm2709, %v2686, %v2702
      %v2715 = vsel %vm2709, %v2688, %v2704
      %v2716 = vsel %vm2709, %v2690, %v2706
      %v2717 = vsel %vm2709, %v2692, %v2708
      %v2718 = vsel %vm2709, %v2694, %v2678
      %v2719 = vsel %vm2709, %v2696, %v2680
      %v2720 = vsel %vm2709, %v2698, %v2682
      %v2721 = vsel %vm2709, %v2700, %v2684
      %v2722 = vsel %vm2709, %v2702, %v2686
      %v2723 = vsel %vm2709, %v2704, %v2688
      %v2724 = vsel %vm2709, %v2706, %v2690
      %v2725 = vsel %vm2709, %v2708, %v2692
      %v2726 = vlaneseq
      %v2727 = vshrl.u32 %v2726, 7
      %v2728 = vsub.s32 6, %v2727
      %v2729 = vrot.slane %v1271, %v2728
      %v2730 = vlaneseq
      %v2731 = vshrl.u32 %v2730, 7
      %v2732 = vsub.s32 6, %v2731
      %v2733 = vrot.slane %v1272, %v2732
      %v2734 = vmul.f32 %v2710, %v2729
      %v2735 = vmul.f32 %v2718, %v2733
      %v2736 = vmul.f32 %v2711, %v2729
      %v2737 = vmul.f32 %v2719, %v2733
      %v2738 = vmul.f32 %v2712, %v2729
      %v2739 = vmul.f32 %v2720, %v2733
      %v2740 = vmul.f32 %v2713, %v2729
      %v2741 = vmul.f32 %v2721, %v2733
      %v2742 = vmul.f32 %v2714, %v2729
      %v2743 = vmul.f32 %v2722, %v2733
      %v2744 = vmul.f32 %v2715, %v2729
      %v2745 = vmul.f32 %v2723, %v2733
      %v2746 = vmul.f32 %v2716, %v2729
      %v2747 = vmul.f32 %v2724, %v2733
      %v2748 = vmul.f32 %v2717, %v2729
      %v2749 = vmul.f32 %v2725, %v2733
      %s2750 = scalar_lea.vmem %s4, 384
      %v2751 = vld [vmem:[%s2750] sm:$0xff]
      %v2752 = vld [vmem:[%s2750 + $0x8] sm:$0xff]
      %v2753 = vld [vmem:[%s2750 + $0x10] sm:$0xff]
      %v2754 = vld [vmem:[%s2750 + $0x18] sm:$0xff]
      %v2755 = vld [vmem:[%s2750 + $0x20] sm:$0xff]
      %v2756 = vld [vmem:[%s2750 + $0x28] sm:$0xff]
      %v2757 = vld [vmem:[%s2750 + $0x30] sm:$0xff]
      %v2758 = vld [vmem:[%s2750 + $0x38] sm:$0xff]
      %v2760 = vsel %vm545, %v2751, 0
      %v2763 = vsel %vm545, %v2752, 0
      %v2766 = vsel %vm545, %v2753, 0
      %v2769 = vsel %vm545, %v2754, 0
      %v2772 = vsel %vm545, %v2755, 0
      %v2775 = vsel %vm545, %v2756, 0
      %v2778 = vsel %vm545, %v2757, 0
      %v2781 = vsel %vm545, %v2758, 0
      %2783 = vmatprep.subr.mxu0 %v2735
      %2784 = vmatpush1.msra.mxu0 %v2734
      %2785 = vmatprep.subr.mxu0 %v2737
      %2786 = vmatpush1.msra.mxu0 %v2736
      %2787 = vmatprep.subr.mxu0 %v2739
      %2788 = vmatpush1.msra.mxu0 %v2738
      %2789 = vmatprep.subr.mxu0 %v2741
      %2790 = vmatpush1.msra.mxu0 %v2740
      %2791 = vmatprep.subr.mxu0 %v2743
      %2792 = vmatpush1.msra.mxu0 %v2742
      %2793 = vmatprep.subr.mxu0 %v2745
      %2794 = vmatpush1.msra.mxu0 %v2744
      %2795 = vmatprep.subr.mxu0 %v2747
      %2796 = vmatpush1.msra.mxu0 %v2746
      %2797 = vmatprep.subr.mxu0 %v2749
      %2798 = vmatpush1.msra.mxu0 %v2748
      %2799 = vmatprep.subr.mxu0 0.0
      %2800 = vmatpush1.msra.mxu0 0.0
      %2801 = vmatprep.subr.mxu0 0.0
      %2802 = vmatpush1.msra.mxu0 0.0
      %2803 = vmatprep.subr.mxu0 0.0
      %2804 = vmatpush1.msra.mxu0 0.0
      %2805 = vmatprep.subr.mxu0 0.0
      %2806 = vmatpush1.msra.mxu0 0.0
      %2807 = vmatprep.subr.mxu0 0.0
      %2808 = vmatpush1.msra.mxu0 0.0
      %2809 = vmatprep.subr.mxu0 0.0
      %2810 = vmatpush1.msra.mxu0 0.0
      %2811 = vmatprep.subr.mxu0 0.0
      %2812 = vmatpush1.msra.mxu0 0.0
      %2813 = vmatprep.subr.mxu0 0.0
      %2814 = vmatpush1.msra.mxu0 0.0
      %2815 = vmatprep.subr.mxu0 0.0
      %2816 = vmatpush1.msra.mxu0 0.0
      %2817 = vmatprep.subr.mxu0 0.0
      %2818 = vmatpush1.msra.mxu0 0.0
      %2819 = vmatprep.subr.mxu0 0.0
      %2820 = vmatpush1.msra.mxu0 0.0
      %2821 = vmatprep.subr.mxu0 0.0
      %2822 = vmatpush1.msra.mxu0 0.0
      %2823 = vmatprep.subr.mxu0 0.0
      %2824 = vmatpush1.msra.mxu0 0.0
      %2825 = vmatprep.subr.mxu0 0.0
      %2826 = vmatpush1.msra.mxu0 0.0
      %2827 = vmatprep.subr.mxu0 0.0
      %2828 = vmatpush1.msra.mxu0 0.0
      %2829 = vmatprep.subr.mxu0 0.0
      %2830 = vmatpush1.msra.mxu0 0.0
      %2831 = vmatprep.subr.mxu0 0.0
      %2832 = vmatpush1.msra.mxu0 0.0
      %2833 = vmatprep.subr.mxu0 0.0
      %2834 = vmatpush1.msra.mxu0 0.0
      %2835 = vmatprep.subr.mxu0 0.0
      %2836 = vmatpush1.msra.mxu0 0.0
      %2837 = vmatprep.subr.mxu0 0.0
      %2838 = vmatpush1.msra.mxu0 0.0
      %2839 = vmatprep.subr.mxu0 0.0
      %2840 = vmatpush1.msra.mxu0 0.0
      %2841 = vmatprep.subr.mxu0 0.0
      %2842 = vmatpush1.msra.mxu0 0.0
      %2843 = vmatprep.subr.mxu0 0.0
      %2844 = vmatpush1.msra.mxu0 0.0
      %2845 = vmatprep.subr.mxu0 0.0
      %2846 = vmatpush1.msra.mxu0 0.0
      %2847 = vmatprep.mubr.f32.mxu0 0.0
      %2848 = vmatmul.mubr.f32.gmra.mrb[0].mxu0 %v2760
      %v2849 = vpop.f32.mrb[0].mxu0
      %v2850 = vadd.f32 0.0, %v2849
      %v2851 = vpop.f32.mrb[0].mxu0
      %v2852 = vadd.f32 0.0, %v2851
      %2853 = vmatprep.mubr.f32.mxu0 0.0
      %2854 = vmatmul.mubr.f32.gmra.mrb[0].mxu0 %v2763
      %v2855 = vpop.f32.mrb[0].mxu0
      %v2856 = vadd.f32 0.0, %v2855
      %v2857 = vpop.f32.mrb[0].mxu0
      %v2858 = vadd.f32 0.0, %v2857
      %2859 = vmatprep.mubr.f32.mxu0 0.0
      %2860 = vmatmul.mubr.f32.gmra.mrb[0].mxu0 %v2766
      %v2861 = vpop.f32.mrb[0].mxu0
      %v2862 = vadd.f32 0.0, %v2861
      %v2863 = vpop.f32.mrb[0].mxu0
      %v2864 = vadd.f32 0.0, %v2863
      %2865 = vmatprep.mubr.f32.mxu0 0.0
      %2866 = vmatmul.mubr.f32.gmra.mrb[0].mxu0 %v2769
      %v2867 = vpop.f32.mrb[0].mxu0
      %v2868 = vadd.f32 0.0, %v2867
      %v2869 = vpop.f32.mrb[0].mxu0
      %v2870 = vadd.f32 0.0, %v2869
      %2871 = vmatprep.mubr.f32.mxu0 0.0
      %2872 = vmatmul.mubr.f32.gmra.mrb[0].mxu0 %v2772
      %v2873 = vpop.f32.mrb[0].mxu0
      %v2874 = vadd.f32 0.0, %v2873
      %v2875 = vpop.f32.mrb[0].mxu0
      %v2876 = vadd.f32 0.0, %v2875
      %2877 = vmatprep.mubr.f32.mxu0 0.0
      %2878 = vmatmul.mubr.f32.gmra.mrb[0].mxu0 %v2775
      %v2879 = vpop.f32.mrb[0].mxu0
      %v2880 = vadd.f32 0.0, %v2879
      %v2881 = vpop.f32.mrb[0].mxu0
      %v2882 = vadd.f32 0.0, %v2881
      %2883 = vmatprep.mubr.f32.mxu0 0.0
      %2884 = vmatmul.mubr.f32.gmra.mrb[0].mxu0 %v2778
      %v2885 = vpop.f32.mrb[0].mxu0
      %v2886 = vadd.f32 0.0, %v2885
      %v2887 = vpop.f32.mrb[0].mxu0
      %v2888 = vadd.f32 0.0, %v2887
      %2889 = vmatprep.mubr.f32.mxu0 0.0
      %2890 = vmatmul.mubr.f32.gmra.mrb[0].mxu0 %v2781
      %v2891 = vpop.f32.mrb[0].mxu0
      %v2892 = vadd.f32 0.0, %v2891
      %v2893 = vpop.f32.mrb[0].mxu0
      %v2894 = vadd.f32 0.0, %v2893
      %2895 = vdwg.mxu0
      %v2896 = vadd.f32 %v2661, %v2850
      %v2897 = vadd.f32 %v2662, %v2852
      %v2898 = vadd.f32 %v2663, %v2856
      %v2899 = vadd.f32 %v2664, %v2858
      %v2900 = vadd.f32 %v2665, %v2862
      %v2901 = vadd.f32 %v2666, %v2864
      %v2902 = vadd.f32 %v2667, %v2868
      %v2903 = vadd.f32 %v2668, %v2870
      %v2904 = vadd.f32 %v2669, %v2874
      %v2905 = vadd.f32 %v2670, %v2876
      %v2906 = vadd.f32 %v2671, %v2880
      %v2907 = vadd.f32 %v2672, %v2882
      %v2908 = vadd.f32 %v2673, %v2886
      %v2909 = vadd.f32 %v2674, %v2888
      %v2910 = vadd.f32 %v2675, %v2892
      %v2911 = vadd.f32 %v2676, %v2894
      %2912 = vrot.lane.b32.xlu0 %v336, 112
      %v2913 = vpop.permute.xlu0 %2912
      %2914 = vrot.lane.b32.xlu0 %v338, 112
      %v2915 = vpop.permute.xlu0 %2914
      %2916 = vrot.lane.b32.xlu0 %v340, 112
      %v2917 = vpop.permute.xlu0 %2916
      %2918 = vrot.lane.b32.xlu0 %v342, 112
      %v2919 = vpop.permute.xlu0 %2918
      %2920 = vrot.lane.b32.xlu0 %v344, 112
      %v2921 = vpop.permute.xlu0 %2920
      %2922 = vrot.lane.b32.xlu0 %v346, 112
      %v2923 = vpop.permute.xlu0 %2922
      %2924 = vrot.lane.b32.xlu0 %v348, 112
      %v2925 = vpop.permute.xlu0 %2924
      %2926 = vrot.lane.b32.xlu0 %v350, 112
      %v2927 = vpop.permute.xlu0 %2926
      %2928 = vrot.lane.b32.xlu0 %v337, 112
      %v2929 = vpop.permute.xlu0 %2928
      %2930 = vrot.lane.b32.xlu0 %v339, 112
      %v2931 = vpop.permute.xlu0 %2930
      %2932 = vrot.lane.b32.xlu0 %v341, 112
      %v2933 = vpop.permute.xlu0 %2932
      %2934 = vrot.lane.b32.xlu0 %v343, 112
      %v2935 = vpop.permute.xlu0 %2934
      %2936 = vrot.lane.b32.xlu0 %v345, 112
      %v2937 = vpop.permute.xlu0 %2936
      %2938 = vrot.lane.b32.xlu0 %v347, 112
      %v2939 = vpop.permute.xlu0 %2938
      %2940 = vrot.lane.b32.xlu0 %v349, 112
      %v2941 = vpop.permute.xlu0 %2940
      %2942 = vrot.lane.b32.xlu0 %v351, 112
      %v2943 = vpop.permute.xlu0 %2942
      %vm2944 = vcmp.lt.s32.totalorder %v1348, 112
      %v2945 = vsel %vm2944, %v2913, %v2929
      %v2946 = vsel %vm2944, %v2915, %v2931
      %v2947 = vsel %vm2944, %v2917, %v2933
      %v2948 = vsel %vm2944, %v2919, %v2935
      %v2949 = vsel %vm2944, %v2921, %v2937
      %v2950 = vsel %vm2944, %v2923, %v2939
      %v2951 = vsel %vm2944, %v2925, %v2941
      %v2952 = vsel %vm2944, %v2927, %v2943
      %v2953 = vsel %vm2944, %v2929, %v2913
      %v2954 = vsel %vm2944, %v2931, %v2915
      %v2955 = vsel %vm2944, %v2933, %v2917
      %v2956 = vsel %vm2944, %v2935, %v2919
      %v2957 = vsel %vm2944, %v2937, %v2921
      %v2958 = vsel %vm2944, %v2939, %v2923
      %v2959 = vsel %vm2944, %v2941, %v2925
      %v2960 = vsel %vm2944, %v2943, %v2927
      %v2961 = vlaneseq
      %v2962 = vshrl.u32 %v2961, 7
      %v2963 = vsub.s32 7, %v2962
      %v2964 = vrot.slane %v1271, %v2963
      %v2965 = vlaneseq
      %v2966 = vshrl.u32 %v2965, 7
      %v2967 = vsub.s32 7, %v2966
      %v2968 = vrot.slane %v1272, %v2967
      %v2969 = vmul.f32 %v2945, %v2964
      %v2970 = vmul.f32 %v2953, %v2968
      %v2971 = vmul.f32 %v2946, %v2964
      %v2972 = vmul.f32 %v2954, %v2968
      %v2973 = vmul.f32 %v2947, %v2964
      %v2974 = vmul.f32 %v2955, %v2968
      %v2975 = vmul.f32 %v2948, %v2964
      %v2976 = vmul.f32 %v2956, %v2968
      %v2977 = vmul.f32 %v2949, %v2964
      %v2978 = vmul.f32 %v2957, %v2968
      %v2979 = vmul.f32 %v2950, %v2964
      %v2980 = vmul.f32 %v2958, %v2968
      %v2981 = vmul.f32 %v2951, %v2964
      %v2982 = vmul.f32 %v2959, %v2968
      %v2983 = vmul.f32 %v2952, %v2964
      %v2984 = vmul.f32 %v2960, %v2968
      %s2985 = scalar_lea.vmem %s4, 448
      %v2986 = vld [vmem:[%s2985] sm:$0xff]
      %v2987 = vld [vmem:[%s2985 + $0x8] sm:$0xff]
      %v2988 = vld [vmem:[%s2985 + $0x10] sm:$0xff]
      %v2989 = vld [vmem:[%s2985 + $0x18] sm:$0xff]
      %v2990 = vld [vmem:[%s2985 + $0x20] sm:$0xff]
      %v2991 = vld [vmem:[%s2985 + $0x28] sm:$0xff]
      %v2992 = vld [vmem:[%s2985 + $0x30] sm:$0xff]
      %v2993 = vld [vmem:[%s2985 + $0x38] sm:$0xff]
      %v2995 = vsel %vm545, %v2986, 0
      %v2998 = vsel %vm545, %v2987, 0
      %v3001 = vsel %vm545, %v2988, 0
      %v3004 = vsel %vm545, %v2989, 0
      %v3007 = vsel %vm545, %v2990, 0
      %v3010 = vsel %vm545, %v2991, 0
      %v3013 = vsel %vm545, %v2992, 0
      %v3016 = vsel %vm545, %v2993, 0
      %3018 = vmatprep.subr.mxu0 %v2970
      %3019 = vmatpush1.msra.mxu0 %v2969
      %3020 = vmatprep.subr.mxu0 %v2972
      %3021 = vmatpush1.msra.mxu0 %v2971
      %3022 = vmatprep.subr.mxu0 %v2974
      %3023 = vmatpush1.msra.mxu0 %v2973
      %3024 = vmatprep.subr.mxu0 %v2976
      %3025 = vmatpush1.msra.mxu0 %v2975
      %3026 = vmatprep.subr.mxu0 %v2978
      %3027 = vmatpush1.msra.mxu0 %v2977
      %3028 = vmatprep.subr.mxu0 %v2980
      %3029 = vmatpush1.msra.mxu0 %v2979
      %3030 = vmatprep.subr.mxu0 %v2982
      %3031 = vmatpush1.msra.mxu0 %v2981
      %3032 = vmatprep.subr.mxu0 %v2984
      %3033 = vmatpush1.msra.mxu0 %v2983
      %3034 = vmatprep.subr.mxu0 0.0
      %3035 = vmatpush1.msra.mxu0 0.0
      %3036 = vmatprep.subr.mxu0 0.0
      %3037 = vmatpush1.msra.mxu0 0.0
      %3038 = vmatprep.subr.mxu0 0.0
      %3039 = vmatpush1.msra.mxu0 0.0
      %3040 = vmatprep.subr.mxu0 0.0
      %3041 = vmatpush1.msra.mxu0 0.0
      %3042 = vmatprep.subr.mxu0 0.0
      %3043 = vmatpush1.msra.mxu0 0.0
      %3044 = vmatprep.subr.mxu0 0.0
      %3045 = vmatpush1.msra.mxu0 0.0
      %3046 = vmatprep.subr.mxu0 0.0
      %3047 = vmatpush1.msra.mxu0 0.0
      %3048 = vmatprep.subr.mxu0 0.0
      %3049 = vmatpush1.msra.mxu0 0.0
      %3050 = vmatprep.subr.mxu0 0.0
      %3051 = vmatpush1.msra.mxu0 0.0
      %3052 = vmatprep.subr.mxu0 0.0
      %3053 = vmatpush1.msra.mxu0 0.0
      %3054 = vmatprep.subr.mxu0 0.0
      %3055 = vmatpush1.msra.mxu0 0.0
      %3056 = vmatprep.subr.mxu0 0.0
      %3057 = vmatpush1.msra.mxu0 0.0
      %3058 = vmatprep.subr.mxu0 0.0
      %3059 = vmatpush1.msra.mxu0 0.0
      %3060 = vmatprep.subr.mxu0 0.0
      %3061 = vmatpush1.msra.mxu0 0.0
      %3062 = vmatprep.subr.mxu0 0.0
      %3063 = vmatpush1.msra.mxu0 0.0
      %3064 = vmatprep.subr.mxu0 0.0
      %3065 = vmatpush1.msra.mxu0 0.0
      %3066 = vmatprep.subr.mxu0 0.0
      %3067 = vmatpush1.msra.mxu0 0.0
      %3068 = vmatprep.subr.mxu0 0.0
      %3069 = vmatpush1.msra.mxu0 0.0
      %3070 = vmatprep.subr.mxu0 0.0
      %3071 = vmatpush1.msra.mxu0 0.0
      %3072 = vmatprep.subr.mxu0 0.0
      %3073 = vmatpush1.msra.mxu0 0.0
      %3074 = vmatprep.subr.mxu0 0.0
      %3075 = vmatpush1.msra.mxu0 0.0
      %3076 = vmatprep.subr.mxu0 0.0
      %3077 = vmatpush1.msra.mxu0 0.0
      %3078 = vmatprep.subr.mxu0 0.0
      %3079 = vmatpush1.msra.mxu0 0.0
      %3080 = vmatprep.subr.mxu0 0.0
      %3081 = vmatpush1.msra.mxu0 0.0
      %3082 = vmatprep.mubr.f32.mxu0 0.0
      %3083 = vmatmul.mubr.f32.gmra.mrb[0].mxu0 %v2995
      %v3084 = vpop.f32.mrb[0].mxu0
      %v3085 = vadd.f32 0.0, %v3084
      %v3086 = vpop.f32.mrb[0].mxu0
      %v3087 = vadd.f32 0.0, %v3086
      %3088 = vmatprep.mubr.f32.mxu0 0.0
      %3089 = vmatmul.mubr.f32.gmra.mrb[0].mxu0 %v2998
      %v3090 = vpop.f32.mrb[0].mxu0
      %v3091 = vadd.f32 0.0, %v3090
      %v3092 = vpop.f32.mrb[0].mxu0
      %v3093 = vadd.f32 0.0, %v3092
      %3094 = vmatprep.mubr.f32.mxu0 0.0
      %3095 = vmatmul.mubr.f32.gmra.mrb[0].mxu0 %v3001
      %v3096 = vpop.f32.mrb[0].mxu0
      %v3097 = vadd.f32 0.0, %v3096
      %v3098 = vpop.f32.mrb[0].mxu0
      %v3099 = vadd.f32 0.0, %v3098
      %3100 = vmatprep.mubr.f32.mxu0 0.0
      %3101 = vmatmul.mubr.f32.gmra.mrb[0].mxu0 %v3004
      %v3102 = vpop.f32.mrb[0].mxu0
      %v3103 = vadd.f32 0.0, %v3102
      %v3104 = vpop.f32.mrb[0].mxu0
      %v3105 = vadd.f32 0.0, %v3104
      %3106 = vmatprep.mubr.f32.mxu0 0.0
      %3107 = vmatmul.mubr.f32.gmra.mrb[0].mxu0 %v3007
      %v3108 = vpop.f32.mrb[0].mxu0
      %v3109 = vadd.f32 0.0, %v3108
      %v3110 = vpop.f32.mrb[0].mxu0
      %v3111 = vadd.f32 0.0, %v3110
      %3112 = vmatprep.mubr.f32.mxu0 0.0
      %3113 = vmatmul.mubr.f32.gmra.mrb[0].mxu0 %v3010
      %v3114 = vpop.f32.mrb[0].mxu0
      %v3115 = vadd.f32 0.0, %v3114
      %v3116 = vpop.f32.mrb[0].mxu0
      %v3117 = vadd.f32 0.0, %v3116
      %3118 = vmatprep.mubr.f32.mxu0 0.0
      %3119 = vmatmul.mubr.f32.gmra.mrb[0].mxu0 %v3013
      %v3120 = vpop.f32.mrb[0].mxu0
      %v3121 = vadd.f32 0.0, %v3120
      %v3122 = vpop.f32.mrb[0].mxu0
      %v3123 = vadd.f32 0.0, %v3122
      %3124 = vmatprep.mubr.f32.mxu0 0.0
      %3125 = vmatmul.mubr.f32.gmra.mrb[0].mxu0 %v3016
      %v3126 = vpop.f32.mrb[0].mxu0
      %v3127 = vadd.f32 0.0, %v3126
      %v3128 = vpop.f32.mrb[0].mxu0
      %v3129 = vadd.f32 0.0, %v3128
      %3130 = vdwg.mxu0
      %v3131 = vadd.f32 %v2896, %v3085
      %v3132 = vadd.f32 %v2897, %v3087
      %v3133 = vadd.f32 %v2898, %v3091
      %v3134 = vadd.f32 %v2899, %v3093
      %v3135 = vadd.f32 %v2900, %v3097
      %v3136 = vadd.f32 %v2901, %v3099
      %v3137 = vadd.f32 %v2902, %v3103
      %v3138 = vadd.f32 %v2903, %v3105
      %v3139 = vadd.f32 %v2904, %v3109
      %v3140 = vadd.f32 %v2905, %v3111
      %v3141 = vadd.f32 %v2906, %v3115
      %v3142 = vadd.f32 %v2907, %v3117
      %v3143 = vadd.f32 %v2908, %v3121
      %v3144 = vadd.f32 %v2909, %v3123
      %v3145 = vadd.f32 %v2910, %v3127
      %v3146 = vadd.f32 %v2911, %v3129
      %3147 = vrot.lane.b32.xlu0 %v336, 111
      %v3148 = vpop.permute.xlu0 %3147
      %3149 = vrot.lane.b32.xlu0 %v338, 111
      %v3150 = vpop.permute.xlu0 %3149
      %3151 = vrot.lane.b32.xlu0 %v340, 111
      %v3152 = vpop.permute.xlu0 %3151
      %3153 = vrot.lane.b32.xlu0 %v342, 111
      %v3154 = vpop.permute.xlu0 %3153
      %3155 = vrot.lane.b32.xlu0 %v344, 111
      %v3156 = vpop.permute.xlu0 %3155
      %3157 = vrot.lane.b32.xlu0 %v346, 111
      %v3158 = vpop.permute.xlu0 %3157
      %3159 = vrot.lane.b32.xlu0 %v348, 111
      %v3160 = vpop.permute.xlu0 %3159
      %3161 = vrot.lane.b32.xlu0 %v350, 111
      %v3162 = vpop.permute.xlu0 %3161
      %3163 = vrot.lane.b32.xlu0 %v337, 111
      %v3164 = vpop.permute.xlu0 %3163
      %3165 = vrot.lane.b32.xlu0 %v339, 111
      %v3166 = vpop.permute.xlu0 %3165
      %3167 = vrot.lane.b32.xlu0 %v341, 111
      %v3168 = vpop.permute.xlu0 %3167
      %3169 = vrot.lane.b32.xlu0 %v343, 111
      %v3170 = vpop.permute.xlu0 %3169
      %3171 = vrot.lane.b32.xlu0 %v345, 111
      %v3172 = vpop.permute.xlu0 %3171
      %3173 = vrot.lane.b32.xlu0 %v347, 111
      %v3174 = vpop.permute.xlu0 %3173
      %3175 = vrot.lane.b32.xlu0 %v349, 111
      %v3176 = vpop.permute.xlu0 %3175
      %3177 = vrot.lane.b32.xlu0 %v351, 111
      %v3178 = vpop.permute.xlu0 %3177
      %vm3179 = vcmp.lt.s32.totalorder %v1348, 111
      %v3180 = vsel %vm3179, %v3148, %v3164
      %v3181 = vsel %vm3179, %v3150, %v3166
      %v3182 = vsel %vm3179, %v3152, %v3168
      %v3183 = vsel %vm3179, %v3154, %v3170
      %v3184 = vsel %vm3179, %v3156, %v3172
      %v3185 = vsel %vm3179, %v3158, %v3174
      %v3186 = vsel %vm3179, %v3160, %v3176
      %v3187 = vsel %vm3179, %v3162, %v3178
      %v3188 = vsel %vm3179, %v3164, %v3148
      %v3189 = vsel %vm3179, %v3166, %v3150
      %v3190 = vsel %vm3179, %v3168, %v3152
      %v3191 = vsel %vm3179, %v3170, %v3154
      %v3192 = vsel %vm3179, %v3172, %v3156
      %v3193 = vsel %vm3179, %v3174, %v3158
      %v3194 = vsel %vm3179, %v3176, %v3160
      %v3195 = vsel %vm3179, %v3178, %v3162
      %v3196 = vlaneseq
      %v3197 = vshrl.u32 %v3196, 7
      %v3198 = vsub.s32 0, %v3197
      %v3199 = vrot.slane %v1273, %v3198
      %v3200 = vlaneseq
      %v3201 = vshrl.u32 %v3200, 7
      %v3202 = vsub.s32 0, %v3201
      %v3203 = vrot.slane %v1274, %v3202
      %v3204 = vmul.f32 %v3180, %v3199
      %v3205 = vmul.f32 %v3188, %v3203
      %v3206 = vmul.f32 %v3181, %v3199
      %v3207 = vmul.f32 %v3189, %v3203
      %v3208 = vmul.f32 %v3182, %v3199
      %v3209 = vmul.f32 %v3190, %v3203
      %v3210 = vmul.f32 %v3183, %v3199
      %v3211 = vmul.f32 %v3191, %v3203
      %v3212 = vmul.f32 %v3184, %v3199
      %v3213 = vmul.f32 %v3192, %v3203
      %v3214 = vmul.f32 %v3185, %v3199
      %v3215 = vmul.f32 %v3193, %v3203
      %v3216 = vmul.f32 %v3186, %v3199
      %v3217 = vmul.f32 %v3194, %v3203
      %v3218 = vmul.f32 %v3187, %v3199
      %v3219 = vmul.f32 %v3195, %v3203
      %s3220 = scalar_lea.vmem %s4, 512
      %v3221 = vld [vmem:[%s3220] sm:$0xff]
      %v3222 = vld [vmem:[%s3220 + $0x8] sm:$0xff]
      %v3223 = vld [vmem:[%s3220 + $0x10] sm:$0xff]
      %v3224 = vld [vmem:[%s3220 + $0x18] sm:$0xff]
      %v3225 = vld [vmem:[%s3220 + $0x20] sm:$0xff]
      %v3226 = vld [vmem:[%s3220 + $0x28] sm:$0xff]
      %v3227 = vld [vmem:[%s3220 + $0x30] sm:$0xff]
      %v3228 = vld [vmem:[%s3220 + $0x38] sm:$0xff]
      %v3230 = vsel %vm545, %v3221, 0
      %v3233 = vsel %vm545, %v3222, 0
      %v3236 = vsel %vm545, %v3223, 0
      %v3239 = vsel %vm545, %v3224, 0
      %v3242 = vsel %vm545, %v3225, 0
      %v3245 = vsel %vm545, %v3226, 0
      %v3248 = vsel %vm545, %v3227, 0
      %v3251 = vsel %vm545, %v3228, 0
      %3253 = vmatprep.subr.mxu0 %v3205
      %3254 = vmatpush1.msra.mxu0 %v3204
      %3255 = vmatprep.subr.mxu0 %v3207
      %3256 = vmatpush1.msra.mxu0 %v3206
      %3257 = vmatprep.subr.mxu0 %v3209
      %3258 = vmatpush1.msra.mxu0 %v3208
      %3259 = vmatprep.subr.mxu0 %v3211
      %3260 = vmatpush1.msra.mxu0 %v3210
      %3261 = vmatprep.subr.mxu0 %v3213
      %3262 = vmatpush1.msra.mxu0 %v3212
      %3263 = vmatprep.subr.mxu0 %v3215
      %3264 = vmatpush1.msra.mxu0 %v3214
      %3265 = vmatprep.subr.mxu0 %v3217
      %3266 = vmatpush1.msra.mxu0 %v3216
      %3267 = vmatprep.subr.mxu0 %v3219
      %3268 = vmatpush1.msra.mxu0 %v3218
      %3269 = vmatprep.subr.mxu0 0.0
      %3270 = vmatpush1.msra.mxu0 0.0
      %3271 = vmatprep.subr.mxu0 0.0
      %3272 = vmatpush1.msra.mxu0 0.0
      %3273 = vmatprep.subr.mxu0 0.0
      %3274 = vmatpush1.msra.mxu0 0.0
      %3275 = vmatprep.subr.mxu0 0.0
      %3276 = vmatpush1.msra.mxu0 0.0
      %3277 = vmatprep.subr.mxu0 0.0
      %3278 = vmatpush1.msra.mxu0 0.0
      %3279 = vmatprep.subr.mxu0 0.0
      %3280 = vmatpush1.msra.mxu0 0.0
      %3281 = vmatprep.subr.mxu0 0.0
      %3282 = vmatpush1.msra.mxu0 0.0
      %3283 = vmatprep.subr.mxu0 0.0
      %3284 = vmatpush1.msra.mxu0 0.0
      %3285 = vmatprep.subr.mxu0 0.0
      %3286 = vmatpush1.msra.mxu0 0.0
      %3287 = vmatprep.subr.mxu0 0.0
      %3288 = vmatpush1.msra.mxu0 0.0
      %3289 = vmatprep.subr.mxu0 0.0
      %3290 = vmatpush1.msra.mxu0 0.0
      %3291 = vmatprep.subr.mxu0 0.0
      %3292 = vmatpush1.msra.mxu0 0.0
      %3293 = vmatprep.subr.mxu0 0.0
      %3294 = vmatpush1.msra.mxu0 0.0
      %3295 = vmatprep.subr.mxu0 0.0
      %3296 = vmatpush1.msra.mxu0 0.0
      %3297 = vmatprep.subr.mxu0 0.0
      %3298 = vmatpush1.msra.mxu0 0.0
      %3299 = vmatprep.subr.mxu0 0.0
      %3300 = vmatpush1.msra.mxu0 0.0
      %3301 = vmatprep.subr.mxu0 0.0
      %3302 = vmatpush1.msra.mxu0 0.0
      %3303 = vmatprep.subr.mxu0 0.0
      %3304 = vmatpush1.msra.mxu0 0.0
      %3305 = vmatprep.subr.mxu0 0.0
      %3306 = vmatpush1.msra.mxu0 0.0
      %3307 = vmatprep.subr.mxu0 0.0
      %3308 = vmatpush1.msra.mxu0 0.0
      %3309 = vmatprep.subr.mxu0 0.0
      %3310 = vmatpush1.msra.mxu0 0.0
      %3311 = vmatprep.subr.mxu0 0.0
      %3312 = vmatpush1.msra.mxu0 0.0
      %3313 = vmatprep.subr.mxu0 0.0
      %3314 = vmatpush1.msra.mxu0 0.0
      %3315 = vmatprep.subr.mxu0 0.0
      %3316 = vmatpush1.msra.mxu0 0.0
      %3317 = vmatprep.mubr.f32.mxu0 0.0
      %3318 = vmatmul.mubr.f32.gmra.mrb[0].mxu0 %v3230
      %v3319 = vpop.f32.mrb[0].mxu0
      %v3320 = vadd.f32 0.0, %v3319
      %v3321 = vpop.f32.mrb[0].mxu0
      %v3322 = vadd.f32 0.0, %v3321
      %3323 = vmatprep.mubr.f32.mxu0 0.0
      %3324 = vmatmul.mubr.f32.gmra.mrb[0].mxu0 %v3233
      %v3325 = vpop.f32.mrb[0].mxu0
      %v3326 = vadd.f32 0.0, %v3325
      %v3327 = vpop.f32.mrb[0].mxu0
      %v3328 = vadd.f32 0.0, %v3327
      %3329 = vmatprep.mubr.f32.mxu0 0.0
      %3330 = vmatmul.mubr.f32.gmra.mrb[0].mxu0 %v3236
      %v3331 = vpop.f32.mrb[0].mxu0
      %v3332 = vadd.f32 0.0, %v3331
      %v3333 = vpop.f32.mrb[0].mxu0
      %v3334 = vadd.f32 0.0, %v3333
      %3335 = vmatprep.mubr.f32.mxu0 0.0
      %3336 = vmatmul.mubr.f32.gmra.mrb[0].mxu0 %v3239
      %v3337 = vpop.f32.mrb[0].mxu0
      %v3338 = vadd.f32 0.0, %v3337
      %v3339 = vpop.f32.mrb[0].mxu0
      %v3340 = vadd.f32 0.0, %v3339
      %3341 = vmatprep.mubr.f32.mxu0 0.0
      %3342 = vmatmul.mubr.f32.gmra.mrb[0].mxu0 %v3242
      %v3343 = vpop.f32.mrb[0].mxu0
      %v3344 = vadd.f32 0.0, %v3343
      %v3345 = vpop.f32.mrb[0].mxu0
      %v3346 = vadd.f32 0.0, %v3345
      %3347 = vmatprep.mubr.f32.mxu0 0.0
      %3348 = vmatmul.mubr.f32.gmra.mrb[0].mxu0 %v3245
      %v3349 = vpop.f32.mrb[0].mxu0
      %v3350 = vadd.f32 0.0, %v3349
      %v3351 = vpop.f32.mrb[0].mxu0
      %v3352 = vadd.f32 0.0, %v3351
      %3353 = vmatprep.mubr.f32.mxu0 0.0
      %3354 = vmatmul.mubr.f32.gmra.mrb[0].mxu0 %v3248
      %v3355 = vpop.f32.mrb[0].mxu0
      %v3356 = vadd.f32 0.0, %v3355
      %v3357 = vpop.f32.mrb[0].mxu0
      %v3358 = vadd.f32 0.0, %v3357
      %3359 = vmatprep.mubr.f32.mxu0 0.0
      %3360 = vmatmul.mubr.f32.gmra.mrb[0].mxu0 %v3251
      %v3361 = vpop.f32.mrb[0].mxu0
      %v3362 = vadd.f32 0.0, %v3361
      %v3363 = vpop.f32.mrb[0].mxu0
      %v3364 = vadd.f32 0.0, %v3363
      %3365 = vdwg.mxu0
      %v3366 = vadd.f32 %v3131, %v3320
      %v3367 = vadd.f32 %v3132, %v3322
      %v3368 = vadd.f32 %v3133, %v3326
      %v3369 = vadd.f32 %v3134, %v3328
      %v3370 = vadd.f32 %v3135, %v3332
      %v3371 = vadd.f32 %v3136, %v3334
      %v3372 = vadd.f32 %v3137, %v3338
      %v3373 = vadd.f32 %v3138, %v3340
      %v3374 = vadd.f32 %v3139, %v3344
      %v3375 = vadd.f32 %v3140, %v3346
      %v3376 = vadd.f32 %v3141, %v3350
      %v3377 = vadd.f32 %v3142, %v3352
      %v3378 = vadd.f32 %v3143, %v3356
      %v3379 = vadd.f32 %v3144, %v3358
      %v3380 = vadd.f32 %v3145, %v3362
      %v3381 = vadd.f32 %v3146, %v3364
      %v3382 = vld [vmem:[%s6] sm:$0xff]
      %v3383 = vld [vmem:[%s6 + $0x8] sm:$0xff]
      %v3384 = vld [vmem:[%s6 + $0x10] sm:$0xff]
      %v3385 = vld [vmem:[%s6 + $0x18] sm:$0xff]
      %v3386 = vld [vmem:[%s6 + $0x20] sm:$0xff]
      %v3387 = vld [vmem:[%s6 + $0x28] sm:$0xff]
      %v3388 = vld [vmem:[%s6 + $0x30] sm:$0xff]
      %v3389 = vld [vmem:[%s6 + $0x38] sm:$0xff]
      %v3390 = vadd.f32 %v1255, %v1256
      %3391 = vadd.xlane.f32.xlu0 %v3390
      %v3392 = vpop.xlane.xlu0 %3391
      %v3393 = vadd.f32 %v1257, %v1258
      %3394 = vadd.xlane.f32.xlu0 %v3393
      %v3395 = vpop.xlane.xlu0 %3394
      %v3396 = vadd.f32 %v1259, %v1260
      %3397 = vadd.xlane.f32.xlu0 %v3396
      %v3398 = vpop.xlane.xlu0 %3397
      %v3399 = vadd.f32 %v1261, %v1262
      %3400 = vadd.xlane.f32.xlu0 %v3399
      %v3401 = vpop.xlane.xlu0 %3400
      %v3402 = vadd.f32 %v1263, %v1264
      %3403 = vadd.xlane.f32.xlu0 %v3402
      %v3404 = vpop.xlane.xlu0 %3403
      %v3405 = vadd.f32 %v1265, %v1266
      %3406 = vadd.xlane.f32.xlu0 %v3405
      %v3407 = vpop.xlane.xlu0 %3406
      %v3408 = vadd.f32 %v1267, %v1268
      %3409 = vadd.xlane.f32.xlu0 %v3408
      %v3410 = vpop.xlane.xlu0 %3409
      %v3411 = vadd.f32 %v1269, %v1270
      %3412 = vadd.xlane.f32.xlu0 %v3411
      %v3413 = vpop.xlane.xlu0 %3412
      %v3414 = vmul.f32 %v3392, %v1070
      %v3415 = vmul.f32 %v3395, %v1070
      %v3416 = vmul.f32 %v3398, %v1070
      %v3417 = vmul.f32 %v3401, %v1070
      %v3418 = vmul.f32 %v3404, %v1070
      %v3419 = vmul.f32 %v3407, %v1070
      %v3420 = vmul.f32 %v3410, %v1070
      %v3421 = vmul.f32 %v3413, %v1070
      %v3422 = vadd.f32 %v3366, %v3367
      %3423 = vadd.xlane.f32.xlu0 %v3422
      %v3424 = vpop.xlane.xlu0 %3423
      %v3425 = vadd.f32 %v3368, %v3369
      %3426 = vadd.xlane.f32.xlu0 %v3425
      %v3427 = vpop.xlane.xlu0 %3426
      %v3428 = vadd.f32 %v3370, %v3371
      %3429 = vadd.xlane.f32.xlu0 %v3428
      %v3430 = vpop.xlane.xlu0 %3429
      %v3431 = vadd.f32 %v3372, %v3373
      %3432 = vadd.xlane.f32.xlu0 %v3431
      %v3433 = vpop.xlane.xlu0 %3432
      %v3434 = vadd.f32 %v3374, %v3375
      %3435 = vadd.xlane.f32.xlu0 %v3434
      %v3436 = vpop.xlane.xlu0 %3435
      %v3437 = vadd.f32 %v3376, %v3377
      %3438 = vadd.xlane.f32.xlu0 %v3437
      %v3439 = vpop.xlane.xlu0 %3438
      %v3440 = vadd.f32 %v3378, %v3379
      %3441 = vadd.xlane.f32.xlu0 %v3440
      %v3442 = vpop.xlane.xlu0 %3441
      %v3443 = vadd.f32 %v3380, %v3381
      %3444 = vadd.xlane.f32.xlu0 %v3443
      %v3445 = vpop.xlane.xlu0 %3444
      %v3446 = vmul.f32 %v3424, %v1070
      %v3447 = vmul.f32 %v3427, %v1070
      %v3448 = vmul.f32 %v3430, %v1070
      %v3449 = vmul.f32 %v3433, %v1070
      %v3450 = vmul.f32 %v3436, %v1070
      %v3451 = vmul.f32 %v3439, %v1070
      %v3452 = vmul.f32 %v3442, %v1070
      %v3453 = vmul.f32 %v3445, %v1070
      %v3454 = vmax.f32 %v3414, %v3418
      %v3455 = vmax.f32 %v3415, %v3419
      %v3456 = vmax.f32 %v3416, %v3420
      %v3457 = vmax.f32 %v3417, %v3421
      %v3458 = vmax.f32 %v3454, %v3455
      %v3459 = vmax.f32 %v3456, %v3457
      %v3460 = vmax.f32 %v3458, %v3459
      %v3461 = vrot.slane %v3460, 4
      %v3462 = vmax.f32 %v3460, %v3461
      %v3463 = vrot.slane %v3462, 2
      %v3464 = vmax.f32 %v3462, %v3463
      %v3465 = vrot.slane %v3464, 1
      %v3466 = vmax.f32 %v3464, %v3465
      %s3467 = vtos %v3466
      %v3468 = vstv %s3467
      %v3469 = vsub.f32 %v3414, %v3468
      %v3470 = vsub.f32 %v3415, %v3468
      %v3471 = vsub.f32 %v3416, %v3468
      %v3472 = vsub.f32 %v3417, %v3468
      %v3473 = vsub.f32 %v3418, %v3468
      %v3474 = vsub.f32 %v3419, %v3468
      %v3475 = vsub.f32 %v3420, %v3468
      %v3476 = vsub.f32 %v3421, %v3468
      %v3477 = vmul.f32 %v3469, 1.442695
      %v3478 = vpow.pop %v3477
      %v3479 = vmul.f32 %v3470, 1.442695
      %v3480 = vpow.pop %v3479
      %v3481 = vmul.f32 %v3471, 1.442695
      %v3482 = vpow.pop %v3481
      %v3483 = vmul.f32 %v3472, 1.442695
      %v3484 = vpow.pop %v3483
      %v3485 = vmul.f32 %v3473, 1.442695
      %v3486 = vpow.pop %v3485
      %v3487 = vmul.f32 %v3474, 1.442695
      %v3488 = vpow.pop %v3487
      %v3489 = vmul.f32 %v3475, 1.442695
      %v3490 = vpow.pop %v3489
      %v3491 = vmul.f32 %v3476, 1.442695
      %v3492 = vpow.pop %v3491
      %v3493 = vmax.f32 %v3446, %v3450
      %v3494 = vmax.f32 %v3447, %v3451
      %v3495 = vmax.f32 %v3448, %v3452
      %v3496 = vmax.f32 %v3449, %v3453
      %v3497 = vmax.f32 %v3493, %v3494
      %v3498 = vmax.f32 %v3495, %v3496
      %v3499 = vmax.f32 %v3497, %v3498
      %v3500 = vrot.slane %v3499, 4
      %v3501 = vmax.f32 %v3499, %v3500
      %v3502 = vrot.slane %v3501, 2
      %v3503 = vmax.f32 %v3501, %v3502
      %v3504 = vrot.slane %v3503, 1
      %v3505 = vmax.f32 %v3503, %v3504
      %s3506 = vtos %v3505
      %v3507 = vstv %s3506
      %v3508 = vsub.f32 %v3446, %v3507
      %v3509 = vsub.f32 %v3447, %v3507
      %v3510 = vsub.f32 %v3448, %v3507
      %v3511 = vsub.f32 %v3449, %v3507
      %v3512 = vsub.f32 %v3450, %v3507
      %v3513 = vsub.f32 %v3451, %v3507
      %v3514 = vsub.f32 %v3452, %v3507
      %v3515 = vsub.f32 %v3453, %v3507
      %v3516 = vmul.f32 %v3508, 1.442695
      %v3517 = vpow.pop %v3516
      %v3518 = vmul.f32 %v3509, 1.442695
      %v3519 = vpow.pop %v3518
      %v3520 = vmul.f32 %v3510, 1.442695
      %v3521 = vpow.pop %v3520
      %v3522 = vmul.f32 %v3511, 1.442695
      %v3523 = vpow.pop %v3522
      %v3524 = vmul.f32 %v3512, 1.442695
      %v3525 = vpow.pop %v3524
      %v3526 = vmul.f32 %v3513, 1.442695
      %v3527 = vpow.pop %v3526
      %v3528 = vmul.f32 %v3514, 1.442695
      %v3529 = vpow.pop %v3528
      %v3530 = vmul.f32 %v3515, 1.442695
      %v3531 = vpow.pop %v3530
      %vm3532 = vcmask 7168
      %v3533 = vsel %vm3532, %v3478, %v3517
      %v3534 = vsel %vm3532, %v3480, %v3519
      %v3535 = vsel %vm3532, %v3482, %v3521
      %v3536 = vsel %vm3532, %v3484, %v3523
      %v3537 = vsel %vm3532, %v3486, %v3525
      %v3538 = vsel %vm3532, %v3488, %v3527
      %v3539 = vsel %vm3532, %v3490, %v3529
      %v3540 = vsel %vm3532, %v3492, %v3531
      %v3542 = vsel %vm545, %v3382, 0
      %v3545 = vsel %vm545, %v3383, 0
      %v3548 = vsel %vm545, %v3384, 0
      %v3551 = vsel %vm545, %v3385, 0
      %v3554 = vsel %vm545, %v3386, 0
      %v3557 = vsel %vm545, %v3387, 0
      %v3560 = vsel %vm545, %v3388, 0
      %v3563 = vsel %vm545, %v3389, 0
      %3565 = vmatprep.subr.mxu0 0.0
      %3566 = vmatpush1.msra.mxu0 %v3533
      %3567 = vmatprep.subr.mxu0 0.0
      %3568 = vmatpush1.msra.mxu0 %v3534
      %3569 = vmatprep.subr.mxu0 0.0
      %3570 = vmatpush1.msra.mxu0 %v3535
      %3571 = vmatprep.subr.mxu0 0.0
      %3572 = vmatpush1.msra.mxu0 %v3536
      %3573 = vmatprep.subr.mxu0 0.0
      %3574 = vmatpush1.msra.mxu0 %v3537
      %3575 = vmatprep.subr.mxu0 0.0
      %3576 = vmatpush1.msra.mxu0 %v3538
      %3577 = vmatprep.subr.mxu0 0.0
      %3578 = vmatpush1.msra.mxu0 %v3539
      %3579 = vmatprep.subr.mxu0 0.0
      %3580 = vmatpush1.msra.mxu0 %v3540
      %3581 = vmatprep.subr.mxu0 0.0
      %3582 = vmatpush1.msra.mxu0 0.0
      %3583 = vmatprep.subr.mxu0 0.0
      %3584 = vmatpush1.msra.mxu0 0.0
      %3585 = vmatprep.subr.mxu0 0.0
      %3586 = vmatpush1.msra.mxu0 0.0
      %3587 = vmatprep.subr.mxu0 0.0
      %3588 = vmatpush1.msra.mxu0 0.0
      %3589 = vmatprep.subr.mxu0 0.0
      %3590 = vmatpush1.msra.mxu0 0.0
      %3591 = vmatprep.subr.mxu0 0.0
      %3592 = vmatpush1.msra.mxu0 0.0
      %3593 = vmatprep.subr.mxu0 0.0
      %3594 = vmatpush1.msra.mxu0 0.0
      %3595 = vmatprep.subr.mxu0 0.0
      %3596 = vmatpush1.msra.mxu0 0.0
      %3597 = vmatprep.subr.mxu0 0.0
      %3598 = vmatpush1.msra.mxu0 0.0
      %3599 = vmatprep.subr.mxu0 0.0
      %3600 = vmatpush1.msra.mxu0 0.0
      %3601 = vmatprep.subr.mxu0 0.0
      %3602 = vmatpush1.msra.mxu0 0.0
      %3603 = vmatprep.subr.mxu0 0.0
      %3604 = vmatpush1.msra.mxu0 0.0
      %3605 = vmatprep.subr.mxu0 0.0
      %3606 = vmatpush1.msra.mxu0 0.0
      %3607 = vmatprep.subr.mxu0 0.0
      %3608 = vmatpush1.msra.mxu0 0.0
      %3609 = vmatprep.subr.mxu0 0.0
      %3610 = vmatpush1.msra.mxu0 0.0
      %3611 = vmatprep.subr.mxu0 0.0
      %3612 = vmatpush1.msra.mxu0 0.0
      %3613 = vmatprep.subr.mxu0 0.0
      %3614 = vmatpush1.msra.mxu0 0.0
      %3615 = vmatprep.subr.mxu0 0.0
      %3616 = vmatpush1.msra.mxu0 0.0
      %3617 = vmatprep.subr.mxu0 0.0
      %3618 = vmatpush1.msra.mxu0 0.0
      %3619 = vmatprep.subr.mxu0 0.0
      %3620 = vmatpush1.msra.mxu0 0.0
      %3621 = vmatprep.subr.mxu0 0.0
      %3622 = vmatpush1.msra.mxu0 0.0
      %3623 = vmatprep.subr.mxu0 0.0
      %3624 = vmatpush1.msra.mxu0 0.0
      %3625 = vmatprep.subr.mxu0 0.0
      %3626 = vmatpush1.msra.mxu0 0.0
      %3627 = vmatprep.subr.mxu0 0.0
      %3628 = vmatpush1.msra.mxu0 0.0
      %3629 = vmatprep.mubr.f32.mxu0 0.0
      %3630 = vmatmul.mubr.f32.gmra.mrb[0].mxu0 %v3542
      %v3631 = vpop.f32.mrb[0].mxu0
      %v3632 = vadd.f32 0.0, %v3631
      %v3633 = vpop.f32.mrb[0].mxu0
      %3634 = vmatprep.mubr.f32.mxu0 0.0
      %3635 = vmatmul.mubr.f32.gmra.mrb[0].mxu0 %v3545
      %v3636 = vpop.f32.mrb[0].mxu0
      %v3637 = vadd.f32 0.0, %v3636
      %v3638 = vpop.f32.mrb[0].mxu0
      %3639 = vmatprep.mubr.f32.mxu0 0.0
      %3640 = vmatmul.mubr.f32.gmra.mrb[0].mxu0 %v3548
      %v3641 = vpop.f32.mrb[0].mxu0
      %v3642 = vadd.f32 0.0, %v3641
      %v3643 = vpop.f32.mrb[0].mxu0
      %3644 = vmatprep.mubr.f32.mxu0 0.0
      %3645 = vmatmul.mubr.f32.gmra.mrb[0].mxu0 %v3551
      %v3646 = vpop.f32.mrb[0].mxu0
      %v3647 = vadd.f32 0.0, %v3646
      %v3648 = vpop.f32.mrb[0].mxu0
      %3649 = vmatprep.mubr.f32.mxu0 0.0
      %3650 = vmatmul.mubr.f32.gmra.mrb[0].mxu0 %v3554
      %v3651 = vpop.f32.mrb[0].mxu0
      %v3652 = vadd.f32 0.0, %v3651
      %v3653 = vpop.f32.mrb[0].mxu0
      %3654 = vmatprep.mubr.f32.mxu0 0.0
      %3655 = vmatmul.mubr.f32.gmra.mrb[0].mxu0 %v3557
      %v3656 = vpop.f32.mrb[0].mxu0
      %v3657 = vadd.f32 0.0, %v3656
      %v3658 = vpop.f32.mrb[0].mxu0
      %3659 = vmatprep.mubr.f32.mxu0 0.0
      %3660 = vmatmul.mubr.f32.gmra.mrb[0].mxu0 %v3560
      %v3661 = vpop.f32.mrb[0].mxu0
      %v3662 = vadd.f32 0.0, %v3661
      %v3663 = vpop.f32.mrb[0].mxu0
      %3664 = vmatprep.mubr.f32.mxu0 0.0
      %3665 = vmatmul.mubr.f32.gmra.mrb[0].mxu0 %v3563
      %v3666 = vpop.f32.mrb[0].mxu0
      %v3667 = vadd.f32 0.0, %v3666
      %v3668 = vpop.f32.mrb[0].mxu0
      %3669 = vdwg.mxu0
      %v3670 = vrcp.pop %v3632
      %v3671 = vmul.f32 %v3478, %v3670
      %v3672 = vrcp.pop %v3637
      %v3673 = vmul.f32 %v3480, %v3672
      %v3674 = vrcp.pop %v3642
      %v3675 = vmul.f32 %v3482, %v3674
      %v3676 = vrcp.pop %v3647
      %v3677 = vmul.f32 %v3484, %v3676
      %v3678 = vrcp.pop %v3652
      %v3679 = vmul.f32 %v3486, %v3678
      %v3680 = vrcp.pop %v3657
      %v3681 = vmul.f32 %v3488, %v3680
      %v3682 = vrcp.pop %v3662
      %v3683 = vmul.f32 %v3490, %v3682
      %v3684 = vrcp.pop %v3667
      %v3685 = vmul.f32 %v3492, %v3684
      %v3686 = vmul.f32 %v3517, %v3670
      %v3687 = vmul.f32 %v3519, %v3672
      %v3688 = vmul.f32 %v3521, %v3674
      %v3689 = vmul.f32 %v3523, %v3676
      %v3690 = vmul.f32 %v3525, %v3678
      %v3691 = vmul.f32 %v3527, %v3680
      %v3692 = vmul.f32 %v3529, %v3682
      %v3693 = vmul.f32 %v3531, %v3684
      %3695 = vset.pattern.permute.xlu0 0
      %3696 = vperm.xlu0 %3695, %v3671
      %v3697 = vpop.permute.xlu0 %3696
      %3700 = vset.pattern.permute.xlu0 0
      %3701 = vperm.xlu0 %3700, %v3673
      %v3702 = vpop.permute.xlu0 %3701
      %3705 = vset.pattern.permute.xlu0 0
      %3706 = vperm.xlu0 %3705, %v3675
      %v3707 = vpop.permute.xlu0 %3706
      %3710 = vset.pattern.permute.xlu0 0
      %3711 = vperm.xlu0 %3710, %v3677
      %v3712 = vpop.permute.xlu0 %3711
      %3715 = vset.pattern.permute.xlu0 0
      %3716 = vperm.xlu0 %3715, %v3679
      %v3717 = vpop.permute.xlu0 %3716
      %3720 = vset.pattern.permute.xlu0 0
      %3721 = vperm.xlu0 %3720, %v3681
      %v3722 = vpop.permute.xlu0 %3721
      %3725 = vset.pattern.permute.xlu0 0
      %3726 = vperm.xlu0 %3725, %v3683
      %v3727 = vpop.permute.xlu0 %3726
      %3730 = vset.pattern.permute.xlu0 0
      %3731 = vperm.xlu0 %3730, %v3685
      %v3732 = vpop.permute.xlu0 %3731
      %v3734 = vmul.f32 %v3697, %v3366
      %v3735 = vmul.f32 %v3697, %v3367
      %v3736 = vmul.f32 %v3702, %v3368
      %v3737 = vmul.f32 %v3702, %v3369
      %v3738 = vmul.f32 %v3707, %v3370
      %v3739 = vmul.f32 %v3707, %v3371
      %v3740 = vmul.f32 %v3712, %v3372
      %v3741 = vmul.f32 %v3712, %v3373
      %v3742 = vmul.f32 %v3717, %v3374
      %v3743 = vmul.f32 %v3717, %v3375
      %v3744 = vmul.f32 %v3722, %v3376
      %v3745 = vmul.f32 %v3722, %v3377
      %v3746 = vmul.f32 %v3727, %v3378
      %v3747 = vmul.f32 %v3727, %v3379
      %v3748 = vmul.f32 %v3732, %v3380
      %v3749 = vmul.f32 %v3732, %v3381
      %3751 = vset.pattern.permute.xlu0 1
      %3752 = vperm.xlu0 %3751, %v3686
      %v3753 = vpop.permute.xlu0 %3752
      %3756 = vset.pattern.permute.xlu0 1
      %3757 = vperm.xlu0 %3756, %v3687
      %v3758 = vpop.permute.xlu0 %3757
      %3761 = vset.pattern.permute.xlu0 1
      %3762 = vperm.xlu0 %3761, %v3688
      %v3763 = vpop.permute.xlu0 %3762
      %3766 = vset.pattern.permute.xlu0 1
      %3767 = vperm.xlu0 %3766, %v3689
      %v3768 = vpop.permute.xlu0 %3767
      %3771 = vset.pattern.permute.xlu0 1
      %3772 = vperm.xlu0 %3771, %v3690
      %v3773 = vpop.permute.xlu0 %3772
      %3776 = vset.pattern.permute.xlu0 1
      %3777 = vperm.xlu0 %3776, %v3691
      %v3778 = vpop.permute.xlu0 %3777
      %3781 = vset.pattern.permute.xlu0 1
      %3782 = vperm.xlu0 %3781, %v3692
      %v3783 = vpop.permute.xlu0 %3782
      %3786 = vset.pattern.permute.xlu0 1
      %3787 = vperm.xlu0 %3786, %v3693
      %v3788 = vpop.permute.xlu0 %3787
      %v3790 = vmul.f32 %v3753, %v1255
      %v3791 = vmul.f32 %v3753, %v1256
      %v3792 = vmul.f32 %v3758, %v1257
      %v3793 = vmul.f32 %v3758, %v1258
      %v3794 = vmul.f32 %v3763, %v1259
      %v3795 = vmul.f32 %v3763, %v1260
      %v3796 = vmul.f32 %v3768, %v1261
      %v3797 = vmul.f32 %v3768, %v1262
      %v3798 = vmul.f32 %v3773, %v1263
      %v3799 = vmul.f32 %v3773, %v1264
      %v3800 = vmul.f32 %v3778, %v1265
      %v3801 = vmul.f32 %v3778, %v1266
      %v3802 = vmul.f32 %v3783, %v1267
      %v3803 = vmul.f32 %v3783, %v1268
      %v3804 = vmul.f32 %v3788, %v1269
      %v3805 = vmul.f32 %v3788, %v1270
      %v3806 = vadd.f32 %v3734, %v3790
      %v3807 = vadd.f32 %v3735, %v3791
      %v3808 = vadd.f32 %v3736, %v3792
      %v3809 = vadd.f32 %v3737, %v3793
      %v3810 = vadd.f32 %v3738, %v3794
      %v3811 = vadd.f32 %v3739, %v3795
      %v3812 = vadd.f32 %v3740, %v3796
      %v3813 = vadd.f32 %v3741, %v3797
      %v3814 = vadd.f32 %v3742, %v3798
      %v3815 = vadd.f32 %v3743, %v3799
      %v3816 = vadd.f32 %v3744, %v3800
      %v3817 = vadd.f32 %v3745, %v3801
      %v3818 = vadd.f32 %v3746, %v3802
      %v3819 = vadd.f32 %v3747, %v3803
      %v3820 = vadd.f32 %v3748, %v3804
      %v3821 = vadd.f32 %v3749, %v3805
      %3822 = vmatprep.subr.mxu0 %v3807
      %3823 = vmatpush1.msra.mxu0 %v3806
      %3824 = vmatprep.subr.mxu0 %v3809
      %3825 = vmatpush1.msra.mxu0 %v3808
      %3826 = vmatprep.subr.mxu0 %v3811
      %3827 = vmatpush1.msra.mxu0 %v3810
      %3828 = vmatprep.subr.mxu0 %v3813
      %3829 = vmatpush1.msra.mxu0 %v3812
      %3830 = vmatprep.subr.mxu0 %v3815
      %3831 = vmatpush1.msra.mxu0 %v3814
      %3832 = vmatprep.subr.mxu0 %v3817
      %3833 = vmatpush1.msra.mxu0 %v3816
      %3834 = vmatprep.subr.mxu0 %v3819
      %3835 = vmatpush1.msra.mxu0 %v3818
      %3836 = vmatprep.subr.mxu0 %v3821
      %3837 = vmatpush1.msra.mxu0 %v3820
      %3838 = vmatprep.subr.mxu0 0.0
      %3839 = vmatpush1.msra.mxu0 0.0
      %3840 = vmatprep.subr.mxu0 0.0
      %3841 = vmatpush1.msra.mxu0 0.0
      %3842 = vmatprep.subr.mxu0 0.0
      %3843 = vmatpush1.msra.mxu0 0.0
      %3844 = vmatprep.subr.mxu0 0.0
      %3845 = vmatpush1.msra.mxu0 0.0
      %3846 = vmatprep.subr.mxu0 0.0
      %3847 = vmatpush1.msra.mxu0 0.0
      %3848 = vmatprep.subr.mxu0 0.0
      %3849 = vmatpush1.msra.mxu0 0.0
      %3850 = vmatprep.subr.mxu0 0.0
      %3851 = vmatpush1.msra.mxu0 0.0
      %3852 = vmatprep.subr.mxu0 0.0
      %3853 = vmatpush1.msra.mxu0 0.0
      %3854 = vmatprep.subr.mxu0 0.0
      %3855 = vmatpush1.msra.mxu0 0.0
      %3856 = vmatprep.subr.mxu0 0.0
      %3857 = vmatpush1.msra.mxu0 0.0
      %3858 = vmatprep.subr.mxu0 0.0
      %3859 = vmatpush1.msra.mxu0 0.0
      %3860 = vmatprep.subr.mxu0 0.0
      %3861 = vmatpush1.msra.mxu0 0.0
      %3862 = vmatprep.subr.mxu0 0.0
      %3863 = vmatpush1.msra.mxu0 0.0
      %3864 = vmatprep.subr.mxu0 0.0
      %3865 = vmatpush1.msra.mxu0 0.0
      %3866 = vmatprep.subr.mxu0 0.0
      %3867 = vmatpush1.msra.mxu0 0.0
      %3868 = vmatprep.subr.mxu0 0.0
      %3869 = vmatpush1.msra.mxu0 0.0
      %3870 = vmatprep.subr.mxu0 0.0
      %3871 = vmatpush1.msra.mxu0 0.0
      %3872 = vmatprep.subr.mxu0 0.0
      %3873 = vmatpush1.msra.mxu0 0.0
      %3874 = vmatprep.subr.mxu0 0.0
      %3875 = vmatpush1.msra.mxu0 0.0
      %3876 = vmatprep.subr.mxu0 0.0
      %3877 = vmatpush1.msra.mxu0 0.0
      %3878 = vmatprep.subr.mxu0 0.0
      %3879 = vmatpush1.msra.mxu0 0.0
      %3880 = vmatprep.subr.mxu0 0.0
      %3881 = vmatpush1.msra.mxu0 0.0
      %3882 = vmatprep.subr.mxu0 0.0
      %3883 = vmatpush1.msra.mxu0 0.0
      %3884 = vmatprep.subr.mxu0 0.0
      %3885 = vmatpush1.msra.mxu0 0.0
      %3886 = vmatprep.mubr.f32.mxu0 0.0
      %3887 = vmatmul.mubr.f32.gmra.mrb[0].mxu0 %v3542
      %v3888 = vpop.f32.mrb[0].mxu0
      %v3889 = vadd.f32 0.0, %v3888
      %v3890 = vpop.f32.mrb[0].mxu0
      %v3891 = vadd.f32 0.0, %v3890
      %3892 = vmatprep.mubr.f32.mxu0 0.0
      %3893 = vmatmul.mubr.f32.gmra.mrb[0].mxu0 %v3545
      %v3894 = vpop.f32.mrb[0].mxu0
      %v3895 = vadd.f32 0.0, %v3894
      %v3896 = vpop.f32.mrb[0].mxu0
      %v3897 = vadd.f32 0.0, %v3896
      %3898 = vmatprep.mubr.f32.mxu0 0.0
      %3899 = vmatmul.mubr.f32.gmra.mrb[0].mxu0 %v3548
      %v3900 = vpop.f32.mrb[0].mxu0
      %v3901 = vadd.f32 0.0, %v3900
      %v3902 = vpop.f32.mrb[0].mxu0
      %v3903 = vadd.f32 0.0, %v3902
      %3904 = vmatprep.mubr.f32.mxu0 0.0
      %3905 = vmatmul.mubr.f32.gmra.mrb[0].mxu0 %v3551
      %v3906 = vpop.f32.mrb[0].mxu0
      %v3907 = vadd.f32 0.0, %v3906
      %v3908 = vpop.f32.mrb[0].mxu0
      %v3909 = vadd.f32 0.0, %v3908
      %3910 = vmatprep.mubr.f32.mxu0 0.0
      %3911 = vmatmul.mubr.f32.gmra.mrb[0].mxu0 %v3554
      %v3912 = vpop.f32.mrb[0].mxu0
      %v3913 = vadd.f32 0.0, %v3912
      %v3914 = vpop.f32.mrb[0].mxu0
      %v3915 = vadd.f32 0.0, %v3914
      %3916 = vmatprep.mubr.f32.mxu0 0.0
      %3917 = vmatmul.mubr.f32.gmra.mrb[0].mxu0 %v3557
      %v3918 = vpop.f32.mrb[0].mxu0
      %v3919 = vadd.f32 0.0, %v3918
      %v3920 = vpop.f32.mrb[0].mxu0
      %v3921 = vadd.f32 0.0, %v3920
      %3922 = vmatprep.mubr.f32.mxu0 0.0
      %3923 = vmatmul.mubr.f32.gmra.mrb[0].mxu0 %v3560
      %v3924 = vpop.f32.mrb[0].mxu0
      %v3925 = vadd.f32 0.0, %v3924
      %v3926 = vpop.f32.mrb[0].mxu0
      %v3927 = vadd.f32 0.0, %v3926
      %3928 = vmatprep.mubr.f32.mxu0 0.0
      %3929 = vmatmul.mubr.f32.gmra.mrb[0].mxu0 %v3563
      %v3930 = vpop.f32.mrb[0].mxu0
      %v3931 = vadd.f32 0.0, %v3930
      %v3932 = vpop.f32.mrb[0].mxu0
      %v3933 = vadd.f32 0.0, %v3932
      %3934 = vdwg.mxu0
      %v3935 = vxor.u32 %v3889, 2147483648
      %v3936 = vxor.u32 %v3891, 2147483648
      %v3937 = vxor.u32 %v3895, 2147483648
      %v3938 = vxor.u32 %v3897, 2147483648
      %v3939 = vxor.u32 %v3901, 2147483648
      %v3940 = vxor.u32 %v3903, 2147483648
      %v3941 = vxor.u32 %v3907, 2147483648
      %v3942 = vxor.u32 %v3909, 2147483648
      %v3943 = vxor.u32 %v3913, 2147483648
      %v3944 = vxor.u32 %v3915, 2147483648
      %v3945 = vxor.u32 %v3919, 2147483648
      %v3946 = vxor.u32 %v3921, 2147483648
      %v3947 = vxor.u32 %v3925, 2147483648
      %v3948 = vxor.u32 %v3927, 2147483648
      %v3949 = vxor.u32 %v3931, 2147483648
      %v3950 = vxor.u32 %v3933, 2147483648
      %v3951 = vmul.f32 %v3935, 1.442695
      %v3952 = vpow.pop %v3951
      %v3953 = vmul.f32 %v3936, 1.442695
      %v3954 = vpow.pop %v3953
      %v3955 = vmul.f32 %v3937, 1.442695
      %v3956 = vpow.pop %v3955
      %v3957 = vmul.f32 %v3938, 1.442695
      %v3958 = vpow.pop %v3957
      %v3959 = vmul.f32 %v3939, 1.442695
      %v3960 = vpow.pop %v3959
      %v3961 = vmul.f32 %v3940, 1.442695
      %v3962 = vpow.pop %v3961
      %v3963 = vmul.f32 %v3941, 1.442695
      %v3964 = vpow.pop %v3963
      %v3965 = vmul.f32 %v3942, 1.442695
      %v3966 = vpow.pop %v3965
      %v3967 = vmul.f32 %v3943, 1.442695
      %v3968 = vpow.pop %v3967
      %v3969 = vmul.f32 %v3944, 1.442695
      %v3970 = vpow.pop %v3969
      %v3971 = vmul.f32 %v3945, 1.442695
      %v3972 = vpow.pop %v3971
      %v3973 = vmul.f32 %v3946, 1.442695
      %v3974 = vpow.pop %v3973
      %v3975 = vmul.f32 %v3947, 1.442695
      %v3976 = vpow.pop %v3975
      %v3977 = vmul.f32 %v3948, 1.442695
      %v3978 = vpow.pop %v3977
      %v3979 = vmul.f32 %v3949, 1.442695
      %v3980 = vpow.pop %v3979
      %v3981 = vmul.f32 %v3950, 1.442695
      %v3982 = vpow.pop %v3981
      %v3983 = vadd.f32 %v3952, 1.0
      %v3984 = vadd.f32 %v3954, 1.0
      %v3985 = vadd.f32 %v3956, 1.0
      %v3986 = vadd.f32 %v3958, 1.0
      %v3987 = vadd.f32 %v3960, 1.0
      %v3988 = vadd.f32 %v3962, 1.0
      %v3989 = vadd.f32 %v3964, 1.0
      %v3990 = vadd.f32 %v3966, 1.0
      %v3991 = vadd.f32 %v3968, 1.0
      %v3992 = vadd.f32 %v3970, 1.0
      %v3993 = vadd.f32 %v3972, 1.0
      %v3994 = vadd.f32 %v3974, 1.0
      %v3995 = vadd.f32 %v3976, 1.0
      %v3996 = vadd.f32 %v3978, 1.0
      %v3997 = vadd.f32 %v3980, 1.0
      %v3998 = vadd.f32 %v3982, 1.0
      %v3999 = vrcp.pop %v3983
      %v4000 = vmul.f32 1.0, %v3999
      %v4001 = vrcp.pop %v3984
      %v4002 = vmul.f32 1.0, %v4001
      %v4003 = vrcp.pop %v3985
      %v4004 = vmul.f32 1.0, %v4003
      %v4005 = vrcp.pop %v3986
      %v4006 = vmul.f32 1.0, %v4005
      %v4007 = vrcp.pop %v3987
      %v4008 = vmul.f32 1.0, %v4007
      %v4009 = vrcp.pop %v3988
      %v4010 = vmul.f32 1.0, %v4009
      %v4011 = vrcp.pop %v3989
      %v4012 = vmul.f32 1.0, %v4011
      %v4013 = vrcp.pop %v3990
      %v4014 = vmul.f32 1.0, %v4013
      %v4015 = vrcp.pop %v3991
      %v4016 = vmul.f32 1.0, %v4015
      %v4017 = vrcp.pop %v3992
      %v4018 = vmul.f32 1.0, %v4017
      %v4019 = vrcp.pop %v3993
      %v4020 = vmul.f32 1.0, %v4019
      %v4021 = vrcp.pop %v3994
      %v4022 = vmul.f32 1.0, %v4021
      %v4023 = vrcp.pop %v3995
      %v4024 = vmul.f32 1.0, %v4023
      %v4025 = vrcp.pop %v3996
      %v4026 = vmul.f32 1.0, %v4025
      %v4027 = vrcp.pop %v3997
      %v4028 = vmul.f32 1.0, %v4027
      %v4029 = vrcp.pop %v3998
      %v4030 = vmul.f32 1.0, %v4029
      %v4031 = vmul.f32 %v336, %v4000
      %v4032 = vmul.f32 %v337, %v4002
      %v4033 = vmul.f32 %v338, %v4004
      %v4034 = vmul.f32 %v339, %v4006
      %v4035 = vmul.f32 %v340, %v4008
      %v4036 = vmul.f32 %v341, %v4010
      %v4037 = vmul.f32 %v342, %v4012
      %v4038 = vmul.f32 %v343, %v4014
      %v4039 = vmul.f32 %v344, %v4016
      %v4040 = vmul.f32 %v345, %v4018
      %v4041 = vmul.f32 %v346, %v4020
      %v4042 = vmul.f32 %v347, %v4022
      %v4043 = vmul.f32 %v348, %v4024
      %v4044 = vmul.f32 %v349, %v4026
      %v4045 = vmul.f32 %v350, %v4028
      %v4046 = vmul.f32 %v351, %v4030
      %4047 = vst [vmem:[%s334] sm:$0xff] %v4031
      %4048 = vst [vmem:[%s334 + $0x8] sm:$0xff] %v4032
      %4049 = vst [vmem:[%s334 + $0x10] sm:$0xff] %v4033
      %4050 = vst [vmem:[%s334 + $0x18] sm:$0xff] %v4034
      %4051 = vst [vmem:[%s334 + $0x20] sm:$0xff] %v4035
      %4052 = vst [vmem:[%s334 + $0x28] sm:$0xff] %v4036
      %4053 = vst [vmem:[%s334 + $0x30] sm:$0xff] %v4037
      %4054 = vst [vmem:[%s334 + $0x38] sm:$0xff] %v4038
      %4055 = vst [vmem:[%s334 + $0x40] sm:$0xff] %v4039
      %4056 = vst [vmem:[%s334 + $0x48] sm:$0xff] %v4040
      %4057 = vst [vmem:[%s334 + $0x50] sm:$0xff] %v4041
      %4058 = vst [vmem:[%s334 + $0x58] sm:$0xff] %v4042
      %4059 = vst [vmem:[%s334 + $0x60] sm:$0xff] %v4043
      %4060 = vst [vmem:[%s334 + $0x68] sm:$0xff] %v4044
      %4061 = vst [vmem:[%s334 + $0x70] sm:$0xff] %v4045
      %4062 = vst [vmem:[%s334 + $0x78] sm:$0xff] %v4046
      %s4063 = smul.u32 8, %s19
      %p4064 = scmp.lt.s32.totalorder %s4063, 15
      %s4065 = scalar_select %p4064, %s4063, 15
      %s4066 = smul.addr %s4065, 2
      %s4067 = smul.addr %s4066, 8
      %s4068 = scalar_lea.vmem %s8, %s4067
      // Predicated region
      $region53: #{ema_forward.1} parent=51 // pred_check
        %p4069 = pneg %p215
      $region54: #{ema_forward.1} parent=51 // pred_check_branch
        %4071 = sbr.rel (%p4069) target = $region56
      $region55: #{ema_forward.1} parent=51 // pred_region
        %s4072 = smul.u32 8, %s19
      $region56: #{ema_forward.1} parent=51 // pred_fallthru
        _
    $region52: #{ema_forward.1} parent=5 // pred_fallthru
      _
    %p4073 = scmp.le.s32.totalorder 2, %s14
    // Predicated region
    $region57: #{ema_forward.1} parent=5 // pred_check
      %p4074 = pneg %p4073
    $region58: #{ema_forward.1} parent=5 // pred_check_branch
      %4076 = sbr.rel (%p4074) target = $region60
    $region59: #{ema_forward.1} parent=5 // pred_region
      %s4077 = ssub.s32 %s14, 2
      // Predicated region
      $region61: #{ema_forward.1} parent=59 // pred_check
        %p4078 = pneg %p221
      $region62: #{ema_forward.1} parent=59 // pred_check_branch
        %4080 = sbr.rel (%p4078) target = $region64
      $region63: #{ema_forward.1} parent=59 // pred_region
        %s4081 = smul.u32 8, %s20
        %p4082 = scmp.lt.s32.totalorder %s4081, 15
        %s4083 = scalar_select %p4082, %s4081, 15
        %s4084 = smul.addr %s4083, 2
        %s4085 = smul.addr %s4084, 8
        %s4086 = scalar_lea.vmem %s8, %s4085
      $region64: #{ema_forward.1} parent=59 // pred_fallthru
        _
    $region60: #{ema_forward.1} parent=5 // pred_fallthru
      _
  $region6: #{ema_forward.1} parent=0 // loop_footer
    %s18 = sadd.s32 1, %s14
  $region7: #{ema_forward.1} parent=0 // loop_footer_branch
    %13 = sbr.rel target = $region3
  $region8: #{ema_forward.1} parent=0 // loop_exit
    _

</llo_original>
